<compile_context>
chip_gen: v6e
topology: v6e:2x2x1
jax: 0.10.0
libtpu: 0.0.40
codegen_flags: <defaults>
</compile_context>

<pallas_src>
import jax
import jax.numpy as jnp
from jax.experimental import pallas as pl
from jax.experimental.pallas import tpu as pltpu

CPAD = 128            # lane-dense channel padding for activations / weight cols
_CLS_ROWS = 8         # sublane-padded row count of the out_cls block
_LEAKY = 0.01


def _ru(x, m):
    return (x + m - 1) // m * m


# ----------------------------------------------------------------------------
# Fused discriminator kernel (whole forward pass, one grid step per batch elem).
# ----------------------------------------------------------------------------
def _make_disc_kernel(geoms, xplane_rows, q0_rows, xf_rows, F, P1, P2r, c_dim):
    n_main = len(geoms)
    has_cls = c_dim > 1
    W1 = F + 2

    def kernel(*refs):
        ri = 0
        x0_ref = refs[ri]; ri += 1                      # (4*q0_rows, 3)    f32
        b_ref = refs[ri]; ri += 1                       # (Bn, 128)         f32
        w_main = refs[ri:ri + n_main]; ri += n_main     # (16, Cin, 128)    bf16
        w1_ref = refs[ri]; ri += 1                      # (9, 128, 128)     bf16
        w2_ref = None
        if has_cls:
            w2_ref = refs[ri]; ri += 1                  # (c_dim, P2r, 128) f32
        osrc_ref = refs[ri]; ri += 1                    # (osrc_rows, 128)  f32
        ocls_ref = None
        if has_cls:
            ocls_ref = refs[ri]; ri += 1                # (8, 128)          f32
        gbuf = refs[ri]; ri += 1                        # (gbuf_rows, 128)  f32
        planes = refs[ri:ri + n_main - 1]; ri += n_main - 1
        xf = refs[ri]; ri += 1                          # (xf_rows, 128)    f32

        # ---- per-step halo maintenance (interior is fully rewritten below) ----
        for li in range(1, n_main):
            Pr = xplane_rows[li - 1]
            Q = geoms[li]["Qs"]                 # plane side of layer li's input
            buf = planes[li - 1]
            z = jnp.zeros((Q, CPAD), buf.dtype)
            buf[pl.ds(0 * Pr, Q), :] = z                        # phase (0,0) top
            buf[pl.ds(1 * Pr, Q), :] = z                        # phase (0,1) top
            buf[pl.ds(2 * Pr + (Q - 1) * Q, Q), :] = z          # phase (1,0) bottom
            buf[pl.ds(3 * Pr + (Q - 1) * Q, Q), :] = z          # phase (1,1) bottom
        xf[pl.ds(0, W1), :] = jnp.zeros((W1, CPAD), xf.dtype)   # top border row
        tail = xf_rows - (F + 1) * W1
        xf[pl.ds((F + 1) * W1, tail), :] = jnp.zeros((tail, CPAD), xf.dtype)

        # ---- main trunk: 4x4 stride-2 convs, phase-decomposed -----------------
        for li, g in enumerate(geoms):
            Ho, Qs, Pneed = g["Ho"], g["Qs"], g["Pneed"]
            if li == 0:
                src_ref, Pr_src = x0_ref, q0_rows
            else:
                src_ref, Pr_src = planes[li - 1], xplane_rows[li - 1]
            wref = w_main[li]

            # conv = sum of 16 contiguous-slice matmuls (one per tap); useful
            # output (ho, wo) sits at row ho*Qs + wo of the accumulated block.
            acc = None
            for kh in range(4):
                for kw in range(4):
                    ph = (kh % 2) * 2 + (kw % 2)
                    off = ph * Pr_src + (kh // 2) * Qs + (kw // 2)
                    a = src_ref[pl.ds(off, Pneed), :]
                    prod = jnp.dot(a.astype(jnp.bfloat16), wref[kh * 4 + kw],
                                   preferred_element_type=jnp.float32)
                    acc = prod if acc is None else acc + prod
            # bias + LeakyReLU once on the whole block (padded lanes stay 0).
            acc = acc + b_ref[pl.ds(li, 1), :]
            acc = jnp.where(acc > 0, acc, _LEAKY * acc)
            gbuf[0:Pneed, :] = acc

            # scatter output rows into the next layer's input layout.
            if not g["last"]:
                Qn = geoms[li + 1]["Qs"]        # destination plane side
                dst = planes[li]
                Pr_dst = xplane_rows[li]
                half = Ho // 2
                z1 = jnp.zeros((1, CPAD), dst.dtype)
                # TODO(synk): switch to lax.fori_loop for Ho >= ~32.
                for ho in range(Ho):
                    base = ho * Qs
                    pr = (ho + 1) % 2
                    R = (ho + 1) // 2
                    ev = gbuf[pl.ds(base, half, 2), :]          # even output cols
                    od = gbuf[pl.ds(base + 1, half, 2), :]      # odd output cols
                    # even cols -> col-phase 1 (data cols 0..Qn-2, border last)
                    dst[pl.ds((pr * 2 + 1) * Pr_dst + R * Qn, Qn), :] = (
                        jnp.concatenate([ev, z1], axis=0))
                    # odd cols  -> col-phase 0 (border first, data cols 1..Qn-1)
                    dst[pl.ds((pr * 2 + 0) * Pr_dst + R * Qn, Qn), :] = (
                        jnp.concatenate([z1, od], axis=0))
            else:
                # last main layer -> flat zero-padded (F+2)^2 map for conv1/2.
                z1 = jnp.zeros((1, CPAD), xf.dtype)
                for ho in range(Ho):
                    data = gbuf[pl.ds(ho * Qs, Ho), :]
                    xf[pl.ds((1 + ho) * W1, W1), :] = (
                        jnp.concatenate([z1, data, z1], axis=0))

        # ---- conv1: 3x3 / s1 / p1, no bias -> out_src -------------------------
        acc1 = None
        for kh in range(3):
            for kw in range(3):
                a = xf[pl.ds(kh * W1 + kw, P1), :]
                prod = jnp.dot(a.astype(jnp.bfloat16), w1_ref[kh * 3 + kw],
                               preferred_element_type=jnp.float32)
                acc1 = prod if acc1 is None else acc1 + prod
        osrc_ref[0:P1, :] = acc1     # single block store; wrapper strips junk rows

        # ---- conv2: FxF valid conv -> out_cls, as c_dim multiply-reduces ------
        if has_cls:
            a2 = xf[pl.ds(W1 + 1, P2r), :]
            lane = jax.lax.broadcasted_iota(jnp.int32, (1, CPAD), 1)
            row = jnp.zeros((1, CPAD), jnp.float32)
            for c in range(c_dim):
                s_col = jnp.sum(a2 * w2_ref[c], axis=0, keepdims=True)   # (1,128)
                s11 = jnp.sum(s_col, axis=1, keepdims=True)              # (1,1)
                row = row + jnp.where(lane == c, s11, 0.0)
            ocls_ref[0:1, :] = row

    return kernel


# ----------------------------------------------------------------------------
# Discriminator (PatchGAN) -- mirrors network/stargan.py::Discriminator.
# ----------------------------------------------------------------------------
class DiscriminatorPallas:
    def __init__(self, image_size=16, conv_dim=8, c_dim=2, repeat_num=2,
                 key=jax.random.PRNGKey(0)):
        assert image_size % (2 ** repeat_num) == 0
        curr_max = conv_dim * (2 ** (repeat_num - 1))
        # Gate (review): this kernel packs channels into 128 lanes.
        assert curr_max <= CPAD, "curr_dim > 128 not supported by this kernel"
        assert c_dim <= CPAD
        self.image_size = image_size
        self.c_dim = c_dim
        self.repeat_num = repeat_num

        keys = jax.random.split(key, repeat_num * 2 + 2)
        scale = 0.05

        # f32 master weights (HWIO) -- also used by the XLA reference.
        self.main_params = []
        w = scale * jax.random.normal(keys[0], (4, 4, 3, conv_dim), jnp.float32)
        b = scale * jax.random.normal(keys[1], (conv_dim,), jnp.float32)
        self.main_params.append((w, b))
        curr_dim = conv_dim
        for i in range(1, repeat_num):
            w = scale * jax.random.normal(keys[2 * i],
                                          (4, 4, curr_dim, curr_dim * 2), jnp.float32)
            b = scale * jax.random.normal(keys[2 * i + 1], (curr_dim * 2,), jnp.float32)
            self.main_params.append((w, b))
            curr_dim *= 2
        self.curr_dim = curr_dim

        F = image_size // (2 ** repeat_num)
        self.final_hw = F
        self.w_conv1 = scale * jax.random.normal(
            keys[2 * repeat_num], (3, 3, curr_dim, 1), jnp.float32)
        self.w_conv2 = scale * jax.random.normal(
            keys[2 * repeat_num + 1], (F, F, curr_dim, c_dim), jnp.float32)

        self._build_geometry()
        self._pack_params()

    # --------------------------------------------------------------- geometry
    def _build_geometry(self):
        geoms = []
        xplane_rows = []
        H = self.image_size
        for i in range(self.repeat_num):
            Ho = H // 2
            Qs = Ho + 1                               # source plane side
            geoms.append(dict(Ho=Ho, Qs=Qs, Pneed=(Ho - 1) * Qs + Ho,
                              last=(i == self.repeat_num - 1)))
            if i < self.repeat_num - 1:
                Qn = Ho // 2 + 1                      # next layer's plane side
                xplane_rows.append(_ru(Qn * Qn, 8))
            H = Ho
        self.geoms = geoms
        self.xplane_rows = xplane_rows

        F = self.final_hw
        self.W1 = F + 2
        self.P1 = (F - 1) * (F + 2) + F
        self.P2r = _ru(self.P1, 8)
        self.xf_rows = _ru((F + 2) * (F + 2), 8)
        self.gbuf_rows = _ru(max(g["Pneed"] for g in geoms), 8)
        self.Q0 = self.image_size // 2 + 1
        self.q0_rows = _ru(self.Q0 * self.Q0, 8)
        self.osrc_rows = _ru(F * (F + 2), 8)

    # ---------------------------------------------------------------- packing
    def _pack_params(self):
        def pack_taps(w_hwio, cin_pad):
            kh, kw, cin, cout = w_hwio.shape
            taps = w_hwio.reshape(kh * kw, cin, cout)
            taps = jnp.pad(taps, ((0, 0), (0, cin_pad - cin), (0, CPAD - cout)))
            return taps.astype(jnp.bfloat16)

        self.w_main_packed = []
        biases = []
        cin_pad = 3                                   # layer-0 input channels
        for (w, b) in self.main_params:
            self.w_main_packed.append(pack_taps(w, cin_pad))
            biases.append(jnp.pad(b, (0, CPAD - b.shape[0])))
            cin_pad = CPAD
        nb = _ru(max(len(biases), 1), 8)
        self.bias_packed = (jnp.zeros((nb, CPAD), jnp.float32)
                            .at[:len(biases)].set(jnp.stack(biases)))

        self.w1_packed = pack_taps(self.w_conv1, CPAD)          # (9, 128, 128)

        if self.c_dim > 1:
            # conv2 weights laid out in the flat padded (F+2)^2 layout so the
            # kernel can do a single block read + elementwise multiply-reduce.
            F, W1 = self.final_hw, self.W1
            w2 = jnp.zeros((self.c_dim, self.P2r, CPAD), jnp.float32)
            for r in range(F):
                for wcol in range(F):
                    w2 = w2.at[:, r * W1 + wcol, :self.curr_dim].set(
                        jnp.transpose(self.w_conv2[r, wcol], (1, 0)))
            self.w2_packed = w2
        else:
            self.w2_packed = None

    # ------------------------------------------------------------- vmem limit
    def _vmem_limit_bytes(self):
        def b(shape, dtype):
            lead = 1
            for d in shape[:-2]:
                lead *= d
            sub = _ru(shape[-2], 8) if len(shape) >= 2 else 1
            return lead * sub * _ru(shape[-1], CPAD) * jnp.dtype(dtype).itemsize

        est = 2 * b((4 * self.q0_rows, 3), jnp.float32)         # double-buffered
        est += 2 * b(self.bias_packed.shape, jnp.float32)
        for w in self.w_main_packed:
            est += 2 * b(w.shape, jnp.bfloat16)
        est += 2 * b(self.w1_packed.shape, jnp.bfloat16)
        if self.w2_packed is not None:
            est += 2 * b(self.w2_packed.shape, jnp.float32)
        est += 2 * b((self.osrc_rows, CPAD), jnp.float32)
        est += 2 * b((_CLS_ROWS, CPAD), jnp.float32)
        est += 2 * b((self.gbuf_rows, CPAD), jnp.float32)       # gbuf + acc value
        est += sum(b((4 * r, CPAD), jnp.float32) for r in self.xplane_rows)
        est += b((self.xf_rows, CPAD), jnp.float32)
        return int(min(max(est * 3 // 2 + (4 << 20), 16 << 20), 100 << 20))

    # ---------------------------------------------------------------- forward
    def __call__(self, x_nchw):
        N = x_nchw.shape[0]
        has_cls = self.c_dim > 1
        Q0, q0r = self.Q0, self.q0_rows
        F, W1 = self.final_hw, self.W1

        # Boundary layout work (tiny): NCHW -> NHWC, zero-pad, space-to-depth
        # split into the 4 (row-parity, col-parity) phase planes, flatten.
        x = jnp.transpose(x_nchw, (0, 2, 3, 1)).astype(jnp.float32)
        x = jnp.pad(x, ((0, 0), (1, 1), (1, 1), (0, 0)))
        phases = []
        for prr in range(2):
            for pcc in range(2):
                p = x[:, prr::2, pcc::2, :].reshape(N, Q0 * Q0, 3)
                p = jnp.pad(p, ((0, 0), (0, q0r - Q0 * Q0), (0, 0)))
                phases.append(p)
        x0 = jnp.stack(phases, axis=1).reshape(N * 4 * q0r, 3)

        kernel = _make_disc_kernel(self.geoms, self.xplane_rows, q0r,
                                   self.xf_rows, F, self.P1, self.P2r,
                                   self.c_dim)

        # TODO(synk): weights/bias have constant index_maps; single-buffer them
        #             (pipeline_mode=pl.Buffered(1)) to save VMEM at repeat_num=6.
        in_specs = [pl.BlockSpec((4 * q0r, 3), lambda n: (n, 0)),
                    pl.BlockSpec(self.bias_packed.shape, lambda n: (0, 0))]
        inputs = [x0, self.bias_packed]
        for w in self.w_main_packed:
            in_specs.append(pl.BlockSpec(w.shape, lambda n: (0, 0, 0)))
            inputs.append(w)
        in_specs.append(pl.BlockSpec(self.w1_packed.shape, lambda n: (0, 0, 0)))
        inputs.append(self.w1_packed)
        if has_cls:
            in_specs.append(pl.BlockSpec(self.w2_packed.shape,
                                         lambda n: (0, 0, 0)))
            inputs.append(self.w2_packed)

        out_shape = [jax.ShapeDtypeStruct((N * self.osrc_rows, CPAD), jnp.float32)]
        out_specs = [pl.BlockSpec((self.osrc_rows, CPAD), lambda n: (n, 0))]
        if has_cls:
            out_shape.append(jax.ShapeDtypeStruct((N * _CLS_ROWS, CPAD), jnp.float32))
            out_specs.append(pl.BlockSpec((_CLS_ROWS, CPAD), lambda n: (n, 0)))

        scratch = [pltpu.VMEM((self.gbuf_rows, CPAD), jnp.float32)]
        scratch += [pltpu.VMEM((4 * r, CPAD), jnp.float32) for r in self.xplane_rows]
        scratch.append(pltpu.VMEM((self.xf_rows, CPAD), jnp.float32))

        outs = pl.pallas_call(
            kernel,
            out_shape=tuple(out_shape),
            grid_spec=pltpu.PrefetchScalarGridSpec(
                num_scalar_prefetch=0,
                grid=(N,),
                in_specs=in_specs,
                out_specs=out_specs,
                scratch_shapes=scratch),
            compiler_params=pltpu.CompilerParams(
                dimension_semantics=("parallel",),
                vmem_limit_bytes=self._vmem_limit_bytes()),
        )(*inputs)
        if not isinstance(outs, (tuple, list)):
            outs = (outs,)

        o = outs[0].reshape(N, self.osrc_rows, CPAD)[:, :F * W1, 0]
        out_src = o.reshape(N, F, W1)[:, :, :F][:, None, :, :]   # NCHW (N,1,F,F)
        if not has_cls:
            return out_src
        out_cls = outs[1].reshape(N, _CLS_ROWS, CPAD)[:, 0, :self.c_dim]
        return out_src, out_cls


# ----------------------------------------------------------------------------
# Pure-JAX reference (XLA convs) for a correctness sanity check.
# ----------------------------------------------------------------------------
def reference_forward(x_nchw, model):
    def conv(h, w, b, s, p):
        o = jax.lax.conv_general_dilated(
            h, w, (s, s), [(p, p), (p, p)],
            dimension_numbers=("NHWC", "HWIO", "NHWC"))
        if b is not None:
            o = o + b
        return o

    h = jnp.transpose(x_nchw, (0, 2, 3, 1))
    for (w, b) in model.main_params:
        h = conv(h, w, b, 2, 1)
        h = jnp.where(h > 0, h, 0.01 * h)
    out_src = jnp.transpose(conv(h, model.w_conv1, None, 1, 1), (0, 3, 1, 2))
    if model.c_dim == 1:
        return out_src
    out_cls = conv(h, model.w_conv2, None, 1, 0)
    return out_src, out_cls.reshape(out_cls.shape[0], model.c_dim)


def _close(a, b, tol=5e-2):
    scale = float(jnp.max(jnp.abs(b))) + 1e-6
    return float(jnp.max(jnp.abs(a - b))) <= tol * scale


if __name__ == "__main__":
    BATCH, IMAGE_SIZE, CONV_DIM, C_DIM, REPEAT_NUM = 2, 16, 8, 2, 2

    key = jax.random.PRNGKey(0)
    kx, kp = jax.random.split(key)
    x = jax.random.normal(kx, (BATCH, 3, IMAGE_SIZE, IMAGE_SIZE), jnp.float32)

    model = DiscriminatorPallas(image_size=IMAGE_SIZE, conv_dim=CONV_DIM,
                                c_dim=C_DIM, repeat_num=REPEAT_NUM, key=kp)

    out_src, out_cls = model(x)
    jax.block_until_ready((out_src, out_cls))

    F = IMAGE_SIZE // (2 ** REPEAT_NUM)
    assert out_src.shape == (BATCH, 1, F, F), out_src.shape
    assert out_cls.shape == (BATCH, C_DIM), out_cls.shape

    ref_src, ref_cls = reference_forward(x, model)
    assert _close(out_src, ref_src), "out_src mismatch vs reference"
    assert _close(out_cls, ref_cls), "out_cls mismatch vs reference"

    print("KERNEL_OK")
</pallas_src>

<mosaic_0001>
module attributes {stable_mosaic.version = 11 : i64} {
  func.func @kernel(%arg0: i32, %arg1: memref<352x3xf32, #tpu.memory_space<vmem>>, %arg2: memref<8x128xf32, #tpu.memory_space<vmem>>, %arg3: memref<16x3x128xbf16, #tpu.memory_space<vmem>>, %arg4: memref<16x128x128xbf16, #tpu.memory_space<vmem>>, %arg5: memref<9x128x128xbf16, #tpu.memory_space<vmem>>, %arg6: memref<2x24x128xf32, #tpu.memory_space<vmem>>, %arg7: memref<24x128xf32, #tpu.memory_space<vmem>>, %arg8: memref<8x128xf32, #tpu.memory_space<vmem>>, %arg9: memref<72x128xf32, #tpu.memory_space<vmem>>, %arg10: memref<128x128xf32, #tpu.memory_space<vmem>>, %arg11: memref<40x128xf32, #tpu.memory_space<vmem>>) attributes {dimension_semantics = [#tpu.dimension_semantics<parallel>], iteration_bounds = array<i64: 2>, scalar_prefetch = 0 : i64, scratch_operands = 3 : i64, tpu.core_type = #tpu.core_type<tc>, window_params = [{transform_indices = @transform_0, window_bounds = array<i64: 352, 3>}, {pipeline_mode = #tpu.pipeline_mode<synchronous>, transform_indices = @transform_1, window_bounds = array<i64: 8, 128>}, {pipeline_mode = #tpu.pipeline_mode<synchronous>, transform_indices = @transform_2, window_bounds = array<i64: 16, 3, 128>}, {pipeline_mode = #tpu.pipeline_mode<synchronous>, transform_indices = @transform_3, window_bounds = array<i64: 16, 128, 128>}, {pipeline_mode = #tpu.pipeline_mode<synchronous>, transform_indices = @transform_4, window_bounds = array<i64: 9, 128, 128>}, {pipeline_mode = #tpu.pipeline_mode<synchronous>, transform_indices = @transform_5, window_bounds = array<i64: 2, 24, 128>}, {transform_indices = @transform_6, window_bounds = array<i64: 24, 128>}, {transform_indices = @transform_7, window_bounds = array<i64: 8, 128>}]} {
    %cst = arith.constant 0.000000e+00 : f32
    %0 = vector.broadcast %cst : f32 to vector<5x128xf32>
    %c0 = arith.constant 0 : index
    %c0_0 = arith.constant 0 : index
    %1 = vector.load %arg10[%c0, %c0_0] : memref<128x128xf32, #tpu.memory_space<vmem>>, vector<5x128xf32>
    tpu.vector_store %arg10[%c0, %c0_0], %0 {strides = array<i32>} : memref<128x128xf32, #tpu.memory_space<vmem>>, vector<5x128xf32>,
    %c32 = arith.constant 32 : index
    %c0_1 = arith.constant 0 : index
    %2 = vector.load %arg10[%c32, %c0_1] : memref<128x128xf32, #tpu.memory_space<vmem>>, vector<5x128xf32>
    tpu.vector_store %arg10[%c32, %c0_1], %0 {strides = array<i32>} : memref<128x128xf32, #tpu.memory_space<vmem>>, vector<5x128xf32>,
    %c84 = arith.constant 84 : index
    %c0_2 = arith.constant 0 : index
    %3 = vector.load %arg10[%c84, %c0_2] : memref<128x128xf32, #tpu.memory_space<vmem>>, vector<5x128xf32>
    tpu.vector_store %arg10[%c84, %c0_2], %0 {strides = array<i32>} : memref<128x128xf32, #tpu.memory_space<vmem>>, vector<5x128xf32>,
    %c116 = arith.constant 116 : index
    %c0_3 = arith.constant 0 : index
    %4 = vector.load %arg10[%c116, %c0_3] : memref<128x128xf32, #tpu.memory_space<vmem>>, vector<5x128xf32>
    tpu.vector_store %arg10[%c116, %c0_3], %0 {strides = array<i32>} : memref<128x128xf32, #tpu.memory_space<vmem>>, vector<5x128xf32>,
    %cst_4 = arith.constant 0.000000e+00 : f32
    %5 = vector.broadcast %cst_4 : f32 to vector<6x128xf32>
    %c0_5 = arith.constant 0 : index
    %c0_6 = arith.constant 0 : index
    %6 = vector.load %arg11[%c0_5, %c0_6] : memref<40x128xf32, #tpu.memory_space<vmem>>, vector<6x128xf32>
    tpu.vector_store %arg11[%c0_5, %c0_6], %5 {strides = array<i32>} : memref<40x128xf32, #tpu.memory_space<vmem>>, vector<6x128xf32>,
    %cst_7 = arith.constant 0.000000e+00 : f32
    %7 = vector.broadcast %cst_7 : f32 to vector<10x128xf32>
    %c30 = arith.constant 30 : index
    %c0_8 = arith.constant 0 : index
    %8 = vector.load %arg11[%c30, %c0_8] : memref<40x128xf32, #tpu.memory_space<vmem>>, vector<10x128xf32>
    tpu.vector_store %arg11[%c30, %c0_8], %7 {strides = array<i32>} : memref<40x128xf32, #tpu.memory_space<vmem>>, vector<10x128xf32>,
    %c0_9 = arith.constant 0 : index
    %c0_10 = arith.constant 0 : index
    %9 = vector.load %arg1[%c0_9, %c0_10] : memref<352x3xf32, #tpu.memory_space<vmem>>, vector<71x3xf32>
    %10 = arith.truncf %9 : vector<71x3xf32> to vector<71x3xbf16>
    %c0_11 = arith.constant 0 : index
    %c0_12 = arith.constant 0 : index
    %c0_13 = arith.constant 0 : index
    %11 = vector.load %arg3[%c0_11, %c0_12, %c0_13] : memref<16x3x128xbf16, #tpu.memory_space<vmem>>, vector<1x3x128xbf16>
    %12 = vector.shape_cast %11 : vector<1x3x128xbf16> to vector<3x128xbf16>
    %cst_14 = arith.constant dense<0.000000e+00> : vector<71x128xf32>
    %13 = tpu.matmul %10, %12, %cst_14 {dimension_numbers = #tpu.dot_dimension_numbers<[1], [0], [0], [1], [0, 0, 1, 1], [], []>} : vector<71x3xbf16>, vector<3x128xbf16>, vector<71x128xf32> -> vector<71x128xf32>
    %c88 = arith.constant 88 : index
    %c0_15 = arith.constant 0 : index
    %14 = vector.load %arg1[%c88, %c0_15] : memref<352x3xf32, #tpu.memory_space<vmem>>, vector<71x3xf32>
    %15 = arith.truncf %14 : vector<71x3xf32> to vector<71x3xbf16>
    %c1 = arith.constant 1 : index
    %c0_16 = arith.constant 0 : index
    %c0_17 = arith.constant 0 : index
    %16 = vector.load %arg3[%c1, %c0_16, %c0_17] : memref<16x3x128xbf16, #tpu.memory_space<vmem>>, vector<1x3x128xbf16>
    %17 = vector.shape_cast %16 : vector<1x3x128xbf16> to vector<3x128xbf16>
    %cst_18 = arith.constant dense<0.000000e+00> : vector<71x128xf32>
    %18 = tpu.matmul %15, %17, %cst_18 {dimension_numbers = #tpu.dot_dimension_numbers<[1], [0], [0], [1], [0, 0, 1, 1], [], []>} : vector<71x3xbf16>, vector<3x128xbf16>, vector<71x128xf32> -> vector<71x128xf32>
    %19 = arith.addf %13, %18 : vector<71x128xf32>
    %c1_19 = arith.constant 1 : index
    %c0_20 = arith.constant 0 : index
    %20 = vector.load %arg1[%c1_19, %c0_20] : memref<352x3xf32, #tpu.memory_space<vmem>>, vector<71x3xf32>
    %21 = arith.truncf %20 : vector<71x3xf32> to vector<71x3xbf16>
    %c2 = arith.constant 2 : index
    %c0_21 = arith.constant 0 : index
    %c0_22 = arith.constant 0 : index
    %22 = vector.load %arg3[%c2, %c0_21, %c0_22] : memref<16x3x128xbf16, #tpu.memory_space<vmem>>, vector<1x3x128xbf16>
    %23 = vector.shape_cast %22 : vector<1x3x128xbf16> to vector<3x128xbf16>
    %cst_23 = arith.constant dense<0.000000e+00> : vector<71x128xf32>
    %24 = tpu.matmul %21, %23, %cst_23 {dimension_numbers = #tpu.dot_dimension_numbers<[1], [0], [0], [1], [0, 0, 1, 1], [], []>} : vector<71x3xbf16>, vector<3x128xbf16>, vector<71x128xf32> -> vector<71x128xf32>
    %25 = arith.addf %19, %24 : vector<71x128xf32>
    %c89 = arith.constant 89 : index
    %c0_24 = arith.constant 0 : index
    %26 = vector.load %arg1[%c89, %c0_24] : memref<352x3xf32, #tpu.memory_space<vmem>>, vector<71x3xf32>
    %27 = arith.truncf %26 : vector<71x3xf32> to vector<71x3xbf16>
    %c3 = arith.constant 3 : index
    %c0_25 = arith.constant 0 : index
    %c0_26 = arith.constant 0 : index
    %28 = vector.load %arg3[%c3, %c0_25, %c0_26] : memref<16x3x128xbf16, #tpu.memory_space<vmem>>, vector<1x3x128xbf16>
    %29 = vector.shape_cast %28 : vector<1x3x128xbf16> to vector<3x128xbf16>
    %cst_27 = arith.constant dense<0.000000e+00> : vector<71x128xf32>
    %30 = tpu.matmul %27, %29, %cst_27 {dimension_numbers = #tpu.dot_dimension_numbers<[1], [0], [0], [1], [0, 0, 1, 1], [], []>} : vector<71x3xbf16>, vector<3x128xbf16>, vector<71x128xf32> -> vector<71x128xf32>
    %31 = arith.addf %25, %30 : vector<71x128xf32>
    %c176 = arith.constant 176 : index
    %c0_28 = arith.constant 0 : index
    %32 = vector.load %arg1[%c176, %c0_28] : memref<352x3xf32, #tpu.memory_space<vmem>>, vector<71x3xf32>
    %33 = arith.truncf %32 : vector<71x3xf32> to vector<71x3xbf16>
    %c4 = arith.constant 4 : index
    %c0_29 = arith.constant 0 : index
    %c0_30 = arith.constant 0 : index
    %34 = vector.load %arg3[%c4, %c0_29, %c0_30] : memref<16x3x128xbf16, #tpu.memory_space<vmem>>, vector<1x3x128xbf16>
    %35 = vector.shape_cast %34 : vector<1x3x128xbf16> to vector<3x128xbf16>
    %cst_31 = arith.constant dense<0.000000e+00> : vector<71x128xf32>
    %36 = tpu.matmul %33, %35, %cst_31 {dimension_numbers = #tpu.dot_dimension_numbers<[1], [0], [0], [1], [0, 0, 1, 1], [], []>} : vector<71x3xbf16>, vector<3x128xbf16>, vector<71x128xf32> -> vector<71x128xf32>
    %37 = arith.addf %31, %36 : vector<71x128xf32>
    %c264 = arith.constant 264 : index
    %c0_32 = arith.constant 0 : index
    %38 = vector.load %arg1[%c264, %c0_32] : memref<352x3xf32, #tpu.memory_space<vmem>>, vector<71x3xf32>
    %39 = arith.truncf %38 : vector<71x3xf32> to vector<71x3xbf16>
    %c5 = arith.constant 5 : index
    %c0_33 = arith.constant 0 : index
    %c0_34 = arith.constant 0 : index
    %40 = vector.load %arg3[%c5, %c0_33, %c0_34] : memref<16x3x128xbf16, #tpu.memory_space<vmem>>, vector<1x3x128xbf16>
    %41 = vector.shape_cast %40 : vector<1x3x128xbf16> to vector<3x128xbf16>
    %cst_35 = arith.constant dense<0.000000e+00> : vector<71x128xf32>
    %42 = tpu.matmul %39, %41, %cst_35 {dimension_numbers = #tpu.dot_dimension_numbers<[1], [0], [0], [1], [0, 0, 1, 1], [], []>} : vector<71x3xbf16>, vector<3x128xbf16>, vector<71x128xf32> -> vector<71x128xf32>
    %43 = arith.addf %37, %42 : vector<71x128xf32>
    %c177 = arith.constant 177 : index
    %c0_36 = arith.constant 0 : index
    %44 = vector.load %arg1[%c177, %c0_36] : memref<352x3xf32, #tpu.memory_space<vmem>>, vector<71x3xf32>
    %45 = arith.truncf %44 : vector<71x3xf32> to vector<71x3xbf16>
    %c6 = arith.constant 6 : index
    %c0_37 = arith.constant 0 : index
    %c0_38 = arith.constant 0 : index
    %46 = vector.load %arg3[%c6, %c0_37, %c0_38] : memref<16x3x128xbf16, #tpu.memory_space<vmem>>, vector<1x3x128xbf16>
    %47 = vector.shape_cast %46 : vector<1x3x128xbf16> to vector<3x128xbf16>
    %cst_39 = arith.constant dense<0.000000e+00> : vector<71x128xf32>
    %48 = tpu.matmul %45, %47, %cst_39 {dimension_numbers = #tpu.dot_dimension_numbers<[1], [0], [0], [1], [0, 0, 1, 1], [], []>} : vector<71x3xbf16>, vector<3x128xbf16>, vector<71x128xf32> -> vector<71x128xf32>
    %49 = arith.addf %43, %48 : vector<71x128xf32>
    %c265 = arith.constant 265 : index
    %c0_40 = arith.constant 0 : index
    %50 = vector.load %arg1[%c265, %c0_40] : memref<352x3xf32, #tpu.memory_space<vmem>>, vector<71x3xf32>
    %51 = arith.truncf %50 : vector<71x3xf32> to vector<71x3xbf16>
    %c7 = arith.constant 7 : index
    %c0_41 = arith.constant 0 : index
    %c0_42 = arith.constant 0 : index
    %52 = vector.load %arg3[%c7, %c0_41, %c0_42] : memref<16x3x128xbf16, #tpu.memory_space<vmem>>, vector<1x3x128xbf16>
    %53 = vector.shape_cast %52 : vector<1x3x128xbf16> to vector<3x128xbf16>
    %cst_43 = arith.constant dense<0.000000e+00> : vector<71x128xf32>
    %54 = tpu.matmul %51, %53, %cst_43 {dimension_numbers = #tpu.dot_dimension_numbers<[1], [0], [0], [1], [0, 0, 1, 1], [], []>} : vector<71x3xbf16>, vector<3x128xbf16>, vector<71x128xf32> -> vector<71x128xf32>
    %55 = arith.addf %49, %54 : vector<71x128xf32>
    %c9 = arith.constant 9 : index
    %c0_44 = arith.constant 0 : index
    %56 = vector.load %arg1[%c9, %c0_44] : memref<352x3xf32, #tpu.memory_space<vmem>>, vector<71x3xf32>
    %57 = arith.truncf %56 : vector<71x3xf32> to vector<71x3xbf16>
    %c8 = arith.constant 8 : index
    %c0_45 = arith.constant 0 : index
    %c0_46 = arith.constant 0 : index
    %58 = vector.load %arg3[%c8, %c0_45, %c0_46] : memref<16x3x128xbf16, #tpu.memory_space<vmem>>, vector<1x3x128xbf16>
    %59 = vector.shape_cast %58 : vector<1x3x128xbf16> to vector<3x128xbf16>
    %cst_47 = arith.constant dense<0.000000e+00> : vector<71x128xf32>
    %60 = tpu.matmul %57, %59, %cst_47 {dimension_numbers = #tpu.dot_dimension_numbers<[1], [0], [0], [1], [0, 0, 1, 1], [], []>} : vector<71x3xbf16>, vector<3x128xbf16>, vector<71x128xf32> -> vector<71x128xf32>
    %61 = arith.addf %55, %60 : vector<71x128xf32>
    %c97 = arith.constant 97 : index
    %c0_48 = arith.constant 0 : index
    %62 = vector.load %arg1[%c97, %c0_48] : memref<352x3xf32, #tpu.memory_space<vmem>>, vector<71x3xf32>
    %63 = arith.truncf %62 : vector<71x3xf32> to vector<71x3xbf16>
    %c9_49 = arith.constant 9 : index
    %c0_50 = arith.constant 0 : index
    %c0_51 = arith.constant 0 : index
    %64 = vector.load %arg3[%c9_49, %c0_50, %c0_51] : memref<16x3x128xbf16, #tpu.memory_space<vmem>>, vector<1x3x128xbf16>
    %65 = vector.shape_cast %64 : vector<1x3x128xbf16> to vector<3x128xbf16>
    %cst_52 = arith.constant dense<0.000000e+00> : vector<71x128xf32>
    %66 = tpu.matmul %63, %65, %cst_52 {dimension_numbers = #tpu.dot_dimension_numbers<[1], [0], [0], [1], [0, 0, 1, 1], [], []>} : vector<71x3xbf16>, vector<3x128xbf16>, vector<71x128xf32> -> vector<71x128xf32>
    %67 = arith.addf %61, %66 : vector<71x128xf32>
    %c10 = arith.constant 10 : index
    %c0_53 = arith.constant 0 : index
    %68 = vector.load %arg1[%c10, %c0_53] : memref<352x3xf32, #tpu.memory_space<vmem>>, vector<71x3xf32>
    %69 = arith.truncf %68 : vector<71x3xf32> to vector<71x3xbf16>
    %c10_54 = arith.constant 10 : index
    %c0_55 = arith.constant 0 : index
    %c0_56 = arith.constant 0 : index
    %70 = vector.load %arg3[%c10_54, %c0_55, %c0_56] : memref<16x3x128xbf16, #tpu.memory_space<vmem>>, vector<1x3x128xbf16>
    %71 = vector.shape_cast %70 : vector<1x3x128xbf16> to vector<3x128xbf16>
    %cst_57 = arith.constant dense<0.000000e+00> : vector<71x128xf32>
    %72 = tpu.matmul %69, %71, %cst_57 {dimension_numbers = #tpu.dot_dimension_numbers<[1], [0], [0], [1], [0, 0, 1, 1], [], []>} : vector<71x3xbf16>, vector<3x128xbf16>, vector<71x128xf32> -> vector<71x128xf32>
    %73 = arith.addf %67, %72 : vector<71x128xf32>
    %c98 = arith.constant 98 : index
    %c0_58 = arith.constant 0 : index
    %74 = vector.load %arg1[%c98, %c0_58] : memref<352x3xf32, #tpu.memory_space<vmem>>, vector<71x3xf32>
    %75 = arith.truncf %74 : vector<71x3xf32> to vector<71x3xbf16>
    %c11 = arith.constant 11 : index
    %c0_59 = arith.constant 0 : index
    %c0_60 = arith.constant 0 : index
    %76 = vector.load %arg3[%c11, %c0_59, %c0_60] : memref<16x3x128xbf16, #tpu.memory_space<vmem>>, vector<1x3x128xbf16>
    %77 = vector.shape_cast %76 : vector<1x3x128xbf16> to vector<3x128xbf16>
    %cst_61 = arith.constant dense<0.000000e+00> : vector<71x128xf32>
    %78 = tpu.matmul %75, %77, %cst_61 {dimension_numbers = #tpu.dot_dimension_numbers<[1], [0], [0], [1], [0, 0, 1, 1], [], []>} : vector<71x3xbf16>, vector<3x128xbf16>, vector<71x128xf32> -> vector<71x128xf32>
    %79 = arith.addf %73, %78 : vector<71x128xf32>
    %c185 = arith.constant 185 : index
    %c0_62 = arith.constant 0 : index
    %80 = vector.load %arg1[%c185, %c0_62] : memref<352x3xf32, #tpu.memory_space<vmem>>, vector<71x3xf32>
    %81 = arith.truncf %80 : vector<71x3xf32> to vector<71x3xbf16>
    %c12 = arith.constant 12 : index
    %c0_63 = arith.constant 0 : index
    %c0_64 = arith.constant 0 : index
    %82 = vector.load %arg3[%c12, %c0_63, %c0_64] : memref<16x3x128xbf16, #tpu.memory_space<vmem>>, vector<1x3x128xbf16>
    %83 = vector.shape_cast %82 : vector<1x3x128xbf16> to vector<3x128xbf16>
    %cst_65 = arith.constant dense<0.000000e+00> : vector<71x128xf32>
    %84 = tpu.matmul %81, %83, %cst_65 {dimension_numbers = #tpu.dot_dimension_numbers<[1], [0], [0], [1], [0, 0, 1, 1], [], []>} : vector<71x3xbf16>, vector<3x128xbf16>, vector<71x128xf32> -> vector<71x128xf32>
    %85 = arith.addf %79, %84 : vector<71x128xf32>
    %c273 = arith.constant 273 : index
    %c0_66 = arith.constant 0 : index
    %86 = vector.load %arg1[%c273, %c0_66] : memref<352x3xf32, #tpu.memory_space<vmem>>, vector<71x3xf32>
    %87 = arith.truncf %86 : vector<71x3xf32> to vector<71x3xbf16>
    %c13 = arith.constant 13 : index
    %c0_67 = arith.constant 0 : index
    %c0_68 = arith.constant 0 : index
    %88 = vector.load %arg3[%c13, %c0_67, %c0_68] : memref<16x3x128xbf16, #tpu.memory_space<vmem>>, vector<1x3x128xbf16>
    %89 = vector.shape_cast %88 : vector<1x3x128xbf16> to vector<3x128xbf16>
    %cst_69 = arith.constant dense<0.000000e+00> : vector<71x128xf32>
    %90 = tpu.matmul %87, %89, %cst_69 {dimension_numbers = #tpu.dot_dimension_numbers<[1], [0], [0], [1], [0, 0, 1, 1], [], []>} : vector<71x3xbf16>, vector<3x128xbf16>, vector<71x128xf32> -> vector<71x128xf32>
    %91 = arith.addf %85, %90 : vector<71x128xf32>
    %c186 = arith.constant 186 : index
    %c0_70 = arith.constant 0 : index
    %92 = vector.load %arg1[%c186, %c0_70] : memref<352x3xf32, #tpu.memory_space<vmem>>, vector<71x3xf32>
    %93 = arith.truncf %92 : vector<71x3xf32> to vector<71x3xbf16>
    %c14 = arith.constant 14 : index
    %c0_71 = arith.constant 0 : index
    %c0_72 = arith.constant 0 : index
    %94 = vector.load %arg3[%c14, %c0_71, %c0_72] : memref<16x3x128xbf16, #tpu.memory_space<vmem>>, vector<1x3x128xbf16>
    %95 = vector.shape_cast %94 : vector<1x3x128xbf16> to vector<3x128xbf16>
    %cst_73 = arith.constant dense<0.000000e+00> : vector<71x128xf32>
    %96 = tpu.matmul %93, %95, %cst_73 {dimension_numbers = #tpu.dot_dimension_numbers<[1], [0], [0], [1], [0, 0, 1, 1], [], []>} : vector<71x3xbf16>, vector<3x128xbf16>, vector<71x128xf32> -> vector<71x128xf32>
    %97 = arith.addf %91, %96 : vector<71x128xf32>
    %c274 = arith.constant 274 : index
    %c0_74 = arith.constant 0 : index
    %98 = vector.load %arg1[%c274, %c0_74] : memref<352x3xf32, #tpu.memory_space<vmem>>, vector<71x3xf32>
    %99 = arith.truncf %98 : vector<71x3xf32> to vector<71x3xbf16>
    %c15 = arith.constant 15 : index
    %c0_75 = arith.constant 0 : index
    %c0_76 = arith.constant 0 : index
    %100 = vector.load %arg3[%c15, %c0_75, %c0_76] : memref<16x3x128xbf16, #tpu.memory_space<vmem>>, vector<1x3x128xbf16>
    %101 = vector.shape_cast %100 : vector<1x3x128xbf16> to vector<3x128xbf16>
    %cst_77 = arith.constant dense<0.000000e+00> : vector<71x128xf32>
    %102 = tpu.matmul %99, %101, %cst_77 {dimension_numbers = #tpu.dot_dimension_numbers<[1], [0], [0], [1], [0, 0, 1, 1], [], []>} : vector<71x3xbf16>, vector<3x128xbf16>, vector<71x128xf32> -> vector<71x128xf32>
    %103 = arith.addf %97, %102 : vector<71x128xf32>
    %c0_78 = arith.constant 0 : index
    %c0_79 = arith.constant 0 : index
    %104 = vector.load %arg2[%c0_78, %c0_79] : memref<8x128xf32, #tpu.memory_space<vmem>>, vector<1x128xf32>
    %105 = vector.broadcast %104 : vector<1x128xf32> to vector<71x128xf32>
    %106 = arith.addf %103, %105 : vector<71x128xf32>
    %cst_80 = arith.constant 0.000000e+00 : f32
    %107 = vector.broadcast %cst_80 : f32 to vector<71x128xf32>
    %108 = arith.cmpf ogt, %106, %107 : vector<71x128xf32>
    %cst_81 = arith.constant 0.00999999977 : f32
    %109 = vector.broadcast %cst_81 : f32 to vector<71x128xf32>
    %110 = arith.mulf %109, %106 : vector<71x128xf32>
    %111 = arith.select %108, %106, %110 : vector<71x128xi1>, vector<71x128xf32>
    %c0_82 = arith.constant 0 : index
    %c0_83 = arith.constant 0 : index
    %112 = vector.load %arg9[%c0_82, %c0_83] : memref<72x128xf32, #tpu.memory_space<vmem>>, vector<71x128xf32>
    tpu.vector_store %arg9[%c0_82, %c0_83], %111 {strides = array<i32>} : memref<72x128xf32, #tpu.memory_space<vmem>>, vector<71x128xf32>,
    %cst_84 = arith.constant 0.000000e+00 : f32
    %113 = vector.broadcast %cst_84 : f32 to vector<1x128xf32>
    %c0_85 = arith.constant 0 : index
    %c0_86 = arith.constant 0 : index
    %114 = tpu.strided_load %arg9[%c0_85, %c0_86] {strides = array<i32: 2, 1>} : memref<72x128xf32, #tpu.memory_space<vmem>>, vector<4x128xf32>
    %c1_87 = arith.constant 1 : index
    %c0_88 = arith.constant 0 : index
    %115 = tpu.strided_load %arg9[%c1_87, %c0_88] {strides = array<i32: 2, 1>} : memref<72x128xf32, #tpu.memory_space<vmem>>, vector<4x128xf32>
    %116 = tpu.concatenate %114, %113 in 0 : vector<4x128xf32>, vector<1x128xf32> -> vector<5x128xf32>
    %c96 = arith.constant 96 : index
    %c0_89 = arith.constant 0 : index
    %117 = vector.load %arg10[%c96, %c0_89] : memref<128x128xf32, #tpu.memory_space<vmem>>, vector<5x128xf32>
    tpu.vector_store %arg10[%c96, %c0_89], %116 {strides = array<i32>} : memref<128x128xf32, #tpu.memory_space<vmem>>, vector<5x128xf32>,
    %118 = tpu.concatenate %113, %115 in 0 : vector<1x128xf32>, vector<4x128xf32> -> vector<5x128xf32>
    %c64 = arith.constant 64 : index
    %c0_90 = arith.constant 0 : index
    %119 = vector.load %arg10[%c64, %c0_90] : memref<128x128xf32, #tpu.memory_space<vmem>>, vector<5x128xf32>
    tpu.vector_store %arg10[%c64, %c0_90], %118 {strides = array<i32>} : memref<128x128xf32, #tpu.memory_space<vmem>>, vector<5x128xf32>,
    %c9_91 = arith.constant 9 : index
    %c0_92 = arith.constant 0 : index
    %120 = tpu.strided_load %arg9[%c9_91, %c0_92] {strides = array<i32: 2, 1>} : memref<72x128xf32, #tpu.memory_space<vmem>>, vector<4x128xf32>
    %c10_93 = arith.constant 10 : index
    %c0_94 = arith.constant 0 : index
    %121 = tpu.strided_load %arg9[%c10_93, %c0_94] {strides = array<i32: 2, 1>} : memref<72x128xf32, #tpu.memory_space<vmem>>, vector<4x128xf32>
    %122 = tpu.concatenate %120, %113 in 0 : vector<4x128xf32>, vector<1x128xf32> -> vector<5x128xf32>
    %c37 = arith.constant 37 : index
    %c0_95 = arith.constant 0 : index
    %123 = vector.load %arg10[%c37, %c0_95] : memref<128x128xf32, #tpu.memory_space<vmem>>, vector<5x128xf32>
    tpu.vector_store %arg10[%c37, %c0_95], %122 {strides = array<i32>} : memref<128x128xf32, #tpu.memory_space<vmem>>, vector<5x128xf32>,
    %124 = tpu.concatenate %113, %121 in 0 : vector<1x128xf32>, vector<4x128xf32> -> vector<5x128xf32>
    %c5_96 = arith.constant 5 : index
    %c0_97 = arith.constant 0 : index
    %125 = vector.load %arg10[%c5_96, %c0_97] : memref<128x128xf32, #tpu.memory_space<vmem>>, vector<5x128xf32>
    tpu.vector_store %arg10[%c5_96, %c0_97], %124 {strides = array<i32>} : memref<128x128xf32, #tpu.memory_space<vmem>>, vector<5x128xf32>,
    %c18 = arith.constant 18 : index
    %c0_98 = arith.constant 0 : index
    %126 = tpu.strided_load %arg9[%c18, %c0_98] {strides = array<i32: 2, 1>} : memref<72x128xf32, #tpu.memory_space<vmem>>, vector<4x128xf32>
    %c19 = arith.constant 19 : index
    %c0_99 = arith.constant 0 : index
    %127 = tpu.strided_load %arg9[%c19, %c0_99] {strides = array<i32: 2, 1>} : memref<72x128xf32, #tpu.memory_space<vmem>>, vector<4x128xf32>
    %128 = tpu.concatenate %126, %113 in 0 : vector<4x128xf32>, vector<1x128xf32> -> vector<5x128xf32>
    %c101 = arith.constant 101 : index
    %c0_100 = arith.constant 0 : index
    %129 = vector.load %arg10[%c101, %c0_100] : memref<128x128xf32, #tpu.memory_space<vmem>>, vector<5x128xf32>
    tpu.vector_store %arg10[%c101, %c0_100], %128 {strides = array<i32>} : memref<128x128xf32, #tpu.memory_space<vmem>>, vector<5x128xf32>,
    %130 = tpu.concatenate %113, %127 in 0 : vector<1x128xf32>, vector<4x128xf32> -> vector<5x128xf32>
    %c69 = arith.constant 69 : index
    %c0_101 = arith.constant 0 : index
    %131 = vector.load %arg10[%c69, %c0_101] : memref<128x128xf32, #tpu.memory_space<vmem>>, vector<5x128xf32>
    tpu.vector_store %arg10[%c69, %c0_101], %130 {strides = array<i32>} : memref<128x128xf32, #tpu.memory_space<vmem>>, vector<5x128xf32>,
    %c27 = arith.constant 27 : index
    %c0_102 = arith.constant 0 : index
    %132 = tpu.strided_load %arg9[%c27, %c0_102] {strides = array<i32: 2, 1>} : memref<72x128xf32, #tpu.memory_space<vmem>>, vector<4x128xf32>
    %c28 = arith.constant 28 : index
    %c0_103 = arith.constant 0 : index
    %133 = tpu.strided_load %arg9[%c28, %c0_103] {strides = array<i32: 2, 1>} : memref<72x128xf32, #tpu.memory_space<vmem>>, vector<4x128xf32>
    %134 = tpu.concatenate %132, %113 in 0 : vector<4x128xf32>, vector<1x128xf32> -> vector<5x128xf32>
    %c42 = arith.constant 42 : index
    %c0_104 = arith.constant 0 : index
    %135 = vector.load %arg10[%c42, %c0_104] : memref<128x128xf32, #tpu.memory_space<vmem>>, vector<5x128xf32>
    tpu.vector_store %arg10[%c42, %c0_104], %134 {strides = array<i32>} : memref<128x128xf32, #tpu.memory_space<vmem>>, vector<5x128xf32>,
    %136 = tpu.concatenate %113, %133 in 0 : vector<1x128xf32>, vector<4x128xf32> -> vector<5x128xf32>
    %c10_105 = arith.constant 10 : index
    %c0_106 = arith.constant 0 : index
    %137 = vector.load %arg10[%c10_105, %c0_106] : memref<128x128xf32, #tpu.memory_space<vmem>>, vector<5x128xf32>
    tpu.vector_store %arg10[%c10_105, %c0_106], %136 {strides = array<i32>} : memref<128x128xf32, #tpu.memory_space<vmem>>, vector<5x128xf32>,
    %c36 = arith.constant 36 : index
    %c0_107 = arith.constant 0 : index
    %138 = tpu.strided_load %arg9[%c36, %c0_107] {strides = array<i32: 2, 1>} : memref<72x128xf32, #tpu.memory_space<vmem>>, vector<4x128xf32>
    %c37_108 = arith.constant 37 : index
    %c0_109 = arith.constant 0 : index
    %139 = tpu.strided_load %arg9[%c37_108, %c0_109] {strides = array<i32: 2, 1>} : memref<72x128xf32, #tpu.memory_space<vmem>>, vector<4x128xf32>
    %140 = tpu.concatenate %138, %113 in 0 : vector<4x128xf32>, vector<1x128xf32> -> vector<5x128xf32>
    %c106 = arith.constant 106 : index
    %c0_110 = arith.constant 0 : index
    %141 = vector.load %arg10[%c106, %c0_110] : memref<128x128xf32, #tpu.memory_space<vmem>>, vector<5x128xf32>
    tpu.vector_store %arg10[%c106, %c0_110], %140 {strides = array<i32>} : memref<128x128xf32, #tpu.memory_space<vmem>>, vector<5x128xf32>,
    %142 = tpu.concatenate %113, %139 in 0 : vector<1x128xf32>, vector<4x128xf32> -> vector<5x128xf32>
    %c74 = arith.constant 74 : index
    %c0_111 = arith.constant 0 : index
    %143 = vector.load %arg10[%c74, %c0_111] : memref<128x128xf32, #tpu.memory_space<vmem>>, vector<5x128xf32>
    tpu.vector_store %arg10[%c74, %c0_111], %142 {strides = array<i32>} : memref<128x128xf32, #tpu.memory_space<vmem>>, vector<5x128xf32>,
    %c45 = arith.constant 45 : index
    %c0_112 = arith.constant 0 : index
    %144 = tpu.strided_load %arg9[%c45, %c0_112] {strides = array<i32: 2, 1>} : memref<72x128xf32, #tpu.memory_space<vmem>>, vector<4x128xf32>
    %c46 = arith.constant 46 : index
    %c0_113 = arith.constant 0 : index
    %145 = tpu.strided_load %arg9[%c46, %c0_113] {strides = array<i32: 2, 1>} : memref<72x128xf32, #tpu.memory_space<vmem>>, vector<4x128xf32>
    %146 = tpu.concatenate %144, %113 in 0 : vector<4x128xf32>, vector<1x128xf32> -> vector<5x128xf32>
    %c47 = arith.constant 47 : index
    %c0_114 = arith.constant 0 : index
    %147 = vector.load %arg10[%c47, %c0_114] : memref<128x128xf32, #tpu.memory_space<vmem>>, vector<5x128xf32>
    tpu.vector_store %arg10[%c47, %c0_114], %146 {strides = array<i32>} : memref<128x128xf32, #tpu.memory_space<vmem>>, vector<5x128xf32>,
    %148 = tpu.concatenate %113, %145 in 0 : vector<1x128xf32>, vector<4x128xf32> -> vector<5x128xf32>
    %c15_115 = arith.constant 15 : index
    %c0_116 = arith.constant 0 : index
    %149 = vector.load %arg10[%c15_115, %c0_116] : memref<128x128xf32, #tpu.memory_space<vmem>>, vector<5x128xf32>
    tpu.vector_store %arg10[%c15_115, %c0_116], %148 {strides = array<i32>} : memref<128x128xf32, #tpu.memory_space<vmem>>, vector<5x128xf32>,
    %c54 = arith.constant 54 : index
    %c0_117 = arith.constant 0 : index
    %150 = tpu.strided_load %arg9[%c54, %c0_117] {strides = array<i32: 2, 1>} : memref<72x128xf32, #tpu.memory_space<vmem>>, vector<4x128xf32>
    %c55 = arith.constant 55 : index
    %c0_118 = arith.constant 0 : index
    %151 = tpu.strided_load %arg9[%c55, %c0_118] {strides = array<i32: 2, 1>} : memref<72x128xf32, #tpu.memory_space<vmem>>, vector<4x128xf32>
    %152 = tpu.concatenate %150, %113 in 0 : vector<4x128xf32>, vector<1x128xf32> -> vector<5x128xf32>
    %c111 = arith.constant 111 : index
    %c0_119 = arith.constant 0 : index
    %153 = vector.load %arg10[%c111, %c0_119] : memref<128x128xf32, #tpu.memory_space<vmem>>, vector<5x128xf32>
    tpu.vector_store %arg10[%c111, %c0_119], %152 {strides = array<i32>} : memref<128x128xf32, #tpu.memory_space<vmem>>, vector<5x128xf32>,
    %154 = tpu.concatenate %113, %151 in 0 : vector<1x128xf32>, vector<4x128xf32> -> vector<5x128xf32>
    %c79 = arith.constant 79 : index
    %c0_120 = arith.constant 0 : index
    %155 = vector.load %arg10[%c79, %c0_120] : memref<128x128xf32, #tpu.memory_space<vmem>>, vector<5x128xf32>
    tpu.vector_store %arg10[%c79, %c0_120], %154 {strides = array<i32>} : memref<128x128xf32, #tpu.memory_space<vmem>>, vector<5x128xf32>,
    %c63 = arith.constant 63 : index
    %c0_121 = arith.constant 0 : index
    %156 = tpu.strided_load %arg9[%c63, %c0_121] {strides = array<i32: 2, 1>} : memref<72x128xf32, #tpu.memory_space<vmem>>, vector<4x128xf32>
    %c64_122 = arith.constant 64 : index
    %c0_123 = arith.constant 0 : index
    %157 = tpu.strided_load %arg9[%c64_122, %c0_123] {strides = array<i32: 2, 1>} : memref<72x128xf32, #tpu.memory_space<vmem>>, vector<4x128xf32>
    %158 = tpu.concatenate %156, %113 in 0 : vector<4x128xf32>, vector<1x128xf32> -> vector<5x128xf32>
    %c52 = arith.constant 52 : index
    %c0_124 = arith.constant 0 : index
    %159 = vector.load %arg10[%c52, %c0_124] : memref<128x128xf32, #tpu.memory_space<vmem>>, vector<5x128xf32>
    tpu.vector_store %arg10[%c52, %c0_124], %158 {strides = array<i32>} : memref<128x128xf32, #tpu.memory_space<vmem>>, vector<5x128xf32>,
    %160 = tpu.concatenate %113, %157 in 0 : vector<1x128xf32>, vector<4x128xf32> -> vector<5x128xf32>
    %c20 = arith.constant 20 : index
    %c0_125 = arith.constant 0 : index
    %161 = vector.load %arg10[%c20, %c0_125] : memref<128x128xf32, #tpu.memory_space<vmem>>, vector<5x128xf32>
    tpu.vector_store %arg10[%c20, %c0_125], %160 {strides = array<i32>} : memref<128x128xf32, #tpu.memory_space<vmem>>, vector<5x128xf32>,
    %c0_126 = arith.constant 0 : index
    %c0_127 = arith.constant 0 : index
    %162 = vector.load %arg10[%c0_126, %c0_127] : memref<128x128xf32, #tpu.memory_space<vmem>>, vector<19x128xf32>
    %163 = arith.truncf %162 : vector<19x128xf32> to vector<19x128xbf16>
    %c0_128 = arith.constant 0 : index
    %c0_129 = arith.constant 0 : index
    %c0_130 = arith.constant 0 : index
    %164 = vector.load %arg4[%c0_128, %c0_129, %c0_130] : memref<16x128x128xbf16, #tpu.memory_space<vmem>>, vector<1x128x128xbf16>
    %165 = vector.shape_cast %164 : vector<1x128x128xbf16> to vector<128x128xbf16>
    %cst_131 = arith.constant dense<0.000000e+00> : vector<19x128xf32>
    %166 = tpu.matmul %163, %165, %cst_131 {dimension_numbers = #tpu.dot_dimension_numbers<[1], [0], [0], [1], [0, 0, 1, 1], [], []>} : vector<19x128xbf16>, vector<128x128xbf16>, vector<19x128xf32> -> vector<19x128xf32>
    %c32_132 = arith.constant 32 : index
    %c0_133 = arith.constant 0 : index
    %167 = vector.load %arg10[%c32_132, %c0_133] : memref<128x128xf32, #tpu.memory_space<vmem>>, vector<19x128xf32>
    %168 = arith.truncf %167 : vector<19x128xf32> to vector<19x128xbf16>
    %c1_134 = arith.constant 1 : index
    %c0_135 = arith.constant 0 : index
    %c0_136 = arith.constant 0 : index
    %169 = vector.load %arg4[%c1_134, %c0_135, %c0_136] : memref<16x128x128xbf16, #tpu.memory_space<vmem>>, vector<1x128x128xbf16>
    %170 = vector.shape_cast %169 : vector<1x128x128xbf16> to vector<128x128xbf16>
    %cst_137 = arith.constant dense<0.000000e+00> : vector<19x128xf32>
    %171 = tpu.matmul %168, %170, %cst_137 {dimension_numbers = #tpu.dot_dimension_numbers<[1], [0], [0], [1], [0, 0, 1, 1], [], []>} : vector<19x128xbf16>, vector<128x128xbf16>, vector<19x128xf32> -> vector<19x128xf32>
    %172 = arith.addf %166, %171 : vector<19x128xf32>
    %c1_138 = arith.constant 1 : index
    %c0_139 = arith.constant 0 : index
    %173 = vector.load %arg10[%c1_138, %c0_139] : memref<128x128xf32, #tpu.memory_space<vmem>>, vector<19x128xf32>
    %174 = arith.truncf %173 : vector<19x128xf32> to vector<19x128xbf16>
    %c2_140 = arith.constant 2 : index
    %c0_141 = arith.constant 0 : index
    %c0_142 = arith.constant 0 : index
    %175 = vector.load %arg4[%c2_140, %c0_141, %c0_142] : memref<16x128x128xbf16, #tpu.memory_space<vmem>>, vector<1x128x128xbf16>
    %176 = vector.shape_cast %175 : vector<1x128x128xbf16> to vector<128x128xbf16>
    %cst_143 = arith.constant dense<0.000000e+00> : vector<19x128xf32>
    %177 = tpu.matmul %174, %176, %cst_143 {dimension_numbers = #tpu.dot_dimension_numbers<[1], [0], [0], [1], [0, 0, 1, 1], [], []>} : vector<19x128xbf16>, vector<128x128xbf16>, vector<19x128xf32> -> vector<19x128xf32>
    %178 = arith.addf %172, %177 : vector<19x128xf32>
    %c33 = arith.constant 33 : index
    %c0_144 = arith.constant 0 : index
    %179 = vector.load %arg10[%c33, %c0_144] : memref<128x128xf32, #tpu.memory_space<vmem>>, vector<19x128xf32>
    %180 = arith.truncf %179 : vector<19x128xf32> to vector<19x128xbf16>
    %c3_145 = arith.constant 3 : index
    %c0_146 = arith.constant 0 : index
    %c0_147 = arith.constant 0 : index
    %181 = vector.load %arg4[%c3_145, %c0_146, %c0_147] : memref<16x128x128xbf16, #tpu.memory_space<vmem>>, vector<1x128x128xbf16>
    %182 = vector.shape_cast %181 : vector<1x128x128xbf16> to vector<128x128xbf16>
    %cst_148 = arith.constant dense<0.000000e+00> : vector<19x128xf32>
    %183 = tpu.matmul %180, %182, %cst_148 {dimension_numbers = #tpu.dot_dimension_numbers<[1], [0], [0], [1], [0, 0, 1, 1], [], []>} : vector<19x128xbf16>, vector<128x128xbf16>, vector<19x128xf32> -> vector<19x128xf32>
    %184 = arith.addf %178, %183 : vector<19x128xf32>
    %c64_149 = arith.constant 64 : index
    %c0_150 = arith.constant 0 : index
    %185 = vector.load %arg10[%c64_149, %c0_150] : memref<128x128xf32, #tpu.memory_space<vmem>>, vector<19x128xf32>
    %186 = arith.truncf %185 : vector<19x128xf32> to vector<19x128xbf16>
    %c4_151 = arith.constant 4 : index
    %c0_152 = arith.constant 0 : index
    %c0_153 = arith.constant 0 : index
    %187 = vector.load %arg4[%c4_151, %c0_152, %c0_153] : memref<16x128x128xbf16, #tpu.memory_space<vmem>>, vector<1x128x128xbf16>
    %188 = vector.shape_cast %187 : vector<1x128x128xbf16> to vector<128x128xbf16>
    %cst_154 = arith.constant dense<0.000000e+00> : vector<19x128xf32>
    %189 = tpu.matmul %186, %188, %cst_154 {dimension_numbers = #tpu.dot_dimension_numbers<[1], [0], [0], [1], [0, 0, 1, 1], [], []>} : vector<19x128xbf16>, vector<128x128xbf16>, vector<19x128xf32> -> vector<19x128xf32>
    %190 = arith.addf %184, %189 : vector<19x128xf32>
    %c96_155 = arith.constant 96 : index
    %c0_156 = arith.constant 0 : index
    %191 = vector.load %arg10[%c96_155, %c0_156] : memref<128x128xf32, #tpu.memory_space<vmem>>, vector<19x128xf32>
    %192 = arith.truncf %191 : vector<19x128xf32> to vector<19x128xbf16>
    %c5_157 = arith.constant 5 : index
    %c0_158 = arith.constant 0 : index
    %c0_159 = arith.constant 0 : index
    %193 = vector.load %arg4[%c5_157, %c0_158, %c0_159] : memref<16x128x128xbf16, #tpu.memory_space<vmem>>, vector<1x128x128xbf16>
    %194 = vector.shape_cast %193 : vector<1x128x128xbf16> to vector<128x128xbf16>
    %cst_160 = arith.constant dense<0.000000e+00> : vector<19x128xf32>
    %195 = tpu.matmul %192, %194, %cst_160 {dimension_numbers = #tpu.dot_dimension_numbers<[1], [0], [0], [1], [0, 0, 1, 1], [], []>} : vector<19x128xbf16>, vector<128x128xbf16>, vector<19x128xf32> -> vector<19x128xf32>
    %196 = arith.addf %190, %195 : vector<19x128xf32>
    %c65 = arith.constant 65 : index
    %c0_161 = arith.constant 0 : index
    %197 = vector.load %arg10[%c65, %c0_161] : memref<128x128xf32, #tpu.memory_space<vmem>>, vector<19x128xf32>
    %198 = arith.truncf %197 : vector<19x128xf32> to vector<19x128xbf16>
    %c6_162 = arith.constant 6 : index
    %c0_163 = arith.constant 0 : index
    %c0_164 = arith.constant 0 : index
    %199 = vector.load %arg4[%c6_162, %c0_163, %c0_164] : memref<16x128x128xbf16, #tpu.memory_space<vmem>>, vector<1x128x128xbf16>
    %200 = vector.shape_cast %199 : vector<1x128x128xbf16> to vector<128x128xbf16>
    %cst_165 = arith.constant dense<0.000000e+00> : vector<19x128xf32>
    %201 = tpu.matmul %198, %200, %cst_165 {dimension_numbers = #tpu.dot_dimension_numbers<[1], [0], [0], [1], [0, 0, 1, 1], [], []>} : vector<19x128xbf16>, vector<128x128xbf16>, vector<19x128xf32> -> vector<19x128xf32>
    %202 = arith.addf %196, %201 : vector<19x128xf32>
    %c97_166 = arith.constant 97 : index
    %c0_167 = arith.constant 0 : index
    %203 = vector.load %arg10[%c97_166, %c0_167] : memref<128x128xf32, #tpu.memory_space<vmem>>, vector<19x128xf32>
    %204 = arith.truncf %203 : vector<19x128xf32> to vector<19x128xbf16>
    %c7_168 = arith.constant 7 : index
    %c0_169 = arith.constant 0 : index
    %c0_170 = arith.constant 0 : index
    %205 = vector.load %arg4[%c7_168, %c0_169, %c0_170] : memref<16x128x128xbf16, #tpu.memory_space<vmem>>, vector<1x128x128xbf16>
    %206 = vector.shape_cast %205 : vector<1x128x128xbf16> to vector<128x128xbf16>
    %cst_171 = arith.constant dense<0.000000e+00> : vector<19x128xf32>
    %207 = tpu.matmul %204, %206, %cst_171 {dimension_numbers = #tpu.dot_dimension_numbers<[1], [0], [0], [1], [0, 0, 1, 1], [], []>} : vector<19x128xbf16>, vector<128x128xbf16>, vector<19x128xf32> -> vector<19x128xf32>
    %208 = arith.addf %202, %207 : vector<19x128xf32>
    %c5_172 = arith.constant 5 : index
    %c0_173 = arith.constant 0 : index
    %209 = vector.load %arg10[%c5_172, %c0_173] : memref<128x128xf32, #tpu.memory_space<vmem>>, vector<19x128xf32>
    %210 = arith.truncf %209 : vector<19x128xf32> to vector<19x128xbf16>
    %c8_174 = arith.constant 8 : index
    %c0_175 = arith.constant 0 : index
    %c0_176 = arith.constant 0 : index
    %211 = vector.load %arg4[%c8_174, %c0_175, %c0_176] : memref<16x128x128xbf16, #tpu.memory_space<vmem>>, vector<1x128x128xbf16>
    %212 = vector.shape_cast %211 : vector<1x128x128xbf16> to vector<128x128xbf16>
    %cst_177 = arith.constant dense<0.000000e+00> : vector<19x128xf32>
    %213 = tpu.matmul %210, %212, %cst_177 {dimension_numbers = #tpu.dot_dimension_numbers<[1], [0], [0], [1], [0, 0, 1, 1], [], []>} : vector<19x128xbf16>, vector<128x128xbf16>, vector<19x128xf32> -> vector<19x128xf32>
    %214 = arith.addf %208, %213 : vector<19x128xf32>
    %c37_178 = arith.constant 37 : index
    %c0_179 = arith.constant 0 : index
    %215 = vector.load %arg10[%c37_178, %c0_179] : memref<128x128xf32, #tpu.memory_space<vmem>>, vector<19x128xf32>
    %216 = arith.truncf %215 : vector<19x128xf32> to vector<19x128xbf16>
    %c9_180 = arith.constant 9 : index
    %c0_181 = arith.constant 0 : index
    %c0_182 = arith.constant 0 : index
    %217 = vector.load %arg4[%c9_180, %c0_181, %c0_182] : memref<16x128x128xbf16, #tpu.memory_space<vmem>>, vector<1x128x128xbf16>
    %218 = vector.shape_cast %217 : vector<1x128x128xbf16> to vector<128x128xbf16>
    %cst_183 = arith.constant dense<0.000000e+00> : vector<19x128xf32>
    %219 = tpu.matmul %216, %218, %cst_183 {dimension_numbers = #tpu.dot_dimension_numbers<[1], [0], [0], [1], [0, 0, 1, 1], [], []>} : vector<19x128xbf16>, vector<128x128xbf16>, vector<19x128xf32> -> vector<19x128xf32>
    %220 = arith.addf %214, %219 : vector<19x128xf32>
    %c6_184 = arith.constant 6 : index
    %c0_185 = arith.constant 0 : index
    %221 = vector.load %arg10[%c6_184, %c0_185] : memref<128x128xf32, #tpu.memory_space<vmem>>, vector<19x128xf32>
    %222 = arith.truncf %221 : vector<19x128xf32> to vector<19x128xbf16>
    %c10_186 = arith.constant 10 : index
    %c0_187 = arith.constant 0 : index
    %c0_188 = arith.constant 0 : index
    %223 = vector.load %arg4[%c10_186, %c0_187, %c0_188] : memref<16x128x128xbf16, #tpu.memory_space<vmem>>, vector<1x128x128xbf16>
    %224 = vector.shape_cast %223 : vector<1x128x128xbf16> to vector<128x128xbf16>
    %cst_189 = arith.constant dense<0.000000e+00> : vector<19x128xf32>
    %225 = tpu.matmul %222, %224, %cst_189 {dimension_numbers = #tpu.dot_dimension_numbers<[1], [0], [0], [1], [0, 0, 1, 1], [], []>} : vector<19x128xbf16>, vector<128x128xbf16>, vector<19x128xf32> -> vector<19x128xf32>
    %226 = arith.addf %220, %225 : vector<19x128xf32>
    %c38 = arith.constant 38 : index
    %c0_190 = arith.constant 0 : index
    %227 = vector.load %arg10[%c38, %c0_190] : memref<128x128xf32, #tpu.memory_space<vmem>>, vector<19x128xf32>
    %228 = arith.truncf %227 : vector<19x128xf32> to vector<19x128xbf16>
    %c11_191 = arith.constant 11 : index
    %c0_192 = arith.constant 0 : index
    %c0_193 = arith.constant 0 : index
    %229 = vector.load %arg4[%c11_191, %c0_192, %c0_193] : memref<16x128x128xbf16, #tpu.memory_space<vmem>>, vector<1x128x128xbf16>
    %230 = vector.shape_cast %229 : vector<1x128x128xbf16> to vector<128x128xbf16>
    %cst_194 = arith.constant dense<0.000000e+00> : vector<19x128xf32>
    %231 = tpu.matmul %228, %230, %cst_194 {dimension_numbers = #tpu.dot_dimension_numbers<[1], [0], [0], [1], [0, 0, 1, 1], [], []>} : vector<19x128xbf16>, vector<128x128xbf16>, vector<19x128xf32> -> vector<19x128xf32>
    %232 = arith.addf %226, %231 : vector<19x128xf32>
    %c69_195 = arith.constant 69 : index
    %c0_196 = arith.constant 0 : index
    %233 = vector.load %arg10[%c69_195, %c0_196] : memref<128x128xf32, #tpu.memory_space<vmem>>, vector<19x128xf32>
    %234 = arith.truncf %233 : vector<19x128xf32> to vector<19x128xbf16>
    %c12_197 = arith.constant 12 : index
    %c0_198 = arith.constant 0 : index
    %c0_199 = arith.constant 0 : index
    %235 = vector.load %arg4[%c12_197, %c0_198, %c0_199] : memref<16x128x128xbf16, #tpu.memory_space<vmem>>, vector<1x128x128xbf16>
    %236 = vector.shape_cast %235 : vector<1x128x128xbf16> to vector<128x128xbf16>
    %cst_200 = arith.constant dense<0.000000e+00> : vector<19x128xf32>
    %237 = tpu.matmul %234, %236, %cst_200 {dimension_numbers = #tpu.dot_dimension_numbers<[1], [0], [0], [1], [0, 0, 1, 1], [], []>} : vector<19x128xbf16>, vector<128x128xbf16>, vector<19x128xf32> -> vector<19x128xf32>
    %238 = arith.addf %232, %237 : vector<19x128xf32>
    %c101_201 = arith.constant 101 : index
    %c0_202 = arith.constant 0 : index
    %239 = vector.load %arg10[%c101_201, %c0_202] : memref<128x128xf32, #tpu.memory_space<vmem>>, vector<19x128xf32>
    %240 = arith.truncf %239 : vector<19x128xf32> to vector<19x128xbf16>
    %c13_203 = arith.constant 13 : index
    %c0_204 = arith.constant 0 : index
    %c0_205 = arith.constant 0 : index
    %241 = vector.load %arg4[%c13_203, %c0_204, %c0_205] : memref<16x128x128xbf16, #tpu.memory_space<vmem>>, vector<1x128x128xbf16>
    %242 = vector.shape_cast %241 : vector<1x128x128xbf16> to vector<128x128xbf16>
    %cst_206 = arith.constant dense<0.000000e+00> : vector<19x128xf32>
    %243 = tpu.matmul %240, %242, %cst_206 {dimension_numbers = #tpu.dot_dimension_numbers<[1], [0], [0], [1], [0, 0, 1, 1], [], []>} : vector<19x128xbf16>, vector<128x128xbf16>, vector<19x128xf32> -> vector<19x128xf32>
    %244 = arith.addf %238, %243 : vector<19x128xf32>
    %c70 = arith.constant 70 : index
    %c0_207 = arith.constant 0 : index
    %245 = vector.load %arg10[%c70, %c0_207] : memref<128x128xf32, #tpu.memory_space<vmem>>, vector<19x128xf32>
    %246 = arith.truncf %245 : vector<19x128xf32> to vector<19x128xbf16>
    %c14_208 = arith.constant 14 : index
    %c0_209 = arith.constant 0 : index
    %c0_210 = arith.constant 0 : index
    %247 = vector.load %arg4[%c14_208, %c0_209, %c0_210] : memref<16x128x128xbf16, #tpu.memory_space<vmem>>, vector<1x128x128xbf16>
    %248 = vector.shape_cast %247 : vector<1x128x128xbf16> to vector<128x128xbf16>
    %cst_211 = arith.constant dense<0.000000e+00> : vector<19x128xf32>
    %249 = tpu.matmul %246, %248, %cst_211 {dimension_numbers = #tpu.dot_dimension_numbers<[1], [0], [0], [1], [0, 0, 1, 1], [], []>} : vector<19x128xbf16>, vector<128x128xbf16>, vector<19x128xf32> -> vector<19x128xf32>
    %250 = arith.addf %244, %249 : vector<19x128xf32>
    %c102 = arith.constant 102 : index
    %c0_212 = arith.constant 0 : index
    %251 = vector.load %arg10[%c102, %c0_212] : memref<128x128xf32, #tpu.memory_space<vmem>>, vector<19x128xf32>
    %252 = arith.truncf %251 : vector<19x128xf32> to vector<19x128xbf16>
    %c15_213 = arith.constant 15 : index
    %c0_214 = arith.constant 0 : index
    %c0_215 = arith.constant 0 : index
    %253 = vector.load %arg4[%c15_213, %c0_214, %c0_215] : memref<16x128x128xbf16, #tpu.memory_space<vmem>>, vector<1x128x128xbf16>
    %254 = vector.shape_cast %253 : vector<1x128x128xbf16> to vector<128x128xbf16>
    %cst_216 = arith.constant dense<0.000000e+00> : vector<19x128xf32>
    %255 = tpu.matmul %252, %254, %cst_216 {dimension_numbers = #tpu.dot_dimension_numbers<[1], [0], [0], [1], [0, 0, 1, 1], [], []>} : vector<19x128xbf16>, vector<128x128xbf16>, vector<19x128xf32> -> vector<19x128xf32>
    %256 = arith.addf %250, %255 : vector<19x128xf32>
    %c1_217 = arith.constant 1 : index
    %c0_218 = arith.constant 0 : index
    %257 = vector.load %arg2[%c1_217, %c0_218] : memref<8x128xf32, #tpu.memory_space<vmem>>, vector<1x128xf32>
    %258 = vector.broadcast %257 : vector<1x128xf32> to vector<19x128xf32>
    %259 = arith.addf %256, %258 : vector<19x128xf32>
    %cst_219 = arith.constant 0.000000e+00 : f32
    %260 = vector.broadcast %cst_219 : f32 to vector<19x128xf32>
    %261 = arith.cmpf ogt, %259, %260 : vector<19x128xf32>
    %cst_220 = arith.constant 0.00999999977 : f32
    %262 = vector.broadcast %cst_220 : f32 to vector<19x128xf32>
    %263 = arith.mulf %262, %259 : vector<19x128xf32>
    %264 = arith.select %261, %259, %263 : vector<19x128xi1>, vector<19x128xf32>
    %c0_221 = arith.constant 0 : index
    %c0_222 = arith.constant 0 : index
    %265 = vector.load %arg9[%c0_221, %c0_222] : memref<72x128xf32, #tpu.memory_space<vmem>>, vector<19x128xf32>
    tpu.vector_store %arg9[%c0_221, %c0_222], %264 {strides = array<i32>} : memref<72x128xf32, #tpu.memory_space<vmem>>, vector<19x128xf32>,
    %cst_223 = arith.constant 0.000000e+00 : f32
    %266 = vector.broadcast %cst_223 : f32 to vector<1x128xf32>
    %c0_224 = arith.constant 0 : index
    %c0_225 = arith.constant 0 : index
    %267 = vector.load %arg9[%c0_224, %c0_225] : memref<72x128xf32, #tpu.memory_space<vmem>>, vector<4x128xf32>
    %268 = tpu.concatenate %266, %267, %266 in 0 : vector<1x128xf32>, vector<4x128xf32>, vector<1x128xf32> -> vector<6x128xf32>
    %c6_226 = arith.constant 6 : index
    %c0_227 = arith.constant 0 : index
    %269 = vector.load %arg11[%c6_226, %c0_227] : memref<40x128xf32, #tpu.memory_space<vmem>>, vector<6x128xf32>
    tpu.vector_store %arg11[%c6_226, %c0_227], %268 {strides = array<i32>} : memref<40x128xf32, #tpu.memory_space<vmem>>, vector<6x128xf32>,
    %c5_228 = arith.constant 5 : index
    %c0_229 = arith.constant 0 : index
    %270 = vector.load %arg9[%c5_228, %c0_229] : memref<72x128xf32, #tpu.memory_space<vmem>>, vector<4x128xf32>
    %271 = tpu.concatenate %266, %270, %266 in 0 : vector<1x128xf32>, vector<4x128xf32>, vector<1x128xf32> -> vector<6x128xf32>
    %c12_230 = arith.constant 12 : index
    %c0_231 = arith.constant 0 : index
    %272 = vector.load %arg11[%c12_230, %c0_231] : memref<40x128xf32, #tpu.memory_space<vmem>>, vector<6x128xf32>
    tpu.vector_store %arg11[%c12_230, %c0_231], %271 {strides = array<i32>} : memref<40x128xf32, #tpu.memory_space<vmem>>, vector<6x128xf32>,
    %c10_232 = arith.constant 10 : index
    %c0_233 = arith.constant 0 : index
    %273 = vector.load %arg9[%c10_232, %c0_233] : memref<72x128xf32, #tpu.memory_space<vmem>>, vector<4x128xf32>
    %274 = tpu.concatenate %266, %273, %266 in 0 : vector<1x128xf32>, vector<4x128xf32>, vector<1x128xf32> -> vector<6x128xf32>
    %c18_234 = arith.constant 18 : index
    %c0_235 = arith.constant 0 : index
    %275 = vector.load %arg11[%c18_234, %c0_235] : memref<40x128xf32, #tpu.memory_space<vmem>>, vector<6x128xf32>
    tpu.vector_store %arg11[%c18_234, %c0_235], %274 {strides = array<i32>} : memref<40x128xf32, #tpu.memory_space<vmem>>, vector<6x128xf32>,
    %c15_236 = arith.constant 15 : index
    %c0_237 = arith.constant 0 : index
    %276 = vector.load %arg9[%c15_236, %c0_237] : memref<72x128xf32, #tpu.memory_space<vmem>>, vector<4x128xf32>
    %277 = tpu.concatenate %266, %276, %266 in 0 : vector<1x128xf32>, vector<4x128xf32>, vector<1x128xf32> -> vector<6x128xf32>
    %c24 = arith.constant 24 : index
    %c0_238 = arith.constant 0 : index
    %278 = vector.load %arg11[%c24, %c0_238] : memref<40x128xf32, #tpu.memory_space<vmem>>, vector<6x128xf32>
    tpu.vector_store %arg11[%c24, %c0_238], %277 {strides = array<i32>} : memref<40x128xf32, #tpu.memory_space<vmem>>, vector<6x128xf32>,
    %c0_239 = arith.constant 0 : index
    %c0_240 = arith.constant 0 : index
    %279 = vector.load %arg11[%c0_239, %c0_240] : memref<40x128xf32, #tpu.memory_space<vmem>>, vector<22x128xf32>
    %280 = arith.truncf %279 : vector<22x128xf32> to vector<22x128xbf16>
    %c0_241 = arith.constant 0 : index
    %c0_242 = arith.constant 0 : index
    %c0_243 = arith.constant 0 : index
    %281 = vector.load %arg5[%c0_241, %c0_242, %c0_243] : memref<9x128x128xbf16, #tpu.memory_space<vmem>>, vector<1x128x128xbf16>
    %282 = vector.shape_cast %281 : vector<1x128x128xbf16> to vector<128x128xbf16>
    %cst_244 = arith.constant dense<0.000000e+00> : vector<22x128xf32>
    %283 = tpu.matmul %280, %282, %cst_244 {dimension_numbers = #tpu.dot_dimension_numbers<[1], [0], [0], [1], [0, 0, 1, 1], [], []>} : vector<22x128xbf16>, vector<128x128xbf16>, vector<22x128xf32> -> vector<22x128xf32>
    %c1_245 = arith.constant 1 : index
    %c0_246 = arith.constant 0 : index
    %284 = vector.load %arg11[%c1_245, %c0_246] : memref<40x128xf32, #tpu.memory_space<vmem>>, vector<22x128xf32>
    %285 = arith.truncf %284 : vector<22x128xf32> to vector<22x128xbf16>
    %c1_247 = arith.constant 1 : index
    %c0_248 = arith.constant 0 : index
    %c0_249 = arith.constant 0 : index
    %286 = vector.load %arg5[%c1_247, %c0_248, %c0_249] : memref<9x128x128xbf16, #tpu.memory_space<vmem>>, vector<1x128x128xbf16>
    %287 = vector.shape_cast %286 : vector<1x128x128xbf16> to vector<128x128xbf16>
    %cst_250 = arith.constant dense<0.000000e+00> : vector<22x128xf32>
    %288 = tpu.matmul %285, %287, %cst_250 {dimension_numbers = #tpu.dot_dimension_numbers<[1], [0], [0], [1], [0, 0, 1, 1], [], []>} : vector<22x128xbf16>, vector<128x128xbf16>, vector<22x128xf32> -> vector<22x128xf32>
    %289 = arith.addf %283, %288 : vector<22x128xf32>
    %c2_251 = arith.constant 2 : index
    %c0_252 = arith.constant 0 : index
    %290 = vector.load %arg11[%c2_251, %c0_252] : memref<40x128xf32, #tpu.memory_space<vmem>>, vector<22x128xf32>
    %291 = arith.truncf %290 : vector<22x128xf32> to vector<22x128xbf16>
    %c2_253 = arith.constant 2 : index
    %c0_254 = arith.constant 0 : index
    %c0_255 = arith.constant 0 : index
    %292 = vector.load %arg5[%c2_253, %c0_254, %c0_255] : memref<9x128x128xbf16, #tpu.memory_space<vmem>>, vector<1x128x128xbf16>
    %293 = vector.shape_cast %292 : vector<1x128x128xbf16> to vector<128x128xbf16>
    %cst_256 = arith.constant dense<0.000000e+00> : vector<22x128xf32>
    %294 = tpu.matmul %291, %293, %cst_256 {dimension_numbers = #tpu.dot_dimension_numbers<[1], [0], [0], [1], [0, 0, 1, 1], [], []>} : vector<22x128xbf16>, vector<128x128xbf16>, vector<22x128xf32> -> vector<22x128xf32>
    %295 = arith.addf %289, %294 : vector<22x128xf32>
    %c6_257 = arith.constant 6 : index
    %c0_258 = arith.constant 0 : index
    %296 = vector.load %arg11[%c6_257, %c0_258] : memref<40x128xf32, #tpu.memory_space<vmem>>, vector<22x128xf32>
    %297 = arith.truncf %296 : vector<22x128xf32> to vector<22x128xbf16>
    %c3_259 = arith.constant 3 : index
    %c0_260 = arith.constant 0 : index
    %c0_261 = arith.constant 0 : index
    %298 = vector.load %arg5[%c3_259, %c0_260, %c0_261] : memref<9x128x128xbf16, #tpu.memory_space<vmem>>, vector<1x128x128xbf16>
    %299 = vector.shape_cast %298 : vector<1x128x128xbf16> to vector<128x128xbf16>
    %cst_262 = arith.constant dense<0.000000e+00> : vector<22x128xf32>
    %300 = tpu.matmul %297, %299, %cst_262 {dimension_numbers = #tpu.dot_dimension_numbers<[1], [0], [0], [1], [0, 0, 1, 1], [], []>} : vector<22x128xbf16>, vector<128x128xbf16>, vector<22x128xf32> -> vector<22x128xf32>
    %301 = arith.addf %295, %300 : vector<22x128xf32>
    %c7_263 = arith.constant 7 : index
    %c0_264 = arith.constant 0 : index
    %302 = vector.load %arg11[%c7_263, %c0_264] : memref<40x128xf32, #tpu.memory_space<vmem>>, vector<22x128xf32>
    %303 = arith.truncf %302 : vector<22x128xf32> to vector<22x128xbf16>
    %c4_265 = arith.constant 4 : index
    %c0_266 = arith.constant 0 : index
    %c0_267 = arith.constant 0 : index
    %304 = vector.load %arg5[%c4_265, %c0_266, %c0_267] : memref<9x128x128xbf16, #tpu.memory_space<vmem>>, vector<1x128x128xbf16>
    %305 = vector.shape_cast %304 : vector<1x128x128xbf16> to vector<128x128xbf16>
    %cst_268 = arith.constant dense<0.000000e+00> : vector<22x128xf32>
    %306 = tpu.matmul %303, %305, %cst_268 {dimension_numbers = #tpu.dot_dimension_numbers<[1], [0], [0], [1], [0, 0, 1, 1], [], []>} : vector<22x128xbf16>, vector<128x128xbf16>, vector<22x128xf32> -> vector<22x128xf32>
    %307 = arith.addf %301, %306 : vector<22x128xf32>
    %c8_269 = arith.constant 8 : index
    %c0_270 = arith.constant 0 : index
    %308 = vector.load %arg11[%c8_269, %c0_270] : memref<40x128xf32, #tpu.memory_space<vmem>>, vector<22x128xf32>
    %309 = arith.truncf %308 : vector<22x128xf32> to vector<22x128xbf16>
    %c5_271 = arith.constant 5 : index
    %c0_272 = arith.constant 0 : index
    %c0_273 = arith.constant 0 : index
    %310 = vector.load %arg5[%c5_271, %c0_272, %c0_273] : memref<9x128x128xbf16, #tpu.memory_space<vmem>>, vector<1x128x128xbf16>
    %311 = vector.shape_cast %310 : vector<1x128x128xbf16> to vector<128x128xbf16>
    %cst_274 = arith.constant dense<0.000000e+00> : vector<22x128xf32>
    %312 = tpu.matmul %309, %311, %cst_274 {dimension_numbers = #tpu.dot_dimension_numbers<[1], [0], [0], [1], [0, 0, 1, 1], [], []>} : vector<22x128xbf16>, vector<128x128xbf16>, vector<22x128xf32> -> vector<22x128xf32>
    %313 = arith.addf %307, %312 : vector<22x128xf32>
    %c12_275 = arith.constant 12 : index
    %c0_276 = arith.constant 0 : index
    %314 = vector.load %arg11[%c12_275, %c0_276] : memref<40x128xf32, #tpu.memory_space<vmem>>, vector<22x128xf32>
    %315 = arith.truncf %314 : vector<22x128xf32> to vector<22x128xbf16>
    %c6_277 = arith.constant 6 : index
    %c0_278 = arith.constant 0 : index
    %c0_279 = arith.constant 0 : index
    %316 = vector.load %arg5[%c6_277, %c0_278, %c0_279] : memref<9x128x128xbf16, #tpu.memory_space<vmem>>, vector<1x128x128xbf16>
    %317 = vector.shape_cast %316 : vector<1x128x128xbf16> to vector<128x128xbf16>
    %cst_280 = arith.constant dense<0.000000e+00> : vector<22x128xf32>
    %318 = tpu.matmul %315, %317, %cst_280 {dimension_numbers = #tpu.dot_dimension_numbers<[1], [0], [0], [1], [0, 0, 1, 1], [], []>} : vector<22x128xbf16>, vector<128x128xbf16>, vector<22x128xf32> -> vector<22x128xf32>
    %319 = arith.addf %313, %318 : vector<22x128xf32>
    %c13_281 = arith.constant 13 : index
    %c0_282 = arith.constant 0 : index
    %320 = vector.load %arg11[%c13_281, %c0_282] : memref<40x128xf32, #tpu.memory_space<vmem>>, vector<22x128xf32>
    %321 = arith.truncf %320 : vector<22x128xf32> to vector<22x128xbf16>
    %c7_283 = arith.constant 7 : index
    %c0_284 = arith.constant 0 : index
    %c0_285 = arith.constant 0 : index
    %322 = vector.load %arg5[%c7_283, %c0_284, %c0_285] : memref<9x128x128xbf16, #tpu.memory_space<vmem>>, vector<1x128x128xbf16>
    %323 = vector.shape_cast %322 : vector<1x128x128xbf16> to vector<128x128xbf16>
    %cst_286 = arith.constant dense<0.000000e+00> : vector<22x128xf32>
    %324 = tpu.matmul %321, %323, %cst_286 {dimension_numbers = #tpu.dot_dimension_numbers<[1], [0], [0], [1], [0, 0, 1, 1], [], []>} : vector<22x128xbf16>, vector<128x128xbf16>, vector<22x128xf32> -> vector<22x128xf32>
    %325 = arith.addf %319, %324 : vector<22x128xf32>
    %c14_287 = arith.constant 14 : index
    %c0_288 = arith.constant 0 : index
    %326 = vector.load %arg11[%c14_287, %c0_288] : memref<40x128xf32, #tpu.memory_space<vmem>>, vector<22x128xf32>
    %327 = arith.truncf %326 : vector<22x128xf32> to vector<22x128xbf16>
    %c8_289 = arith.constant 8 : index
    %c0_290 = arith.constant 0 : index
    %c0_291 = arith.constant 0 : index
    %328 = vector.load %arg5[%c8_289, %c0_290, %c0_291] : memref<9x128x128xbf16, #tpu.memory_space<vmem>>, vector<1x128x128xbf16>
    %329 = vector.shape_cast %328 : vector<1x128x128xbf16> to vector<128x128xbf16>
    %cst_292 = arith.constant dense<0.000000e+00> : vector<22x128xf32>
    %330 = tpu.matmul %327, %329, %cst_292 {dimension_numbers = #tpu.dot_dimension_numbers<[1], [0], [0], [1], [0, 0, 1, 1], [], []>} : vector<22x128xbf16>, vector<128x128xbf16>, vector<22x128xf32> -> vector<22x128xf32>
    %331 = arith.addf %325, %330 : vector<22x128xf32>
    %c0_293 = arith.constant 0 : index
    %c0_294 = arith.constant 0 : index
    %332 = vector.load %arg7[%c0_293, %c0_294] : memref<24x128xf32, #tpu.memory_space<vmem>>, vector<22x128xf32>
    tpu.vector_store %arg7[%c0_293, %c0_294], %331 {strides = array<i32>} : memref<24x128xf32, #tpu.memory_space<vmem>>, vector<22x128xf32>,
    %c7_295 = arith.constant 7 : index
    %c0_296 = arith.constant 0 : index
    %333 = vector.load %arg11[%c7_295, %c0_296] : memref<40x128xf32, #tpu.memory_space<vmem>>, vector<24x128xf32>
    %334 = tpu.iota {dimensions = array<i32: 1>} : vector<1x128xi32>
    %cst_297 = arith.constant 0.000000e+00 : f32
    %335 = vector.broadcast %cst_297 : f32 to vector<1x128xf32>
    %c0_298 = arith.constant 0 : index
    %c0_299 = arith.constant 0 : index
    %c0_300 = arith.constant 0 : index
    %336 = vector.load %arg6[%c0_298, %c0_299, %c0_300] : memref<2x24x128xf32, #tpu.memory_space<vmem>>, vector<1x24x128xf32>
    %337 = vector.shape_cast %336 : vector<1x24x128xf32> to vector<24x128xf32>
    %338 = arith.mulf %333, %337 : vector<24x128xf32>
    %cst_301 = arith.constant dense<0.000000e+00> : vector<128xf32>
    %339 = vector.multi_reduction <add>, %338, %cst_301 [0] : vector<24x128xf32> to vector<128xf32>
    %340 = vector.shape_cast %339 : vector<128xf32> to vector<1x128xf32>
    %cst_302 = arith.constant dense<0.000000e+00> : vector<1xf32>
    %341 = vector.multi_reduction <add>, %340, %cst_302 [1] : vector<1x128xf32> to vector<1xf32>
    %342 = vector.shape_cast %341 : vector<1xf32> to vector<1x1xf32>
    %c0_i32 = arith.constant 0 : i32
    %343 = vector.broadcast %c0_i32 : i32 to vector<1x128xi32>
    %344 = arith.cmpi eq, %334, %343 : vector<1x128xi32>
    %cst_303 = arith.constant 0.000000e+00 : f32
    %345 = vector.shape_cast %342 : vector<1x1xf32> to vector<1x1xf32>
    %346 = vector.broadcast %345 : vector<1x1xf32> to vector<1x128xf32>
    %347 = vector.broadcast %cst_303 : f32 to vector<1x128xf32>
    %348 = arith.select %344, %346, %347 : vector<1x128xi1>, vector<1x128xf32>
    %349 = arith.addf %335, %348 : vector<1x128xf32>
    %c1_304 = arith.constant 1 : index
    %c0_305 = arith.constant 0 : index
    %c0_306 = arith.constant 0 : index
    %350 = vector.load %arg6[%c1_304, %c0_305, %c0_306] : memref<2x24x128xf32, #tpu.memory_space<vmem>>, vector<1x24x128xf32>
    %351 = vector.shape_cast %350 : vector<1x24x128xf32> to vector<24x128xf32>
    %352 = arith.mulf %333, %351 : vector<24x128xf32>
    %cst_307 = arith.constant dense<0.000000e+00> : vector<128xf32>
    %353 = vector.multi_reduction <add>, %352, %cst_307 [0] : vector<24x128xf32> to vector<128xf32>
    %354 = vector.shape_cast %353 : vector<128xf32> to vector<1x128xf32>
    %cst_308 = arith.constant dense<0.000000e+00> : vector<1xf32>
    %355 = vector.multi_reduction <add>, %354, %cst_308 [1] : vector<1x128xf32> to vector<1xf32>
    %356 = vector.shape_cast %355 : vector<1xf32> to vector<1x1xf32>
    %c1_i32 = arith.constant 1 : i32
    %357 = vector.broadcast %c1_i32 : i32 to vector<1x128xi32>
    %358 = arith.cmpi eq, %334, %357 : vector<1x128xi32>
    %cst_309 = arith.constant 0.000000e+00 : f32
    %359 = vector.shape_cast %356 : vector<1x1xf32> to vector<1x1xf32>
    %360 = vector.broadcast %359 : vector<1x1xf32> to vector<1x128xf32>
    %361 = vector.broadcast %cst_309 : f32 to vector<1x128xf32>
    %362 = arith.select %358, %360, %361 : vector<1x128xi1>, vector<1x128xf32>
    %363 = arith.addf %349, %362 : vector<1x128xf32>
    %c0_310 = arith.constant 0 : index
    %c0_311 = arith.constant 0 : index
    %364 = vector.load %arg8[%c0_310, %c0_311] : memref<8x128xf32, #tpu.memory_space<vmem>>, vector<1x128xf32>
    tpu.vector_store %arg8[%c0_310, %c0_311], %363 {strides = array<i32>} : memref<8x128xf32, #tpu.memory_space<vmem>>, vector<1x128xf32>,
    return
  }
  func.func @transform_0(%arg0: i32) -> (i32, i32) {
    %c0_i32 = arith.constant 0 : i32
    %c0_i32_0 = arith.constant 0 : i32
    return %arg0, %c0_i32 : i32, i32
  }
  func.func @transform_1(%arg0: i32) -> (i32, i32) {
    %c0_i32 = arith.constant 0 : i32
    %c0_i32_0 = arith.constant 0 : i32
    %c0_i32_1 = arith.constant 0 : i32
    return %c0_i32, %c0_i32_0 : i32, i32
  }
  func.func @transform_2(%arg0: i32) -> (i32, i32, i32) {
    %c0_i32 = arith.constant 0 : i32
    %c0_i32_0 = arith.constant 0 : i32
    %c0_i32_1 = arith.constant 0 : i32
    %c0_i32_2 = arith.constant 0 : i32
    return %c0_i32, %c0_i32_0, %c0_i32_1 : i32, i32, i32
  }
  func.func @transform_3(%arg0: i32) -> (i32, i32, i32) {
    %c0_i32 = arith.constant 0 : i32
    %c0_i32_0 = arith.constant 0 : i32
    %c0_i32_1 = arith.constant 0 : i32
    %c0_i32_2 = arith.constant 0 : i32
    return %c0_i32, %c0_i32_0, %c0_i32_1 : i32, i32, i32
  }
  func.func @transform_4(%arg0: i32) -> (i32, i32, i32) {
    %c0_i32 = arith.constant 0 : i32
    %c0_i32_0 = arith.constant 0 : i32
    %c0_i32_1 = arith.constant 0 : i32
    %c0_i32_2 = arith.constant 0 : i32
    return %c0_i32, %c0_i32_0, %c0_i32_1 : i32, i32, i32
  }
  func.func @transform_5(%arg0: i32) -> (i32, i32, i32) {
    %c0_i32 = arith.constant 0 : i32
    %c0_i32_0 = arith.constant 0 : i32
    %c0_i32_1 = arith.constant 0 : i32
    %c0_i32_2 = arith.constant 0 : i32
    return %c0_i32, %c0_i32_0, %c0_i32_1 : i32, i32, i32
  }
  func.func @transform_6(%arg0: i32) -> (i32, i32) {
    %c0_i32 = arith.constant 0 : i32
    %c0_i32_0 = arith.constant 0 : i32
    return %arg0, %c0_i32 : i32, i32
  }
  func.func @transform_7(%arg0: i32) -> (i32, i32) {
    %c0_i32 = arith.constant 0 : i32
    %c0_i32_0 = arith.constant 0 : i32
    return %arg0, %c0_i32 : i32, i32
  }
}

</mosaic_0001>

<llo_original>
// kernel: tpu_custom_call.1
$region0: #{tpu_custom_call.1}
  #allocation0 [shape = 'u32[]', space=smem, size = 0x4, offset = 0x4, fixed_abs, tag = 'smem constant byte address 0x4 - core index']
  #allocation1 [shape = 'u32[144,128]{1,0:T(1,128)}', space=vmem, size = 0x12000, scoped, tag = 'internal scratch']
  #allocation2 [shape = 'f32[72,128]{1,0:T(8,128)}', space=vmem, size = 0x9000, scoped, tag = 'scratch operand']
  #allocation3 [shape = 'f32[128,128]{1,0:T(8,128)}', space=vmem, size = 0x10000, scoped, tag = 'scratch operand']
  #allocation4 [shape = 'f32[40,128]{1,0:T(8,128)}', space=vmem, size = 0x5000, scoped, tag = 'scratch operand']
  %s0 = inlined_call_operand.vmem [shape: f32[704,3], index: 0, kind: input, shape index: {}]
  %s1 = inlined_call_operand.vmem [shape: f32[8,128], index: 1, kind: input, shape index: {}]
  %s2 = inlined_call_operand.vmem [shape: bf16[16,3,128], index: 2, kind: input, shape index: {}]
  %s3 = inlined_call_operand.hbm [shape: bf16[16,128,128], index: 3, kind: input, shape index: {}]
  %s4 = inlined_call_operand.vmem [shape: bf16[9,128,128], index: 4, kind: input, shape index: {}]
  %s5 = inlined_call_operand.vmem [shape: f32[2,24,128], index: 5, kind: input, shape index: {}]
  %s6 = inlined_call_operand.hbm [shape: f32[48,128], index: 6, kind: output, shape index: {0}]
  %s7 = inlined_call_operand.hbm [shape: f32[16,128], index: 7, kind: output, shape index: {1}]
  %8 = xla_tuple %s6, %s7
  %s9 = sld [smem:[#allocation0]]
  $region69: #{tpu_custom_call.1} parent=0
    _
  %s11 = ssub.s32 1, %s9
  %s12 = scalar_select 0, %s11, %s9
  $region1: #{tpu_custom_call.1} parent=0
    #allocation5 [shape = 'u8[524288]{0}', space=vmem, size = 0x80000, scoped, tag = 'input window, operand 3, single buffered']
    #allocation6 [shape = 's32[2]{0}', space=sflag, size = 0x8, scoped, tag = 'scoped memory for tpu_custom_call.1']
    #allocation7 [shape = 's32[2]{0}', space=sflag, size = 0x8, scoped, tag = 'scoped memory for tpu_custom_call.1']
    #allocation8 [shape = 'u8[24576]{0}', space=vmem, size = 0x6000, scoped, tag = 'output window, operand 0']
    #allocation9 [shape = 'u8[8192]{0}', space=vmem, size = 0x2000, scoped, tag = 'output window, operand 1']
    #allocation10 [shape = 's32[2]{0}', space=sflag, size = 0x8, scoped, tag = 'scoped memory for tpu_custom_call.1']
    %13 = vsyncpa [#allocation6], 0
    %14 = vsyncpa [#allocation7], 0
    %s15 = scalar_lea.sflag [#allocation7], 1
    %16 = vsyncpa %s15, 0
    %17 = vsyncpa [#allocation10], 0
    %s18 = scalar_lea.sflag [#allocation10], 1
    %19 = vsyncpa %s18, 0
    loop: start=0, step=1, limit=4
    $region2: #{tpu_custom_call.1} parent=1 // loop_pre_header
      _
    $region3: #{tpu_custom_call.1} parent=1 // loop_header
      %s21 = sphi 0, %s25
      %p22 = scmp.ge.s32.totalorder %s21, 4
      %s31 = sphi 0, %s33
      %s34 = sphi 0, %s31
      %s35 = sphi 0, %s34
      %s51 = sphi 0, %s35
      %s55 = sphi 0, %s55
      %s57 = sphi 0, %s55
      %s58 = sphi 0, %s57
      %s72 = sphi 0, %s58
      %s76 = sphi 0, %s76
      %s78 = sphi 0, %s76
      %s79 = sphi 0, %s78
      %s93 = sphi 0, %s79
      %s97 = sphi 0, %s97
      %s99 = sphi 0, %s97
      %s100 = sphi 0, %s99
      %s114 = sphi 0, %s100
      %s118 = sphi 0, %s118
      %s120 = sphi 0, %s118
      %s121 = sphi 0, %s120
      %s135 = sphi 0, %s121
      %s139 = sphi 0, %s139
      %s141 = sphi 0, %s139
      %s142 = sphi 0, %s141
      %s156 = sphi 0, %s142
      %s162 = sphi 0, %s164
      %s165 = sphi 0, %s162
      %s166 = sphi 0, %s165
      %s182 = sphi 0, %s166
      %s188 = sphi 0, %s190
      %s191 = sphi 0, %s188
      %s192 = sphi 0, %s191
      %s208 = sphi 0, %s192
    $region4: #{tpu_custom_call.1} parent=1 // loop_header_branch
      %24 = sbr.rel (%p22) target = $region8
    $region5: #{tpu_custom_call.1} parent=1 // loop_body
      %s26 = ssub.s32 %s21, 1
      %s27 = ssub.s32 %s21, 2
      %s28 = sadd.s32 %s21, 1
      %s29 = ssub.s32 %s21, %s28
      %p30 = scmp.eq.s32.totalorder %s29, 0
      %s32 = sadd.s32 %s31, 1
      %s33 = scalar_select %p30, %s31, %s32
      %p36 = pneg %p30
      %p37 = scmp.eq.s32.totalorder %s21, 1
      %p38 = por %p36, %p37
      %p39 = scmp.ne.s32.totalorder %s31, %s34
      %p40 = scmp.eq.s32.totalorder %s21, 0
      %p41 = por %p39, %p40
      %p42 = scmp.ne.s32.totalorder %s31, %s34
      %p43 = scmp.eq.s32.totalorder %s26, 1
      %p44 = por %p42, %p43
      %p45 = scmp.ne.s32.totalorder %s34, %s35
      %p46 = scmp.eq.s32.totalorder %s26, 0
      %p47 = por %p45, %p46
      %p48 = scmp.ne.s32.totalorder %s34, %s35
      %p49 = scmp.eq.s32.totalorder %s27, 1
      %p50 = por %p48, %p49
      %p52 = scmp.ne.s32.totalorder %s35, %s51
      %p53 = scmp.eq.s32.totalorder %s27, 0
      %p54 = por %p52, %p53
      %s56 = sadd.s32 %s55, 1
      %p59 = scmp.eq.s32.totalorder %s21, 1
      %p60 = scmp.ne.s32.totalorder %s55, %s57
      %p61 = scmp.eq.s32.totalorder %s21, 0
      %p62 = por %p60, %p61
      %p63 = scmp.ne.s32.totalorder %s55, %s57
      %p64 = scmp.eq.s32.totalorder %s26, 1
      %p65 = por %p63, %p64
      %p66 = scmp.ne.s32.totalorder %s57, %s58
      %p67 = scmp.eq.s32.totalorder %s26, 0
      %p68 = por %p66, %p67
      %p69 = scmp.ne.s32.totalorder %s57, %s58
      %p70 = scmp.eq.s32.totalorder %s27, 1
      %p71 = por %p69, %p70
      %p73 = scmp.ne.s32.totalorder %s58, %s72
      %p74 = scmp.eq.s32.totalorder %s27, 0
      %p75 = por %p73, %p74
      %s77 = sadd.s32 %s76, 1
      %p80 = scmp.eq.s32.totalorder %s21, 1
      %p81 = scmp.ne.s32.totalorder %s76, %s78
      %p82 = scmp.eq.s32.totalorder %s21, 0
      %p83 = por %p81, %p82
      %p84 = scmp.ne.s32.totalorder %s76, %s78
      %p85 = scmp.eq.s32.totalorder %s26, 1
      %p86 = por %p84, %p85
      %p87 = scmp.ne.s32.totalorder %s78, %s79
      %p88 = scmp.eq.s32.totalorder %s26, 0
      %p89 = por %p87, %p88
      %p90 = scmp.ne.s32.totalorder %s78, %s79
      %p91 = scmp.eq.s32.totalorder %s27, 1
      %p92 = por %p90, %p91
      %p94 = scmp.ne.s32.totalorder %s79, %s93
      %p95 = scmp.eq.s32.totalorder %s27, 0
      %p96 = por %p94, %p95
      %s98 = sadd.s32 %s97, 1
      %p101 = scmp.eq.s32.totalorder %s21, 1
      %p102 = scmp.ne.s32.totalorder %s97, %s99
      %p103 = scmp.eq.s32.totalorder %s21, 0
      %p104 = por %p102, %p103
      %p105 = scmp.ne.s32.totalorder %s97, %s99
      %p106 = scmp.eq.s32.totalorder %s26, 1
      %p107 = por %p105, %p106
      %p108 = scmp.ne.s32.totalorder %s99, %s100
      %p109 = scmp.eq.s32.totalorder %s26, 0
      %p110 = por %p108, %p109
      %p111 = scmp.ne.s32.totalorder %s99, %s100
      %p112 = scmp.eq.s32.totalorder %s27, 1
      %p113 = por %p111, %p112
      %p115 = scmp.ne.s32.totalorder %s100, %s114
      %p116 = scmp.eq.s32.totalorder %s27, 0
      %p117 = por %p115, %p116
      %s119 = sadd.s32 %s118, 1
      %p122 = scmp.eq.s32.totalorder %s21, 1
      %p123 = scmp.ne.s32.totalorder %s118, %s120
      %p124 = scmp.eq.s32.totalorder %s21, 0
      %p125 = por %p123, %p124
      %p126 = scmp.ne.s32.totalorder %s118, %s120
      %p127 = scmp.eq.s32.totalorder %s26, 1
      %p128 = por %p126, %p127
      %p129 = scmp.ne.s32.totalorder %s120, %s121
      %p130 = scmp.eq.s32.totalorder %s26, 0
      %p131 = por %p129, %p130
      %p132 = scmp.ne.s32.totalorder %s120, %s121
      %p133 = scmp.eq.s32.totalorder %s27, 1
      %p134 = por %p132, %p133
      %p136 = scmp.ne.s32.totalorder %s121, %s135
      %p137 = scmp.eq.s32.totalorder %s27, 0
      %p138 = por %p136, %p137
      %s140 = sadd.s32 %s139, 1
      %p143 = scmp.eq.s32.totalorder %s21, 1
      %p144 = scmp.ne.s32.totalorder %s139, %s141
      %p145 = scmp.eq.s32.totalorder %s21, 0
      %p146 = por %p144, %p145
      %p147 = scmp.ne.s32.totalorder %s139, %s141
      %p148 = scmp.eq.s32.totalorder %s26, 1
      %p149 = por %p147, %p148
      %p150 = scmp.ne.s32.totalorder %s141, %s142
      %p151 = scmp.eq.s32.totalorder %s26, 0
      %p152 = por %p150, %p151
      %p153 = scmp.ne.s32.totalorder %s141, %s142
      %p154 = scmp.eq.s32.totalorder %s27, 1
      %p155 = por %p153, %p154
      %p157 = scmp.ne.s32.totalorder %s142, %s156
      %p158 = scmp.eq.s32.totalorder %s27, 0
      %p159 = por %p157, %p158
      %s160 = ssub.s32 %s21, %s28
      %p161 = scmp.eq.s32.totalorder %s160, 0
      %s163 = sadd.s32 %s162, 1
      %s164 = scalar_select %p161, %s162, %s163
      %p167 = pneg %p161
      %p168 = scmp.eq.s32.totalorder %s21, 1
      %p169 = por %p167, %p168
      %p170 = scmp.ne.s32.totalorder %s162, %s165
      %p171 = scmp.eq.s32.totalorder %s21, 0
      %p172 = por %p170, %p171
      %p173 = scmp.ne.s32.totalorder %s162, %s165
      %p174 = scmp.eq.s32.totalorder %s26, 1
      %p175 = por %p173, %p174
      %p176 = scmp.ne.s32.totalorder %s165, %s166
      %p177 = scmp.eq.s32.totalorder %s26, 0
      %p178 = por %p176, %p177
      %p179 = scmp.ne.s32.totalorder %s165, %s166
      %p180 = scmp.eq.s32.totalorder %s27, 1
      %p181 = por %p179, %p180
      %p183 = scmp.ne.s32.totalorder %s166, %s182
      %p184 = scmp.eq.s32.totalorder %s27, 0
      %p185 = por %p183, %p184
      %s186 = ssub.s32 %s21, %s28
      %p187 = scmp.eq.s32.totalorder %s186, 0
      %s189 = sadd.s32 %s188, 1
      %s190 = scalar_select %p187, %s188, %s189
      %p193 = pneg %p187
      %p194 = scmp.eq.s32.totalorder %s21, 1
      %p195 = por %p193, %p194
      %p196 = scmp.ne.s32.totalorder %s188, %s191
      %p197 = scmp.eq.s32.totalorder %s21, 0
      %p198 = por %p196, %p197
      %p199 = scmp.ne.s32.totalorder %s188, %s191
      %p200 = scmp.eq.s32.totalorder %s26, 1
      %p201 = por %p199, %p200
      %p202 = scmp.ne.s32.totalorder %s191, %s192
      %p203 = scmp.eq.s32.totalorder %s26, 0
      %p204 = por %p202, %p203
      %p205 = scmp.ne.s32.totalorder %s191, %s192
      %p206 = scmp.eq.s32.totalorder %s27, 1
      %p207 = por %p205, %p206
      %p209 = scmp.ne.s32.totalorder %s192, %s208
      %p210 = scmp.eq.s32.totalorder %s27, 0
      %p211 = por %p209, %p210
      %p212 = scmp.le.s32.totalorder 1, %s21
      %p213 = scmp.lt.s32.totalorder %s21, 3
      %p214 = pnand %p212, %p213
      %p215 = pneg %p214
      // Predicated region
      $region9: #{tpu_custom_call.1} parent=5 // pred_check
        _
      $region10: #{tpu_custom_call.1} parent=5 // pred_check_branch
        %217 = sbr.rel (%p214) target = $region12
      $region11: #{tpu_custom_call.1} parent=5 // pred_region
        %s218 = ssub.s32 %s21, 1
        // Predicated region
        $region13: #{tpu_custom_call.1} parent=11 // pred_check
          %p219 = pneg %p68
        $region14: #{tpu_custom_call.1} parent=11 // pred_check_branch
          %221 = sbr.rel (%p219) target = $region16
        $region15: #{tpu_custom_call.1} parent=11 // pred_region
          _
        $region16: #{tpu_custom_call.1} parent=11 // pred_fallthru
          _
        // Predicated region
        $region17: #{tpu_custom_call.1} parent=11 // pred_check
          %p222 = pneg %p89
        $region18: #{tpu_custom_call.1} parent=11 // pred_check_branch
          %224 = sbr.rel (%p222) target = $region20
        $region19: #{tpu_custom_call.1} parent=11 // pred_region
          _
        $region20: #{tpu_custom_call.1} parent=11 // pred_fallthru
          _
        // Predicated region
        $region21: #{tpu_custom_call.1} parent=11 // pred_check
          %p225 = pneg %p110
        $region22: #{tpu_custom_call.1} parent=11 // pred_check_branch
          %227 = sbr.rel (%p225) target = $region24
        $region23: #{tpu_custom_call.1} parent=11 // pred_region
          %s229 = ssub.s32 16384, 16384
          %230 = vsyncadd [#allocation6], %s229
          %s231 = sshll.u32 [#allocation5], 4
          %s232 = int_to_ptr.vmem [resolvable:$true] %s231
          %237 = dma.hbm_to_vmem [thread:$0]  %s3, 16384, %s232, [#allocation6], 64, 64, 4
        $region24: #{tpu_custom_call.1} parent=11 // pred_fallthru
          _
        // Predicated region
        $region25: #{tpu_custom_call.1} parent=11 // pred_check
          %p238 = pneg %p131
        $region26: #{tpu_custom_call.1} parent=11 // pred_check_branch
          %240 = sbr.rel (%p238) target = $region28
        $region27: #{tpu_custom_call.1} parent=11 // pred_region
          _
        $region28: #{tpu_custom_call.1} parent=11 // pred_fallthru
          _
        // Predicated region
        $region29: #{tpu_custom_call.1} parent=11 // pred_check
          %p241 = pneg %p152
        $region30: #{tpu_custom_call.1} parent=11 // pred_check_branch
          %243 = sbr.rel (%p241) target = $region32
        $region31: #{tpu_custom_call.1} parent=11 // pred_region
          _
        $region32: #{tpu_custom_call.1} parent=11 // pred_fallthru
          _
      $region12: #{tpu_custom_call.1} parent=5 // pred_fallthru
        _
      %p244 = scmp.lt.s32.totalorder %s21, 2
      // Predicated region
      $region33: #{tpu_custom_call.1} parent=5 // pred_check
        %p245 = pneg %p244
      $region34: #{tpu_custom_call.1} parent=5 // pred_check_branch
        %247 = sbr.rel (%p245) target = $region36
      $region35: #{tpu_custom_call.1} parent=5 // pred_region
        // Predicated region
        $region37: #{tpu_custom_call.1} parent=35 // pred_check
          %p248 = pneg %p41
        $region38: #{tpu_custom_call.1} parent=35 // pred_check_branch
          %250 = sbr.rel (%p248) target = $region40
        $region39: #{tpu_custom_call.1} parent=35 // pred_region
          %s251 = smul.u32 44, %s21
          %p252 = scmp.lt.s32.totalorder %s251, 87
          %s253 = scalar_select %p252, %s251, 87
          %s254 = smul.addr %s253, 8
          %s255 = scalar_lea.vmem %s0, %s254
          %s256 = smul.u32 44, %s21
        $region40: #{tpu_custom_call.1} parent=35 // pred_fallthru
          _
      $region36: #{tpu_custom_call.1} parent=5 // pred_fallthru
        _
      %p257 = scmp.le.s32.totalorder 1, %s21
      %p258 = scmp.lt.s32.totalorder %s21, 3
      %p259 = pnand %p257, %p258
      %p260 = pneg %p259
      // Predicated region
      $region41: #{tpu_custom_call.1} parent=5 // pred_check
        _
      $region42: #{tpu_custom_call.1} parent=5 // pred_check_branch
        %262 = sbr.rel (%p259) target = $region44
      $region43: #{tpu_custom_call.1} parent=5 // pred_region
        %s263 = ssub.s32 %s21, 1
        // Predicated region
        $region45: #{tpu_custom_call.1} parent=43 // pred_check
          %p264 = pneg %p110
        $region46: #{tpu_custom_call.1} parent=43 // pred_check_branch
          %266 = sbr.rel (%p264) target = $region48
        $region47: #{tpu_custom_call.1} parent=43 // pred_region
          %267 = dma.done [#allocation6], 16384
        $region48: #{tpu_custom_call.1} parent=43 // pred_fallthru
          _
        %s268 = smul.u32 44, %s26
        %p269 = scmp.lt.s32.totalorder %s268, 87
        %s270 = scalar_select %p269, %s268, 87
        %s271 = smul.addr %s270, 8
        %s272 = scalar_lea.vmem %s0, %s271
        %p273 = pneg %p47
        %p274 = pneg %p44
        %p275 = pneg %p68
        %p276 = pneg %p65
        %p277 = pneg %p89
        %p278 = pneg %p86
        %p279 = pneg %p110
        %p280 = pneg %p107
        %p281 = pneg %p131
        %p282 = pneg %p128
        %p283 = pneg %p152
        %p284 = pneg %p149
        %p285 = pneg %p178
        %p286 = pneg %p175
        %s287 = sand.u32 %s165, 1
        %s288 = scalar_lea.sflag [#allocation7], %s287
        %s289 = sand.u32 %s165, 1
        %s290 = smul.addr %s289, 24
        %s291 = scalar_lea.vmem [#allocation8], %s290
        %p292 = pneg %p204
        %p293 = pneg %p201
        %s294 = sand.u32 %s191, 1
        %s295 = scalar_lea.sflag [#allocation10], %s294
        %s296 = sand.u32 %s191, 1
        %s297 = smul.addr %s296, 8
        %s298 = scalar_lea.vmem [#allocation9], %s297
        %s299 = smul.u32 44, %s26
        %p300 = scmp.lt.s32.totalorder %s299, 87
        %s301 = scalar_select %p300, %s299, 87
        %s302 = smul.addr %s301, 8
        %s303 = scalar_lea.vmem %s0, %s302
        %s304 = smul.u32 44, %s26
        %s305 = smul.u32 3, %s26
        %307 = vst [vmem:[#allocation3] sm:$0x1f] 0.0
        %308 = vst [vmem:[#allocation3 + $0x20] sm:$0x1f] 0.0
        %309 = vst [vmem:[#allocation3 + $0x54] sm:$0x1f] 0.0
        %310 = vst [vmem:[#allocation3 + $0x74] sm:$0x1f] 0.0
        %311 = vst [vmem:[#allocation4] sm:$0x3f] 0.0
        %312 = vst [vmem:[#allocation4 + $0x1e] sm:$0xff] 0.0
        %313 = vst [vmem:[#allocation4 + $0x26] sm:$0x3] 0.0
        %v314 = vld [vmem:[%s303] sm:$0xff]
        %v315 = vld [vmem:[%s303 + $0x8] sm:$0xff]
        %v316 = vld [vmem:[%s303 + $0x10] sm:$0xff]
        %v317 = vld [vmem:[%s303 + $0x18] sm:$0xff]
        %v318 = vld [vmem:[%s303 + $0x20] sm:$0xff]
        %v319 = vld [vmem:[%s303 + $0x28] sm:$0xff]
        %v320 = vld [vmem:[%s303 + $0x30] sm:$0xff]
        %v321 = vld [vmem:[%s303 + $0x38] sm:$0xff]
        %v322 = vld [vmem:[%s303 + $0x40] sm:$0x7f]
        %v323 = vpack.c.bf16 %v315, %v314
        %v324 = vpack.c.bf16 %v317, %v316
        %v325 = vpack.c.bf16 %v319, %v318
        %v326 = vpack.c.bf16 %v321, %v320
        %v327 = vpack.c.bf16 %v322, %v322
        %v328 = vld [vmem:[%s2] sm:$0x3]
        %v329 = vld [vmem:[%s303 + $0x58] sm:$0xff]
        %v330 = vld [vmem:[%s303 + $0x60] sm:$0xff]
        %v331 = vld [vmem:[%s303 + $0x68] sm:$0xff]
        %v332 = vld [vmem:[%s303 + $0x70] sm:$0xff]
        %v333 = vld [vmem:[%s303 + $0x78] sm:$0xff]
        %v334 = vld [vmem:[%s303 + $0x80] sm:$0xff]
        %v335 = vld [vmem:[%s303 + $0x88] sm:$0xff]
        %v336 = vld [vmem:[%s303 + $0x90] sm:$0xff]
        %v337 = vld [vmem:[%s303 + $0x98] sm:$0x7f]
        %v338 = vpack.c.bf16 %v330, %v329
        %v339 = vpack.c.bf16 %v332, %v331
        %v340 = vpack.c.bf16 %v334, %v333
        %v341 = vpack.c.bf16 %v336, %v335
        %v342 = vpack.c.bf16 %v337, %v337
        %s343 = scalar_lea.vmem %s2, 2
        %v344 = vld [vmem:[%s343] sm:$0x3]
        %vm345 = vcmask 23552
        %v347 = vsel %vm345, %v338, 0
        %v350 = vsel %vm345, %v339, 0
        %v353 = vsel %vm345, %v340, 0
        %v356 = vsel %vm345, %v341, 0
        %v359 = vsel %vm345, %v342, 0
        %vm361 = vcmask 1040384
        %vm362 = vcmask 1041408
        %v363 = vsel %vm361, 4294967295, 65535
        %v364 = vsel %vm362, %v363, 0
        %v366 = vand.u32 %v344, %v364
        %368 = vmatprep.subr.bf16.mxu0 0
        %369 = vmatpush1.bf16.msra.mxu0 0
        %370 = vmatprep.subr.bf16.mxu0 0
        %371 = vmatpush1.bf16.msra.mxu0 0
        %372 = vmatprep.subr.bf16.mxu0 0
        %373 = vmatpush1.bf16.msra.mxu0 0
        %374 = vmatprep.subr.bf16.mxu0 0
        %375 = vmatpush1.bf16.msra.mxu0 0
        %376 = vmatprep.subr.bf16.mxu0 0
        %377 = vmatpush1.bf16.msra.mxu0 0
        %378 = vmatprep.subr.bf16.mxu0 0
        %379 = vmatpush1.bf16.msra.mxu0 0
        %380 = vmatprep.subr.bf16.mxu0 0
        %381 = vmatpush1.bf16.msra.mxu0 0
        %382 = vmatprep.subr.bf16.mxu0 0
        %383 = vmatpush1.bf16.msra.mxu0 %v366
        %384 = vmatprep.subr.bf16.mxu0 0
        %385 = vmatpush2.bf16.msra.mxu0 0
        %386 = vmatprep.subr.bf16.mxu0 0
        %387 = vmatpush2.bf16.msra.mxu0 0
        %388 = vmatprep.subr.bf16.mxu0 0
        %389 = vmatpush2.bf16.msra.mxu0 0
        %390 = vmatprep.subr.bf16.mxu0 0
        %391 = vmatpush2.bf16.msra.mxu0 0
        %392 = vmatprep.subr.bf16.mxu0 0
        %393 = vmatpush2.bf16.msra.mxu0 0
        %394 = vmatprep.subr.bf16.mxu0 0
        %395 = vmatpush2.bf16.msra.mxu0 0
        %396 = vmatprep.subr.bf16.mxu0 0
        %397 = vmatpush2.bf16.msra.mxu0 0
        %398 = vmatprep.subr.bf16.mxu0 0
        %399 = vmatpush2.bf16.msra.mxu0 0
        %400 = vmatprep.mubr.bf16.mxu0 0
        %401 = vmatmul.mubr.bf16.gmra.mxu0 %v347
        %v402 = vpop.f32.mrf.mxu0
        %v403 = vadd.f32 0.0, %v402
        %v404 = vpop.f32.mrf.mxu0
        %v405 = vpop.f32.mrf.mxu0
        %v406 = vadd.f32 0.0, %v405
        %v407 = vpop.f32.mrf.mxu0
        %408 = vmatprep.mubr.bf16.mxu0 0
        %409 = vmatmul.mubr.bf16.gmra.mxu0 %v350
        %v410 = vpop.f32.mrf.mxu0
        %v411 = vadd.f32 0.0, %v410
        %v412 = vpop.f32.mrf.mxu0
        %v413 = vpop.f32.mrf.mxu0
        %v414 = vadd.f32 0.0, %v413
        %v415 = vpop.f32.mrf.mxu0
        %416 = vmatprep.mubr.bf16.mxu0 0
        %417 = vmatmul.mubr.bf16.gmra.mxu0 %v353
        %v418 = vpop.f32.mrf.mxu0
        %v419 = vadd.f32 0.0, %v418
        %v420 = vpop.f32.mrf.mxu0
        %v421 = vpop.f32.mrf.mxu0
        %v422 = vadd.f32 0.0, %v421
        %v423 = vpop.f32.mrf.mxu0
        %424 = vmatprep.mubr.bf16.mxu0 0
        %425 = vmatmul.mubr.bf16.gmra.mxu0 %v356
        %v426 = vpop.f32.mrf.mxu0
        %v427 = vadd.f32 0.0, %v426
        %v428 = vpop.f32.mrf.mxu0
        %v429 = vpop.f32.mrf.mxu0
        %v430 = vadd.f32 0.0, %v429
        %v431 = vpop.f32.mrf.mxu0
        %432 = vmatprep.mubr.bf16.mxu0 0
        %433 = vmatmul.mubr.bf16.gmra.mxu0 %v359
        %v434 = vpop.f32.mrf.mxu0
        %v435 = vadd.f32 0.0, %v434
        %v436 = vpop.f32.mrf.mxu0
        %v437 = vpop.f32.mrf.mxu0
        %v438 = vpop.f32.mrf.mxu0
        %439 = vdwg.mxu0
        %v441 = vsel %vm345, %v323, 0
        %v444 = vsel %vm345, %v324, 0
        %v447 = vsel %vm345, %v325, 0
        %v450 = vsel %vm345, %v326, 0
        %v453 = vsel %vm345, %v327, 0
        %v456 = vand.u32 %v328, %v364
        %458 = vmatprep.subr.bf16.mxu0 0
        %459 = vmatpush1.bf16.msra.mxu0 0
        %460 = vmatprep.subr.bf16.mxu0 0
        %461 = vmatpush1.bf16.msra.mxu0 0
        %462 = vmatprep.subr.bf16.mxu0 0
        %463 = vmatpush1.bf16.msra.mxu0 0
        %464 = vmatprep.subr.bf16.mxu0 0
        %465 = vmatpush1.bf16.msra.mxu0 0
        %466 = vmatprep.subr.bf16.mxu0 0
        %467 = vmatpush1.bf16.msra.mxu0 0
        %468 = vmatprep.subr.bf16.mxu0 0
        %469 = vmatpush1.bf16.msra.mxu0 0
        %470 = vmatprep.subr.bf16.mxu0 0
        %471 = vmatpush1.bf16.msra.mxu0 0
        %472 = vmatprep.subr.bf16.mxu0 0
        %473 = vmatpush1.bf16.msra.mxu0 %v456
        %474 = vmatprep.subr.bf16.mxu0 0
        %475 = vmatpush2.bf16.msra.mxu0 0
        %476 = vmatprep.subr.bf16.mxu0 0
        %477 = vmatpush2.bf16.msra.mxu0 0
        %478 = vmatprep.subr.bf16.mxu0 0
        %479 = vmatpush2.bf16.msra.mxu0 0
        %480 = vmatprep.subr.bf16.mxu0 0
        %481 = vmatpush2.bf16.msra.mxu0 0
        %482 = vmatprep.subr.bf16.mxu0 0
        %483 = vmatpush2.bf16.msra.mxu0 0
        %484 = vmatprep.subr.bf16.mxu0 0
        %485 = vmatpush2.bf16.msra.mxu0 0
        %486 = vmatprep.subr.bf16.mxu0 0
        %487 = vmatpush2.bf16.msra.mxu0 0
        %488 = vmatprep.subr.bf16.mxu0 0
        %489 = vmatpush2.bf16.msra.mxu0 0
        %490 = vmatprep.mubr.bf16.mxu0 0
        %491 = vmatmul.mubr.bf16.gmra.mxu0 %v441
        %v492 = vpop.f32.mrf.mxu0
        %v493 = vadd.f32 %v403, %v492
        %v494 = vpop.f32.mrf.mxu0
        %v495 = vpop.f32.mrf.mxu0
        %v496 = vadd.f32 %v406, %v495
        %v497 = vpop.f32.mrf.mxu0
        %498 = vmatprep.mubr.bf16.mxu0 0
        %499 = vmatmul.mubr.bf16.gmra.mxu0 %v444
        %v500 = vpop.f32.mrf.mxu0
        %v501 = vadd.f32 %v411, %v500
        %v502 = vpop.f32.mrf.mxu0
        %v503 = vpop.f32.mrf.mxu0
        %v504 = vadd.f32 %v414, %v503
        %v505 = vpop.f32.mrf.mxu0
        %506 = vmatprep.mubr.bf16.mxu0 0
        %507 = vmatmul.mubr.bf16.gmra.mxu0 %v447
        %v508 = vpop.f32.mrf.mxu0
        %v509 = vadd.f32 %v419, %v508
        %v510 = vpop.f32.mrf.mxu0
        %v511 = vpop.f32.mrf.mxu0
        %v512 = vadd.f32 %v422, %v511
        %v513 = vpop.f32.mrf.mxu0
        %514 = vmatprep.mubr.bf16.mxu0 0
        %515 = vmatmul.mubr.bf16.gmra.mxu0 %v450
        %v516 = vpop.f32.mrf.mxu0
        %v517 = vadd.f32 %v427, %v516
        %v518 = vpop.f32.mrf.mxu0
        %v519 = vpop.f32.mrf.mxu0
        %v520 = vadd.f32 %v430, %v519
        %v521 = vpop.f32.mrf.mxu0
        %522 = vmatprep.mubr.bf16.mxu0 0
        %523 = vmatmul.mubr.bf16.gmra.mxu0 %v453
        %v524 = vpop.f32.mrf.mxu0
        %v525 = vadd.f32 %v435, %v524
        %v526 = vpop.f32.mrf.mxu0
        %v527 = vpop.f32.mrf.mxu0
        %v528 = vpop.f32.mrf.mxu0
        %529 = vdwg.mxu0
        %v530 = vld [vmem:[%s303 + $0x1] sm:$0xff]
        %v531 = vld [vmem:[%s303 + $0x9] sm:$0xff]
        %v532 = vld [vmem:[%s303 + $0x11] sm:$0xff]
        %v533 = vld [vmem:[%s303 + $0x19] sm:$0xff]
        %v534 = vld [vmem:[%s303 + $0x21] sm:$0xff]
        %v535 = vld [vmem:[%s303 + $0x29] sm:$0xff]
        %v536 = vld [vmem:[%s303 + $0x31] sm:$0xff]
        %v537 = vld [vmem:[%s303 + $0x39] sm:$0xff]
        %v538 = vld [vmem:[%s303 + $0x41] sm:$0x7f]
        %v539 = vpack.c.bf16 %v531, %v530
        %v540 = vpack.c.bf16 %v533, %v532
        %v541 = vpack.c.bf16 %v535, %v534
        %v542 = vpack.c.bf16 %v537, %v536
        %v543 = vpack.c.bf16 %v538, %v538
        %s544 = scalar_lea.vmem %s2, 4
        %v545 = vld [vmem:[%s544] sm:$0x3]
        %v547 = vsel %vm345, %v539, 0
        %v550 = vsel %vm345, %v540, 0
        %v553 = vsel %vm345, %v541, 0
        %v556 = vsel %vm345, %v542, 0
        %v559 = vsel %vm345, %v543, 0
        %v562 = vand.u32 %v545, %v364
        %564 = vmatprep.subr.bf16.mxu0 0
        %565 = vmatpush1.bf16.msra.mxu0 0
        %566 = vmatprep.subr.bf16.mxu0 0
        %567 = vmatpush1.bf16.msra.mxu0 0
        %568 = vmatprep.subr.bf16.mxu0 0
        %569 = vmatpush1.bf16.msra.mxu0 0
        %570 = vmatprep.subr.bf16.mxu0 0
        %571 = vmatpush1.bf16.msra.mxu0 0
        %572 = vmatprep.subr.bf16.mxu0 0
        %573 = vmatpush1.bf16.msra.mxu0 0
        %574 = vmatprep.subr.bf16.mxu0 0
        %575 = vmatpush1.bf16.msra.mxu0 0
        %576 = vmatprep.subr.bf16.mxu0 0
        %577 = vmatpush1.bf16.msra.mxu0 0
        %578 = vmatprep.subr.bf16.mxu0 0
        %579 = vmatpush1.bf16.msra.mxu0 %v562
        %580 = vmatprep.subr.bf16.mxu0 0
        %581 = vmatpush2.bf16.msra.mxu0 0
        %582 = vmatprep.subr.bf16.mxu0 0
        %583 = vmatpush2.bf16.msra.mxu0 0
        %584 = vmatprep.subr.bf16.mxu0 0
        %585 = vmatpush2.bf16.msra.mxu0 0
        %586 = vmatprep.subr.bf16.mxu0 0
        %587 = vmatpush2.bf16.msra.mxu0 0
        %588 = vmatprep.subr.bf16.mxu0 0
        %589 = vmatpush2.bf16.msra.mxu0 0
        %590 = vmatprep.subr.bf16.mxu0 0
        %591 = vmatpush2.bf16.msra.mxu0 0
        %592 = vmatprep.subr.bf16.mxu0 0
        %593 = vmatpush2.bf16.msra.mxu0 0
        %594 = vmatprep.subr.bf16.mxu0 0
        %595 = vmatpush2.bf16.msra.mxu0 0
        %596 = vmatprep.mubr.bf16.mxu0 0
        %597 = vmatmul.mubr.bf16.gmra.mxu0 %v547
        %v598 = vpop.f32.mrf.mxu0
        %v599 = vadd.f32 0.0, %v598
        %v600 = vpop.f32.mrf.mxu0
        %v601 = vpop.f32.mrf.mxu0
        %v602 = vadd.f32 0.0, %v601
        %v603 = vpop.f32.mrf.mxu0
        %604 = vmatprep.mubr.bf16.mxu0 0
        %605 = vmatmul.mubr.bf16.gmra.mxu0 %v550
        %v606 = vpop.f32.mrf.mxu0
        %v607 = vadd.f32 0.0, %v606
        %v608 = vpop.f32.mrf.mxu0
        %v609 = vpop.f32.mrf.mxu0
        %v610 = vadd.f32 0.0, %v609
        %v611 = vpop.f32.mrf.mxu0
        %612 = vmatprep.mubr.bf16.mxu0 0
        %613 = vmatmul.mubr.bf16.gmra.mxu0 %v553
        %v614 = vpop.f32.mrf.mxu0
        %v615 = vadd.f32 0.0, %v614
        %v616 = vpop.f32.mrf.mxu0
        %v617 = vpop.f32.mrf.mxu0
        %v618 = vadd.f32 0.0, %v617
        %v619 = vpop.f32.mrf.mxu0
        %620 = vmatprep.mubr.bf16.mxu0 0
        %621 = vmatmul.mubr.bf16.gmra.mxu0 %v556
        %v622 = vpop.f32.mrf.mxu0
        %v623 = vadd.f32 0.0, %v622
        %v624 = vpop.f32.mrf.mxu0
        %v625 = vpop.f32.mrf.mxu0
        %v626 = vadd.f32 0.0, %v625
        %v627 = vpop.f32.mrf.mxu0
        %628 = vmatprep.mubr.bf16.mxu0 0
        %629 = vmatmul.mubr.bf16.gmra.mxu0 %v559
        %v630 = vpop.f32.mrf.mxu0
        %v631 = vadd.f32 0.0, %v630
        %v632 = vpop.f32.mrf.mxu0
        %v633 = vpop.f32.mrf.mxu0
        %v634 = vpop.f32.mrf.mxu0
        %635 = vdwg.mxu0
        %v636 = vadd.f32 %v493, %v599
        %v637 = vadd.f32 %v496, %v602
        %v638 = vadd.f32 %v501, %v607
        %v639 = vadd.f32 %v504, %v610
        %v640 = vadd.f32 %v509, %v615
        %v641 = vadd.f32 %v512, %v618
        %v642 = vadd.f32 %v517, %v623
        %v643 = vadd.f32 %v520, %v626
        %v644 = vadd.f32 %v525, %v631
        %v645 = vld [vmem:[%s303 + $0x59] sm:$0xff]
        %v646 = vld [vmem:[%s303 + $0x61] sm:$0xff]
        %v647 = vld [vmem:[%s303 + $0x69] sm:$0xff]
        %v648 = vld [vmem:[%s303 + $0x71] sm:$0xff]
        %v649 = vld [vmem:[%s303 + $0x79] sm:$0xff]
        %v650 = vld [vmem:[%s303 + $0x81] sm:$0xff]
        %v651 = vld [vmem:[%s303 + $0x89] sm:$0xff]
        %v652 = vld [vmem:[%s303 + $0x91] sm:$0xff]
        %v653 = vld [vmem:[%s303 + $0x99] sm:$0x7f]
        %v654 = vpack.c.bf16 %v646, %v645
        %v655 = vpack.c.bf16 %v648, %v647
        %v656 = vpack.c.bf16 %v650, %v649
        %v657 = vpack.c.bf16 %v652, %v651
        %v658 = vpack.c.bf16 %v653, %v653
        %s659 = scalar_lea.vmem %s2, 6
        %v660 = vld [vmem:[%s659] sm:$0x3]
        %v662 = vsel %vm345, %v654, 0
        %v665 = vsel %vm345, %v655, 0
        %v668 = vsel %vm345, %v656, 0
        %v671 = vsel %vm345, %v657, 0
        %v674 = vsel %vm345, %v658, 0
        %v677 = vand.u32 %v660, %v364
        %679 = vmatprep.subr.bf16.mxu0 0
        %680 = vmatpush1.bf16.msra.mxu0 0
        %681 = vmatprep.subr.bf16.mxu0 0
        %682 = vmatpush1.bf16.msra.mxu0 0
        %683 = vmatprep.subr.bf16.mxu0 0
        %684 = vmatpush1.bf16.msra.mxu0 0
        %685 = vmatprep.subr.bf16.mxu0 0
        %686 = vmatpush1.bf16.msra.mxu0 0
        %687 = vmatprep.subr.bf16.mxu0 0
        %688 = vmatpush1.bf16.msra.mxu0 0
        %689 = vmatprep.subr.bf16.mxu0 0
        %690 = vmatpush1.bf16.msra.mxu0 0
        %691 = vmatprep.subr.bf16.mxu0 0
        %692 = vmatpush1.bf16.msra.mxu0 0
        %693 = vmatprep.subr.bf16.mxu0 0
        %694 = vmatpush1.bf16.msra.mxu0 %v677
        %695 = vmatprep.subr.bf16.mxu0 0
        %696 = vmatpush2.bf16.msra.mxu0 0
        %697 = vmatprep.subr.bf16.mxu0 0
        %698 = vmatpush2.bf16.msra.mxu0 0
        %699 = vmatprep.subr.bf16.mxu0 0
        %700 = vmatpush2.bf16.msra.mxu0 0
        %701 = vmatprep.subr.bf16.mxu0 0
        %702 = vmatpush2.bf16.msra.mxu0 0
        %703 = vmatprep.subr.bf16.mxu0 0
        %704 = vmatpush2.bf16.msra.mxu0 0
        %705 = vmatprep.subr.bf16.mxu0 0
        %706 = vmatpush2.bf16.msra.mxu0 0
        %707 = vmatprep.subr.bf16.mxu0 0
        %708 = vmatpush2.bf16.msra.mxu0 0
        %709 = vmatprep.subr.bf16.mxu0 0
        %710 = vmatpush2.bf16.msra.mxu0 0
        %711 = vmatprep.mubr.bf16.mxu0 0
        %712 = vmatmul.mubr.bf16.gmra.mxu0 %v662
        %v713 = vpop.f32.mrf.mxu0
        %v714 = vadd.f32 0.0, %v713
        %v715 = vpop.f32.mrf.mxu0
        %v716 = vpop.f32.mrf.mxu0
        %v717 = vadd.f32 0.0, %v716
        %v718 = vpop.f32.mrf.mxu0
        %719 = vmatprep.mubr.bf16.mxu0 0
        %720 = vmatmul.mubr.bf16.gmra.mxu0 %v665
        %v721 = vpop.f32.mrf.mxu0
        %v722 = vadd.f32 0.0, %v721
        %v723 = vpop.f32.mrf.mxu0
        %v724 = vpop.f32.mrf.mxu0
        %v725 = vadd.f32 0.0, %v724
        %v726 = vpop.f32.mrf.mxu0
        %727 = vmatprep.mubr.bf16.mxu0 0
        %728 = vmatmul.mubr.bf16.gmra.mxu0 %v668
        %v729 = vpop.f32.mrf.mxu0
        %v730 = vadd.f32 0.0, %v729
        %v731 = vpop.f32.mrf.mxu0
        %v732 = vpop.f32.mrf.mxu0
        %v733 = vadd.f32 0.0, %v732
        %v734 = vpop.f32.mrf.mxu0
        %735 = vmatprep.mubr.bf16.mxu0 0
        %736 = vmatmul.mubr.bf16.gmra.mxu0 %v671
        %v737 = vpop.f32.mrf.mxu0
        %v738 = vadd.f32 0.0, %v737
        %v739 = vpop.f32.mrf.mxu0
        %v740 = vpop.f32.mrf.mxu0
        %v741 = vadd.f32 0.0, %v740
        %v742 = vpop.f32.mrf.mxu0
        %743 = vmatprep.mubr.bf16.mxu0 0
        %744 = vmatmul.mubr.bf16.gmra.mxu0 %v674
        %v745 = vpop.f32.mrf.mxu0
        %v746 = vadd.f32 0.0, %v745
        %v747 = vpop.f32.mrf.mxu0
        %v748 = vpop.f32.mrf.mxu0
        %v749 = vpop.f32.mrf.mxu0
        %750 = vdwg.mxu0
        %v751 = vadd.f32 %v636, %v714
        %v752 = vadd.f32 %v637, %v717
        %v753 = vadd.f32 %v638, %v722
        %v754 = vadd.f32 %v639, %v725
        %v755 = vadd.f32 %v640, %v730
        %v756 = vadd.f32 %v641, %v733
        %v757 = vadd.f32 %v642, %v738
        %v758 = vadd.f32 %v643, %v741
        %v759 = vadd.f32 %v644, %v746
        %v760 = vld [vmem:[%s303 + $0xb0] sm:$0xff]
        %v761 = vld [vmem:[%s303 + $0xb8] sm:$0xff]
        %v762 = vld [vmem:[%s303 + $0xc0] sm:$0xff]
        %v763 = vld [vmem:[%s303 + $0xc8] sm:$0xff]
        %v764 = vld [vmem:[%s303 + $0xd0] sm:$0xff]
        %v765 = vld [vmem:[%s303 + $0xd8] sm:$0xff]
        %v766 = vld [vmem:[%s303 + $0xe0] sm:$0xff]
        %v767 = vld [vmem:[%s303 + $0xe8] sm:$0xff]
        %v768 = vld [vmem:[%s303 + $0xf0] sm:$0x7f]
        %v769 = vpack.c.bf16 %v761, %v760
        %v770 = vpack.c.bf16 %v763, %v762
        %v771 = vpack.c.bf16 %v765, %v764
        %v772 = vpack.c.bf16 %v767, %v766
        %v773 = vpack.c.bf16 %v768, %v768
        %s774 = scalar_lea.vmem %s2, 8
        %v775 = vld [vmem:[%s774] sm:$0x3]
        %v777 = vsel %vm345, %v769, 0
        %v780 = vsel %vm345, %v770, 0
        %v783 = vsel %vm345, %v771, 0
        %v786 = vsel %vm345, %v772, 0
        %v789 = vsel %vm345, %v773, 0
        %v792 = vand.u32 %v775, %v364
        %794 = vmatprep.subr.bf16.mxu0 0
        %795 = vmatpush1.bf16.msra.mxu0 0
        %796 = vmatprep.subr.bf16.mxu0 0
        %797 = vmatpush1.bf16.msra.mxu0 0
        %798 = vmatprep.subr.bf16.mxu0 0
        %799 = vmatpush1.bf16.msra.mxu0 0
        %800 = vmatprep.subr.bf16.mxu0 0
        %801 = vmatpush1.bf16.msra.mxu0 0
        %802 = vmatprep.subr.bf16.mxu0 0
        %803 = vmatpush1.bf16.msra.mxu0 0
        %804 = vmatprep.subr.bf16.mxu0 0
        %805 = vmatpush1.bf16.msra.mxu0 0
        %806 = vmatprep.subr.bf16.mxu0 0
        %807 = vmatpush1.bf16.msra.mxu0 0
        %808 = vmatprep.subr.bf16.mxu0 0
        %809 = vmatpush1.bf16.msra.mxu0 %v792
        %810 = vmatprep.subr.bf16.mxu0 0
        %811 = vmatpush2.bf16.msra.mxu0 0
        %812 = vmatprep.subr.bf16.mxu0 0
        %813 = vmatpush2.bf16.msra.mxu0 0
        %814 = vmatprep.subr.bf16.mxu0 0
        %815 = vmatpush2.bf16.msra.mxu0 0
        %816 = vmatprep.subr.bf16.mxu0 0
        %817 = vmatpush2.bf16.msra.mxu0 0
        %818 = vmatprep.subr.bf16.mxu0 0
        %819 = vmatpush2.bf16.msra.mxu0 0
        %820 = vmatprep.subr.bf16.mxu0 0
        %821 = vmatpush2.bf16.msra.mxu0 0
        %822 = vmatprep.subr.bf16.mxu0 0
        %823 = vmatpush2.bf16.msra.mxu0 0
        %824 = vmatprep.subr.bf16.mxu0 0
        %825 = vmatpush2.bf16.msra.mxu0 0
        %826 = vmatprep.mubr.bf16.mxu0 0
        %827 = vmatmul.mubr.bf16.gmra.mxu0 %v777
        %v828 = vpop.f32.mrf.mxu0
        %v829 = vadd.f32 0.0, %v828
        %v830 = vpop.f32.mrf.mxu0
        %v831 = vpop.f32.mrf.mxu0
        %v832 = vadd.f32 0.0, %v831
        %v833 = vpop.f32.mrf.mxu0
        %834 = vmatprep.mubr.bf16.mxu0 0
        %835 = vmatmul.mubr.bf16.gmra.mxu0 %v780
        %v836 = vpop.f32.mrf.mxu0
        %v837 = vadd.f32 0.0, %v836
        %v838 = vpop.f32.mrf.mxu0
        %v839 = vpop.f32.mrf.mxu0
        %v840 = vadd.f32 0.0, %v839
        %v841 = vpop.f32.mrf.mxu0
        %842 = vmatprep.mubr.bf16.mxu0 0
        %843 = vmatmul.mubr.bf16.gmra.mxu0 %v783
        %v844 = vpop.f32.mrf.mxu0
        %v845 = vadd.f32 0.0, %v844
        %v846 = vpop.f32.mrf.mxu0
        %v847 = vpop.f32.mrf.mxu0
        %v848 = vadd.f32 0.0, %v847
        %v849 = vpop.f32.mrf.mxu0
        %850 = vmatprep.mubr.bf16.mxu0 0
        %851 = vmatmul.mubr.bf16.gmra.mxu0 %v786
        %v852 = vpop.f32.mrf.mxu0
        %v853 = vadd.f32 0.0, %v852
        %v854 = vpop.f32.mrf.mxu0
        %v855 = vpop.f32.mrf.mxu0
        %v856 = vadd.f32 0.0, %v855
        %v857 = vpop.f32.mrf.mxu0
        %858 = vmatprep.mubr.bf16.mxu0 0
        %859 = vmatmul.mubr.bf16.gmra.mxu0 %v789
        %v860 = vpop.f32.mrf.mxu0
        %v861 = vadd.f32 0.0, %v860
        %v862 = vpop.f32.mrf.mxu0
        %v863 = vpop.f32.mrf.mxu0
        %v864 = vpop.f32.mrf.mxu0
        %865 = vdwg.mxu0
        %v866 = vadd.f32 %v751, %v829
        %v867 = vadd.f32 %v752, %v832
        %v868 = vadd.f32 %v753, %v837
        %v869 = vadd.f32 %v754, %v840
        %v870 = vadd.f32 %v755, %v845
        %v871 = vadd.f32 %v756, %v848
        %v872 = vadd.f32 %v757, %v853
        %v873 = vadd.f32 %v758, %v856
        %v874 = vadd.f32 %v759, %v861
        %v875 = vld [vmem:[%s303 + $0x108] sm:$0xff]
        %v876 = vld [vmem:[%s303 + $0x110] sm:$0xff]
        %v877 = vld [vmem:[%s303 + $0x118] sm:$0xff]
        %v878 = vld [vmem:[%s303 + $0x120] sm:$0xff]
        %v879 = vld [vmem:[%s303 + $0x128] sm:$0xff]
        %v880 = vld [vmem:[%s303 + $0x130] sm:$0xff]
        %v881 = vld [vmem:[%s303 + $0x138] sm:$0xff]
        %v882 = vld [vmem:[%s303 + $0x140] sm:$0xff]
        %v883 = vld [vmem:[%s303 + $0x148] sm:$0x7f]
        %v884 = vpack.c.bf16 %v876, %v875
        %v885 = vpack.c.bf16 %v878, %v877
        %v886 = vpack.c.bf16 %v880, %v879
        %v887 = vpack.c.bf16 %v882, %v881
        %v888 = vpack.c.bf16 %v883, %v883
        %s889 = scalar_lea.vmem %s2, 10
        %v890 = vld [vmem:[%s889] sm:$0x3]
        %v892 = vsel %vm345, %v884, 0
        %v895 = vsel %vm345, %v885, 0
        %v898 = vsel %vm345, %v886, 0
        %v901 = vsel %vm345, %v887, 0
        %v904 = vsel %vm345, %v888, 0
        %v907 = vand.u32 %v890, %v364
        %909 = vmatprep.subr.bf16.mxu0 0
        %910 = vmatpush1.bf16.msra.mxu0 0
        %911 = vmatprep.subr.bf16.mxu0 0
        %912 = vmatpush1.bf16.msra.mxu0 0
        %913 = vmatprep.subr.bf16.mxu0 0
        %914 = vmatpush1.bf16.msra.mxu0 0
        %915 = vmatprep.subr.bf16.mxu0 0
        %916 = vmatpush1.bf16.msra.mxu0 0
        %917 = vmatprep.subr.bf16.mxu0 0
        %918 = vmatpush1.bf16.msra.mxu0 0
        %919 = vmatprep.subr.bf16.mxu0 0
        %920 = vmatpush1.bf16.msra.mxu0 0
        %921 = vmatprep.subr.bf16.mxu0 0
        %922 = vmatpush1.bf16.msra.mxu0 0
        %923 = vmatprep.subr.bf16.mxu0 0
        %924 = vmatpush1.bf16.msra.mxu0 %v907
        %925 = vmatprep.subr.bf16.mxu0 0
        %926 = vmatpush2.bf16.msra.mxu0 0
        %927 = vmatprep.subr.bf16.mxu0 0
        %928 = vmatpush2.bf16.msra.mxu0 0
        %929 = vmatprep.subr.bf16.mxu0 0
        %930 = vmatpush2.bf16.msra.mxu0 0
        %931 = vmatprep.subr.bf16.mxu0 0
        %932 = vmatpush2.bf16.msra.mxu0 0
        %933 = vmatprep.subr.bf16.mxu0 0
        %934 = vmatpush2.bf16.msra.mxu0 0
        %935 = vmatprep.subr.bf16.mxu0 0
        %936 = vmatpush2.bf16.msra.mxu0 0
        %937 = vmatprep.subr.bf16.mxu0 0
        %938 = vmatpush2.bf16.msra.mxu0 0
        %939 = vmatprep.subr.bf16.mxu0 0
        %940 = vmatpush2.bf16.msra.mxu0 0
        %941 = vmatprep.mubr.bf16.mxu0 0
        %942 = vmatmul.mubr.bf16.gmra.mxu0 %v892
        %v943 = vpop.f32.mrf.mxu0
        %v944 = vadd.f32 0.0, %v943
        %v945 = vpop.f32.mrf.mxu0
        %v946 = vpop.f32.mrf.mxu0
        %v947 = vadd.f32 0.0, %v946
        %v948 = vpop.f32.mrf.mxu0
        %949 = vmatprep.mubr.bf16.mxu0 0
        %950 = vmatmul.mubr.bf16.gmra.mxu0 %v895
        %v951 = vpop.f32.mrf.mxu0
        %v952 = vadd.f32 0.0, %v951
        %v953 = vpop.f32.mrf.mxu0
        %v954 = vpop.f32.mrf.mxu0
        %v955 = vadd.f32 0.0, %v954
        %v956 = vpop.f32.mrf.mxu0
        %957 = vmatprep.mubr.bf16.mxu0 0
        %958 = vmatmul.mubr.bf16.gmra.mxu0 %v898
        %v959 = vpop.f32.mrf.mxu0
        %v960 = vadd.f32 0.0, %v959
        %v961 = vpop.f32.mrf.mxu0
        %v962 = vpop.f32.mrf.mxu0
        %v963 = vadd.f32 0.0, %v962
        %v964 = vpop.f32.mrf.mxu0
        %965 = vmatprep.mubr.bf16.mxu0 0
        %966 = vmatmul.mubr.bf16.gmra.mxu0 %v901
        %v967 = vpop.f32.mrf.mxu0
        %v968 = vadd.f32 0.0, %v967
        %v969 = vpop.f32.mrf.mxu0
        %v970 = vpop.f32.mrf.mxu0
        %v971 = vadd.f32 0.0, %v970
        %v972 = vpop.f32.mrf.mxu0
        %973 = vmatprep.mubr.bf16.mxu0 0
        %974 = vmatmul.mubr.bf16.gmra.mxu0 %v904
        %v975 = vpop.f32.mrf.mxu0
        %v976 = vadd.f32 0.0, %v975
        %v977 = vpop.f32.mrf.mxu0
        %v978 = vpop.f32.mrf.mxu0
        %v979 = vpop.f32.mrf.mxu0
        %980 = vdwg.mxu0
        %v981 = vadd.f32 %v866, %v944
        %v982 = vadd.f32 %v867, %v947
        %v983 = vadd.f32 %v868, %v952
        %v984 = vadd.f32 %v869, %v955
        %v985 = vadd.f32 %v870, %v960
        %v986 = vadd.f32 %v871, %v963
        %v987 = vadd.f32 %v872, %v968
        %v988 = vadd.f32 %v873, %v971
        %v989 = vadd.f32 %v874, %v976
        %v990 = vld [vmem:[%s303 + $0xb1] sm:$0xff]
        %v991 = vld [vmem:[%s303 + $0xb9] sm:$0xff]
        %v992 = vld [vmem:[%s303 + $0xc1] sm:$0xff]
        %v993 = vld [vmem:[%s303 + $0xc9] sm:$0xff]
        %v994 = vld [vmem:[%s303 + $0xd1] sm:$0xff]
        %v995 = vld [vmem:[%s303 + $0xd9] sm:$0xff]
        %v996 = vld [vmem:[%s303 + $0xe1] sm:$0xff]
        %v997 = vld [vmem:[%s303 + $0xe9] sm:$0xff]
        %v998 = vld [vmem:[%s303 + $0xf1] sm:$0x7f]
        %v999 = vpack.c.bf16 %v991, %v990
        %v1000 = vpack.c.bf16 %v993, %v992
        %v1001 = vpack.c.bf16 %v995, %v994
        %v1002 = vpack.c.bf16 %v997, %v996
        %v1003 = vpack.c.bf16 %v998, %v998
        %s1004 = scalar_lea.vmem %s2, 12
        %v1005 = vld [vmem:[%s1004] sm:$0x3]
        %v1007 = vsel %vm345, %v999, 0
        %v1010 = vsel %vm345, %v1000, 0
        %v1013 = vsel %vm345, %v1001, 0
        %v1016 = vsel %vm345, %v1002, 0
        %v1019 = vsel %vm345, %v1003, 0
        %v1022 = vand.u32 %v1005, %v364
        %1024 = vmatprep.subr.bf16.mxu0 0
        %1025 = vmatpush1.bf16.msra.mxu0 0
        %1026 = vmatprep.subr.bf16.mxu0 0
        %1027 = vmatpush1.bf16.msra.mxu0 0
        %1028 = vmatprep.subr.bf16.mxu0 0
        %1029 = vmatpush1.bf16.msra.mxu0 0
        %1030 = vmatprep.subr.bf16.mxu0 0
        %1031 = vmatpush1.bf16.msra.mxu0 0
        %1032 = vmatprep.subr.bf16.mxu0 0
        %1033 = vmatpush1.bf16.msra.mxu0 0
        %1034 = vmatprep.subr.bf16.mxu0 0
        %1035 = vmatpush1.bf16.msra.mxu0 0
        %1036 = vmatprep.subr.bf16.mxu0 0
        %1037 = vmatpush1.bf16.msra.mxu0 0
        %1038 = vmatprep.subr.bf16.mxu0 0
        %1039 = vmatpush1.bf16.msra.mxu0 %v1022
        %1040 = vmatprep.subr.bf16.mxu0 0
        %1041 = vmatpush2.bf16.msra.mxu0 0
        %1042 = vmatprep.subr.bf16.mxu0 0
        %1043 = vmatpush2.bf16.msra.mxu0 0
        %1044 = vmatprep.subr.bf16.mxu0 0
        %1045 = vmatpush2.bf16.msra.mxu0 0
        %1046 = vmatprep.subr.bf16.mxu0 0
        %1047 = vmatpush2.bf16.msra.mxu0 0
        %1048 = vmatprep.subr.bf16.mxu0 0
        %1049 = vmatpush2.bf16.msra.mxu0 0
        %1050 = vmatprep.subr.bf16.mxu0 0
        %1051 = vmatpush2.bf16.msra.mxu0 0
        %1052 = vmatprep.subr.bf16.mxu0 0
        %1053 = vmatpush2.bf16.msra.mxu0 0
        %1054 = vmatprep.subr.bf16.mxu0 0
        %1055 = vmatpush2.bf16.msra.mxu0 0
        %1056 = vmatprep.mubr.bf16.mxu0 0
        %1057 = vmatmul.mubr.bf16.gmra.mxu0 %v1007
        %v1058 = vpop.f32.mrf.mxu0
        %v1059 = vadd.f32 0.0, %v1058
        %v1060 = vpop.f32.mrf.mxu0
        %v1061 = vpop.f32.mrf.mxu0
        %v1062 = vadd.f32 0.0, %v1061
        %v1063 = vpop.f32.mrf.mxu0
        %1064 = vmatprep.mubr.bf16.mxu0 0
        %1065 = vmatmul.mubr.bf16.gmra.mxu0 %v1010
        %v1066 = vpop.f32.mrf.mxu0
        %v1067 = vadd.f32 0.0, %v1066
        %v1068 = vpop.f32.mrf.mxu0
        %v1069 = vpop.f32.mrf.mxu0
        %v1070 = vadd.f32 0.0, %v1069
        %v1071 = vpop.f32.mrf.mxu0
        %1072 = vmatprep.mubr.bf16.mxu0 0
        %1073 = vmatmul.mubr.bf16.gmra.mxu0 %v1013
        %v1074 = vpop.f32.mrf.mxu0
        %v1075 = vadd.f32 0.0, %v1074
        %v1076 = vpop.f32.mrf.mxu0
        %v1077 = vpop.f32.mrf.mxu0
        %v1078 = vadd.f32 0.0, %v1077
        %v1079 = vpop.f32.mrf.mxu0
        %1080 = vmatprep.mubr.bf16.mxu0 0
        %1081 = vmatmul.mubr.bf16.gmra.mxu0 %v1016
        %v1082 = vpop.f32.mrf.mxu0
        %v1083 = vadd.f32 0.0, %v1082
        %v1084 = vpop.f32.mrf.mxu0
        %v1085 = vpop.f32.mrf.mxu0
        %v1086 = vadd.f32 0.0, %v1085
        %v1087 = vpop.f32.mrf.mxu0
        %1088 = vmatprep.mubr.bf16.mxu0 0
        %1089 = vmatmul.mubr.bf16.gmra.mxu0 %v1019
        %v1090 = vpop.f32.mrf.mxu0
        %v1091 = vadd.f32 0.0, %v1090
        %v1092 = vpop.f32.mrf.mxu0
        %v1093 = vpop.f32.mrf.mxu0
        %v1094 = vpop.f32.mrf.mxu0
        %1095 = vdwg.mxu0
        %v1096 = vadd.f32 %v981, %v1059
        %v1097 = vadd.f32 %v982, %v1062
        %v1098 = vadd.f32 %v983, %v1067
        %v1099 = vadd.f32 %v984, %v1070
        %v1100 = vadd.f32 %v985, %v1075
        %v1101 = vadd.f32 %v986, %v1078
        %v1102 = vadd.f32 %v987, %v1083
        %v1103 = vadd.f32 %v988, %v1086
        %v1104 = vadd.f32 %v989, %v1091
        %v1105 = vld [vmem:[%s303 + $0x109] sm:$0xff]
        %v1106 = vld [vmem:[%s303 + $0x111] sm:$0xff]
        %v1107 = vld [vmem:[%s303 + $0x119] sm:$0xff]
        %v1108 = vld [vmem:[%s303 + $0x121] sm:$0xff]
        %v1109 = vld [vmem:[%s303 + $0x129] sm:$0xff]
        %v1110 = vld [vmem:[%s303 + $0x131] sm:$0xff]
        %v1111 = vld [vmem:[%s303 + $0x139] sm:$0xff]
        %v1112 = vld [vmem:[%s303 + $0x141] sm:$0xff]
        %v1113 = vld [vmem:[%s303 + $0x149] sm:$0x7f]
        %v1114 = vpack.c.bf16 %v1106, %v1105
        %v1115 = vpack.c.bf16 %v1108, %v1107
        %v1116 = vpack.c.bf16 %v1110, %v1109
        %v1117 = vpack.c.bf16 %v1112, %v1111
        %v1118 = vpack.c.bf16 %v1113, %v1113
        %s1119 = scalar_lea.vmem %s2, 14
        %v1120 = vld [vmem:[%s1119] sm:$0x3]
        %v1122 = vsel %vm345, %v1114, 0
        %v1125 = vsel %vm345, %v1115, 0
        %v1128 = vsel %vm345, %v1116, 0
        %v1131 = vsel %vm345, %v1117, 0
        %v1134 = vsel %vm345, %v1118, 0
        %v1137 = vand.u32 %v1120, %v364
        %1139 = vmatprep.subr.bf16.mxu0 0
        %1140 = vmatpush1.bf16.msra.mxu0 0
        %1141 = vmatprep.subr.bf16.mxu0 0
        %1142 = vmatpush1.bf16.msra.mxu0 0
        %1143 = vmatprep.subr.bf16.mxu0 0
        %1144 = vmatpush1.bf16.msra.mxu0 0
        %1145 = vmatprep.subr.bf16.mxu0 0
        %1146 = vmatpush1.bf16.msra.mxu0 0
        %1147 = vmatprep.subr.bf16.mxu0 0
        %1148 = vmatpush1.bf16.msra.mxu0 0
        %1149 = vmatprep.subr.bf16.mxu0 0
        %1150 = vmatpush1.bf16.msra.mxu0 0
        %1151 = vmatprep.subr.bf16.mxu0 0
        %1152 = vmatpush1.bf16.msra.mxu0 0
        %1153 = vmatprep.subr.bf16.mxu0 0
        %1154 = vmatpush1.bf16.msra.mxu0 %v1137
        %1155 = vmatprep.subr.bf16.mxu0 0
        %1156 = vmatpush2.bf16.msra.mxu0 0
        %1157 = vmatprep.subr.bf16.mxu0 0
        %1158 = vmatpush2.bf16.msra.mxu0 0
        %1159 = vmatprep.subr.bf16.mxu0 0
        %1160 = vmatpush2.bf16.msra.mxu0 0
        %1161 = vmatprep.subr.bf16.mxu0 0
        %1162 = vmatpush2.bf16.msra.mxu0 0
        %1163 = vmatprep.subr.bf16.mxu0 0
        %1164 = vmatpush2.bf16.msra.mxu0 0
        %1165 = vmatprep.subr.bf16.mxu0 0
        %1166 = vmatpush2.bf16.msra.mxu0 0
        %1167 = vmatprep.subr.bf16.mxu0 0
        %1168 = vmatpush2.bf16.msra.mxu0 0
        %1169 = vmatprep.subr.bf16.mxu0 0
        %1170 = vmatpush2.bf16.msra.mxu0 0
        %1171 = vmatprep.mubr.bf16.mxu0 0
        %1172 = vmatmul.mubr.bf16.gmra.mxu0 %v1122
        %v1173 = vpop.f32.mrf.mxu0
        %v1174 = vadd.f32 0.0, %v1173
        %v1175 = vpop.f32.mrf.mxu0
        %v1176 = vpop.f32.mrf.mxu0
        %v1177 = vadd.f32 0.0, %v1176
        %v1178 = vpop.f32.mrf.mxu0
        %1179 = vmatprep.mubr.bf16.mxu0 0
        %1180 = vmatmul.mubr.bf16.gmra.mxu0 %v1125
        %v1181 = vpop.f32.mrf.mxu0
        %v1182 = vadd.f32 0.0, %v1181
        %v1183 = vpop.f32.mrf.mxu0
        %v1184 = vpop.f32.mrf.mxu0
        %v1185 = vadd.f32 0.0, %v1184
        %v1186 = vpop.f32.mrf.mxu0
        %1187 = vmatprep.mubr.bf16.mxu0 0
        %1188 = vmatmul.mubr.bf16.gmra.mxu0 %v1128
        %v1189 = vpop.f32.mrf.mxu0
        %v1190 = vadd.f32 0.0, %v1189
        %v1191 = vpop.f32.mrf.mxu0
        %v1192 = vpop.f32.mrf.mxu0
        %v1193 = vadd.f32 0.0, %v1192
        %v1194 = vpop.f32.mrf.mxu0
        %1195 = vmatprep.mubr.bf16.mxu0 0
        %1196 = vmatmul.mubr.bf16.gmra.mxu0 %v1131
        %v1197 = vpop.f32.mrf.mxu0
        %v1198 = vadd.f32 0.0, %v1197
        %v1199 = vpop.f32.mrf.mxu0
        %v1200 = vpop.f32.mrf.mxu0
        %v1201 = vadd.f32 0.0, %v1200
        %v1202 = vpop.f32.mrf.mxu0
        %1203 = vmatprep.mubr.bf16.mxu0 0
        %1204 = vmatmul.mubr.bf16.gmra.mxu0 %v1134
        %v1205 = vpop.f32.mrf.mxu0
        %v1206 = vadd.f32 0.0, %v1205
        %v1207 = vpop.f32.mrf.mxu0
        %v1208 = vpop.f32.mrf.mxu0
        %v1209 = vpop.f32.mrf.mxu0
        %1210 = vdwg.mxu0
        %v1211 = vadd.f32 %v1096, %v1174
        %v1212 = vadd.f32 %v1097, %v1177
        %v1213 = vadd.f32 %v1098, %v1182
        %v1214 = vadd.f32 %v1099, %v1185
        %v1215 = vadd.f32 %v1100, %v1190
        %v1216 = vadd.f32 %v1101, %v1193
        %v1217 = vadd.f32 %v1102, %v1198
        %v1218 = vadd.f32 %v1103, %v1201
        %v1219 = vadd.f32 %v1104, %v1206
        %v1220 = vld [vmem:[%s303 + $0x9] sm:$0xff]
        %v1221 = vld [vmem:[%s303 + $0x11] sm:$0xff]
        %v1222 = vld [vmem:[%s303 + $0x19] sm:$0xff]
        %v1223 = vld [vmem:[%s303 + $0x21] sm:$0xff]
        %v1224 = vld [vmem:[%s303 + $0x29] sm:$0xff]
        %v1225 = vld [vmem:[%s303 + $0x31] sm:$0xff]
        %v1226 = vld [vmem:[%s303 + $0x39] sm:$0xff]
        %v1227 = vld [vmem:[%s303 + $0x41] sm:$0xff]
        %v1228 = vld [vmem:[%s303 + $0x49] sm:$0x7f]
        %v1229 = vpack.c.bf16 %v1221, %v1220
        %v1230 = vpack.c.bf16 %v1223, %v1222
        %v1231 = vpack.c.bf16 %v1225, %v1224
        %v1232 = vpack.c.bf16 %v1227, %v1226
        %v1233 = vpack.c.bf16 %v1228, %v1228
        %s1234 = scalar_lea.vmem %s2, 16
        %v1235 = vld [vmem:[%s1234] sm:$0x3]
        %v1237 = vsel %vm345, %v1229, 0
        %v1240 = vsel %vm345, %v1230, 0
        %v1243 = vsel %vm345, %v1231, 0
        %v1246 = vsel %vm345, %v1232, 0
        %v1249 = vsel %vm345, %v1233, 0
        %v1252 = vand.u32 %v1235, %v364
        %1254 = vmatprep.subr.bf16.mxu0 0
        %1255 = vmatpush1.bf16.msra.mxu0 0
        %1256 = vmatprep.subr.bf16.mxu0 0
        %1257 = vmatpush1.bf16.msra.mxu0 0
        %1258 = vmatprep.subr.bf16.mxu0 0
        %1259 = vmatpush1.bf16.msra.mxu0 0
        %1260 = vmatprep.subr.bf16.mxu0 0
        %1261 = vmatpush1.bf16.msra.mxu0 0
        %1262 = vmatprep.subr.bf16.mxu0 0
        %1263 = vmatpush1.bf16.msra.mxu0 0
        %1264 = vmatprep.subr.bf16.mxu0 0
        %1265 = vmatpush1.bf16.msra.mxu0 0
        %1266 = vmatprep.subr.bf16.mxu0 0
        %1267 = vmatpush1.bf16.msra.mxu0 0
        %1268 = vmatprep.subr.bf16.mxu0 0
        %1269 = vmatpush1.bf16.msra.mxu0 %v1252
        %1270 = vmatprep.subr.bf16.mxu0 0
        %1271 = vmatpush2.bf16.msra.mxu0 0
        %1272 = vmatprep.subr.bf16.mxu0 0
        %1273 = vmatpush2.bf16.msra.mxu0 0
        %1274 = vmatprep.subr.bf16.mxu0 0
        %1275 = vmatpush2.bf16.msra.mxu0 0
        %1276 = vmatprep.subr.bf16.mxu0 0
        %1277 = vmatpush2.bf16.msra.mxu0 0
        %1278 = vmatprep.subr.bf16.mxu0 0
        %1279 = vmatpush2.bf16.msra.mxu0 0
        %1280 = vmatprep.subr.bf16.mxu0 0
        %1281 = vmatpush2.bf16.msra.mxu0 0
        %1282 = vmatprep.subr.bf16.mxu0 0
        %1283 = vmatpush2.bf16.msra.mxu0 0
        %1284 = vmatprep.subr.bf16.mxu0 0
        %1285 = vmatpush2.bf16.msra.mxu0 0
        %1286 = vmatprep.mubr.bf16.mxu0 0
        %1287 = vmatmul.mubr.bf16.gmra.mxu0 %v1237
        %v1288 = vpop.f32.mrf.mxu0
        %v1289 = vadd.f32 0.0, %v1288
        %v1290 = vpop.f32.mrf.mxu0
        %v1291 = vpop.f32.mrf.mxu0
        %v1292 = vadd.f32 0.0, %v1291
        %v1293 = vpop.f32.mrf.mxu0
        %1294 = vmatprep.mubr.bf16.mxu0 0
        %1295 = vmatmul.mubr.bf16.gmra.mxu0 %v1240
        %v1296 = vpop.f32.mrf.mxu0
        %v1297 = vadd.f32 0.0, %v1296
        %v1298 = vpop.f32.mrf.mxu0
        %v1299 = vpop.f32.mrf.mxu0
        %v1300 = vadd.f32 0.0, %v1299
        %v1301 = vpop.f32.mrf.mxu0
        %1302 = vmatprep.mubr.bf16.mxu0 0
        %1303 = vmatmul.mubr.bf16.gmra.mxu0 %v1243
        %v1304 = vpop.f32.mrf.mxu0
        %v1305 = vadd.f32 0.0, %v1304
        %v1306 = vpop.f32.mrf.mxu0
        %v1307 = vpop.f32.mrf.mxu0
        %v1308 = vadd.f32 0.0, %v1307
        %v1309 = vpop.f32.mrf.mxu0
        %1310 = vmatprep.mubr.bf16.mxu0 0
        %1311 = vmatmul.mubr.bf16.gmra.mxu0 %v1246
        %v1312 = vpop.f32.mrf.mxu0
        %v1313 = vadd.f32 0.0, %v1312
        %v1314 = vpop.f32.mrf.mxu0
        %v1315 = vpop.f32.mrf.mxu0
        %v1316 = vadd.f32 0.0, %v1315
        %v1317 = vpop.f32.mrf.mxu0
        %1318 = vmatprep.mubr.bf16.mxu0 0
        %1319 = vmatmul.mubr.bf16.gmra.mxu0 %v1249
        %v1320 = vpop.f32.mrf.mxu0
        %v1321 = vadd.f32 0.0, %v1320
        %v1322 = vpop.f32.mrf.mxu0
        %v1323 = vpop.f32.mrf.mxu0
        %v1324 = vpop.f32.mrf.mxu0
        %1325 = vdwg.mxu0
        %v1326 = vadd.f32 %v1211, %v1289
        %v1327 = vadd.f32 %v1212, %v1292
        %v1328 = vadd.f32 %v1213, %v1297
        %v1329 = vadd.f32 %v1214, %v1300
        %v1330 = vadd.f32 %v1215, %v1305
        %v1331 = vadd.f32 %v1216, %v1308
        %v1332 = vadd.f32 %v1217, %v1313
        %v1333 = vadd.f32 %v1218, %v1316
        %v1334 = vadd.f32 %v1219, %v1321
        %v1335 = vld [vmem:[%s303 + $0x61] sm:$0xff]
        %v1336 = vld [vmem:[%s303 + $0x69] sm:$0xff]
        %v1337 = vld [vmem:[%s303 + $0x71] sm:$0xff]
        %v1338 = vld [vmem:[%s303 + $0x79] sm:$0xff]
        %v1339 = vld [vmem:[%s303 + $0x81] sm:$0xff]
        %v1340 = vld [vmem:[%s303 + $0x89] sm:$0xff]
        %v1341 = vld [vmem:[%s303 + $0x91] sm:$0xff]
        %v1342 = vld [vmem:[%s303 + $0x99] sm:$0xff]
        %v1343 = vld [vmem:[%s303 + $0xa1] sm:$0x7f]
        %v1344 = vpack.c.bf16 %v1336, %v1335
        %v1345 = vpack.c.bf16 %v1338, %v1337
        %v1346 = vpack.c.bf16 %v1340, %v1339
        %v1347 = vpack.c.bf16 %v1342, %v1341
        %v1348 = vpack.c.bf16 %v1343, %v1343
        %s1349 = scalar_lea.vmem %s2, 18
        %v1350 = vld [vmem:[%s1349] sm:$0x3]
        %v1352 = vsel %vm345, %v1344, 0
        %v1355 = vsel %vm345, %v1345, 0
        %v1358 = vsel %vm345, %v1346, 0
        %v1361 = vsel %vm345, %v1347, 0
        %v1364 = vsel %vm345, %v1348, 0
        %v1367 = vand.u32 %v1350, %v364
        %1369 = vmatprep.subr.bf16.mxu0 0
        %1370 = vmatpush1.bf16.msra.mxu0 0
        %1371 = vmatprep.subr.bf16.mxu0 0
        %1372 = vmatpush1.bf16.msra.mxu0 0
        %1373 = vmatprep.subr.bf16.mxu0 0
        %1374 = vmatpush1.bf16.msra.mxu0 0
        %1375 = vmatprep.subr.bf16.mxu0 0
        %1376 = vmatpush1.bf16.msra.mxu0 0
        %1377 = vmatprep.subr.bf16.mxu0 0
        %1378 = vmatpush1.bf16.msra.mxu0 0
        %1379 = vmatprep.subr.bf16.mxu0 0
        %1380 = vmatpush1.bf16.msra.mxu0 0
        %1381 = vmatprep.subr.bf16.mxu0 0
        %1382 = vmatpush1.bf16.msra.mxu0 0
        %1383 = vmatprep.subr.bf16.mxu0 0
        %1384 = vmatpush1.bf16.msra.mxu0 %v1367
        %1385 = vmatprep.subr.bf16.mxu0 0
        %1386 = vmatpush2.bf16.msra.mxu0 0
        %1387 = vmatprep.subr.bf16.mxu0 0
        %1388 = vmatpush2.bf16.msra.mxu0 0
        %1389 = vmatprep.subr.bf16.mxu0 0
        %1390 = vmatpush2.bf16.msra.mxu0 0
        %1391 = vmatprep.subr.bf16.mxu0 0
        %1392 = vmatpush2.bf16.msra.mxu0 0
        %1393 = vmatprep.subr.bf16.mxu0 0
        %1394 = vmatpush2.bf16.msra.mxu0 0
        %1395 = vmatprep.subr.bf16.mxu0 0
        %1396 = vmatpush2.bf16.msra.mxu0 0
        %1397 = vmatprep.subr.bf16.mxu0 0
        %1398 = vmatpush2.bf16.msra.mxu0 0
        %1399 = vmatprep.subr.bf16.mxu0 0
        %1400 = vmatpush2.bf16.msra.mxu0 0
        %1401 = vmatprep.mubr.bf16.mxu0 0
        %1402 = vmatmul.mubr.bf16.gmra.mxu0 %v1352
        %v1403 = vpop.f32.mrf.mxu0
        %v1404 = vadd.f32 0.0, %v1403
        %v1405 = vpop.f32.mrf.mxu0
        %v1406 = vpop.f32.mrf.mxu0
        %v1407 = vadd.f32 0.0, %v1406
        %v1408 = vpop.f32.mrf.mxu0
        %1409 = vmatprep.mubr.bf16.mxu0 0
        %1410 = vmatmul.mubr.bf16.gmra.mxu0 %v1355
        %v1411 = vpop.f32.mrf.mxu0
        %v1412 = vadd.f32 0.0, %v1411
        %v1413 = vpop.f32.mrf.mxu0
        %v1414 = vpop.f32.mrf.mxu0
        %v1415 = vadd.f32 0.0, %v1414
        %v1416 = vpop.f32.mrf.mxu0
        %1417 = vmatprep.mubr.bf16.mxu0 0
        %1418 = vmatmul.mubr.bf16.gmra.mxu0 %v1358
        %v1419 = vpop.f32.mrf.mxu0
        %v1420 = vadd.f32 0.0, %v1419
        %v1421 = vpop.f32.mrf.mxu0
        %v1422 = vpop.f32.mrf.mxu0
        %v1423 = vadd.f32 0.0, %v1422
        %v1424 = vpop.f32.mrf.mxu0
        %1425 = vmatprep.mubr.bf16.mxu0 0
        %1426 = vmatmul.mubr.bf16.gmra.mxu0 %v1361
        %v1427 = vpop.f32.mrf.mxu0
        %v1428 = vadd.f32 0.0, %v1427
        %v1429 = vpop.f32.mrf.mxu0
        %v1430 = vpop.f32.mrf.mxu0
        %v1431 = vadd.f32 0.0, %v1430
        %v1432 = vpop.f32.mrf.mxu0
        %1433 = vmatprep.mubr.bf16.mxu0 0
        %1434 = vmatmul.mubr.bf16.gmra.mxu0 %v1364
        %v1435 = vpop.f32.mrf.mxu0
        %v1436 = vadd.f32 0.0, %v1435
        %v1437 = vpop.f32.mrf.mxu0
        %v1438 = vpop.f32.mrf.mxu0
        %v1439 = vpop.f32.mrf.mxu0
        %1440 = vdwg.mxu0
        %v1441 = vadd.f32 %v1326, %v1404
        %v1442 = vadd.f32 %v1327, %v1407
        %v1443 = vadd.f32 %v1328, %v1412
        %v1444 = vadd.f32 %v1329, %v1415
        %v1445 = vadd.f32 %v1330, %v1420
        %v1446 = vadd.f32 %v1331, %v1423
        %v1447 = vadd.f32 %v1332, %v1428
        %v1448 = vadd.f32 %v1333, %v1431
        %v1449 = vadd.f32 %v1334, %v1436
        %v1450 = vld [vmem:[%s303 + $0xa] sm:$0xff]
        %v1451 = vld [vmem:[%s303 + $0x12] sm:$0xff]
        %v1452 = vld [vmem:[%s303 + $0x1a] sm:$0xff]
        %v1453 = vld [vmem:[%s303 + $0x22] sm:$0xff]
        %v1454 = vld [vmem:[%s303 + $0x2a] sm:$0xff]
        %v1455 = vld [vmem:[%s303 + $0x32] sm:$0xff]
        %v1456 = vld [vmem:[%s303 + $0x3a] sm:$0xff]
        %v1457 = vld [vmem:[%s303 + $0x42] sm:$0xff]
        %v1458 = vld [vmem:[%s303 + $0x4a] sm:$0x7f]
        %v1459 = vpack.c.bf16 %v1451, %v1450
        %v1460 = vpack.c.bf16 %v1453, %v1452
        %v1461 = vpack.c.bf16 %v1455, %v1454
        %v1462 = vpack.c.bf16 %v1457, %v1456
        %v1463 = vpack.c.bf16 %v1458, %v1458
        %s1464 = scalar_lea.vmem %s2, 20
        %v1465 = vld [vmem:[%s1464] sm:$0x3]
        %v1467 = vsel %vm345, %v1459, 0
        %v1470 = vsel %vm345, %v1460, 0
        %v1473 = vsel %vm345, %v1461, 0
        %v1476 = vsel %vm345, %v1462, 0
        %v1479 = vsel %vm345, %v1463, 0
        %v1482 = vand.u32 %v1465, %v364
        %1484 = vmatprep.subr.bf16.mxu0 0
        %1485 = vmatpush1.bf16.msra.mxu0 0
        %1486 = vmatprep.subr.bf16.mxu0 0
        %1487 = vmatpush1.bf16.msra.mxu0 0
        %1488 = vmatprep.subr.bf16.mxu0 0
        %1489 = vmatpush1.bf16.msra.mxu0 0
        %1490 = vmatprep.subr.bf16.mxu0 0
        %1491 = vmatpush1.bf16.msra.mxu0 0
        %1492 = vmatprep.subr.bf16.mxu0 0
        %1493 = vmatpush1.bf16.msra.mxu0 0
        %1494 = vmatprep.subr.bf16.mxu0 0
        %1495 = vmatpush1.bf16.msra.mxu0 0
        %1496 = vmatprep.subr.bf16.mxu0 0
        %1497 = vmatpush1.bf16.msra.mxu0 0
        %1498 = vmatprep.subr.bf16.mxu0 0
        %1499 = vmatpush1.bf16.msra.mxu0 %v1482
        %1500 = vmatprep.subr.bf16.mxu0 0
        %1501 = vmatpush2.bf16.msra.mxu0 0
        %1502 = vmatprep.subr.bf16.mxu0 0
        %1503 = vmatpush2.bf16.msra.mxu0 0
        %1504 = vmatprep.subr.bf16.mxu0 0
        %1505 = vmatpush2.bf16.msra.mxu0 0
        %1506 = vmatprep.subr.bf16.mxu0 0
        %1507 = vmatpush2.bf16.msra.mxu0 0
        %1508 = vmatprep.subr.bf16.mxu0 0
        %1509 = vmatpush2.bf16.msra.mxu0 0
        %1510 = vmatprep.subr.bf16.mxu0 0
        %1511 = vmatpush2.bf16.msra.mxu0 0
        %1512 = vmatprep.subr.bf16.mxu0 0
        %1513 = vmatpush2.bf16.msra.mxu0 0
        %1514 = vmatprep.subr.bf16.mxu0 0
        %1515 = vmatpush2.bf16.msra.mxu0 0
        %1516 = vmatprep.mubr.bf16.mxu0 0
        %1517 = vmatmul.mubr.bf16.gmra.mxu0 %v1467
        %v1518 = vpop.f32.mrf.mxu0
        %v1519 = vadd.f32 0.0, %v1518
        %v1520 = vpop.f32.mrf.mxu0
        %v1521 = vpop.f32.mrf.mxu0
        %v1522 = vadd.f32 0.0, %v1521
        %v1523 = vpop.f32.mrf.mxu0
        %1524 = vmatprep.mubr.bf16.mxu0 0
        %1525 = vmatmul.mubr.bf16.gmra.mxu0 %v1470
        %v1526 = vpop.f32.mrf.mxu0
        %v1527 = vadd.f32 0.0, %v1526
        %v1528 = vpop.f32.mrf.mxu0
        %v1529 = vpop.f32.mrf.mxu0
        %v1530 = vadd.f32 0.0, %v1529
        %v1531 = vpop.f32.mrf.mxu0
        %1532 = vmatprep.mubr.bf16.mxu0 0
        %1533 = vmatmul.mubr.bf16.gmra.mxu0 %v1473
        %v1534 = vpop.f32.mrf.mxu0
        %v1535 = vadd.f32 0.0, %v1534
        %v1536 = vpop.f32.mrf.mxu0
        %v1537 = vpop.f32.mrf.mxu0
        %v1538 = vadd.f32 0.0, %v1537
        %v1539 = vpop.f32.mrf.mxu0
        %1540 = vmatprep.mubr.bf16.mxu0 0
        %1541 = vmatmul.mubr.bf16.gmra.mxu0 %v1476
        %v1542 = vpop.f32.mrf.mxu0
        %v1543 = vadd.f32 0.0, %v1542
        %v1544 = vpop.f32.mrf.mxu0
        %v1545 = vpop.f32.mrf.mxu0
        %v1546 = vadd.f32 0.0, %v1545
        %v1547 = vpop.f32.mrf.mxu0
        %1548 = vmatprep.mubr.bf16.mxu0 0
        %1549 = vmatmul.mubr.bf16.gmra.mxu0 %v1479
        %v1550 = vpop.f32.mrf.mxu0
        %v1551 = vadd.f32 0.0, %v1550
        %v1552 = vpop.f32.mrf.mxu0
        %v1553 = vpop.f32.mrf.mxu0
        %v1554 = vpop.f32.mrf.mxu0
        %1555 = vdwg.mxu0
        %v1556 = vadd.f32 %v1441, %v1519
        %v1557 = vadd.f32 %v1442, %v1522
        %v1558 = vadd.f32 %v1443, %v1527
        %v1559 = vadd.f32 %v1444, %v1530
        %v1560 = vadd.f32 %v1445, %v1535
        %v1561 = vadd.f32 %v1446, %v1538
        %v1562 = vadd.f32 %v1447, %v1543
        %v1563 = vadd.f32 %v1448, %v1546
        %v1564 = vadd.f32 %v1449, %v1551
        %v1565 = vld [vmem:[%s303 + $0x62] sm:$0xff]
        %v1566 = vld [vmem:[%s303 + $0x6a] sm:$0xff]
        %v1567 = vld [vmem:[%s303 + $0x72] sm:$0xff]
        %v1568 = vld [vmem:[%s303 + $0x7a] sm:$0xff]
        %v1569 = vld [vmem:[%s303 + $0x82] sm:$0xff]
        %v1570 = vld [vmem:[%s303 + $0x8a] sm:$0xff]
        %v1571 = vld [vmem:[%s303 + $0x92] sm:$0xff]
        %v1572 = vld [vmem:[%s303 + $0x9a] sm:$0xff]
        %v1573 = vld [vmem:[%s303 + $0xa2] sm:$0x7f]
        %v1574 = vpack.c.bf16 %v1566, %v1565
        %v1575 = vpack.c.bf16 %v1568, %v1567
        %v1576 = vpack.c.bf16 %v1570, %v1569
        %v1577 = vpack.c.bf16 %v1572, %v1571
        %v1578 = vpack.c.bf16 %v1573, %v1573
        %s1579 = scalar_lea.vmem %s2, 22
        %v1580 = vld [vmem:[%s1579] sm:$0x3]
        %v1582 = vsel %vm345, %v1574, 0
        %v1585 = vsel %vm345, %v1575, 0
        %v1588 = vsel %vm345, %v1576, 0
        %v1591 = vsel %vm345, %v1577, 0
        %v1594 = vsel %vm345, %v1578, 0
        %v1597 = vand.u32 %v1580, %v364
        %1599 = vmatprep.subr.bf16.mxu0 0
        %1600 = vmatpush1.bf16.msra.mxu0 0
        %1601 = vmatprep.subr.bf16.mxu0 0
        %1602 = vmatpush1.bf16.msra.mxu0 0
        %1603 = vmatprep.subr.bf16.mxu0 0
        %1604 = vmatpush1.bf16.msra.mxu0 0
        %1605 = vmatprep.subr.bf16.mxu0 0
        %1606 = vmatpush1.bf16.msra.mxu0 0
        %1607 = vmatprep.subr.bf16.mxu0 0
        %1608 = vmatpush1.bf16.msra.mxu0 0
        %1609 = vmatprep.subr.bf16.mxu0 0
        %1610 = vmatpush1.bf16.msra.mxu0 0
        %1611 = vmatprep.subr.bf16.mxu0 0
        %1612 = vmatpush1.bf16.msra.mxu0 0
        %1613 = vmatprep.subr.bf16.mxu0 0
        %1614 = vmatpush1.bf16.msra.mxu0 %v1597
        %1615 = vmatprep.subr.bf16.mxu0 0
        %1616 = vmatpush2.bf16.msra.mxu0 0
        %1617 = vmatprep.subr.bf16.mxu0 0
        %1618 = vmatpush2.bf16.msra.mxu0 0
        %1619 = vmatprep.subr.bf16.mxu0 0
        %1620 = vmatpush2.bf16.msra.mxu0 0
        %1621 = vmatprep.subr.bf16.mxu0 0
        %1622 = vmatpush2.bf16.msra.mxu0 0
        %1623 = vmatprep.subr.bf16.mxu0 0
        %1624 = vmatpush2.bf16.msra.mxu0 0
        %1625 = vmatprep.subr.bf16.mxu0 0
        %1626 = vmatpush2.bf16.msra.mxu0 0
        %1627 = vmatprep.subr.bf16.mxu0 0
        %1628 = vmatpush2.bf16.msra.mxu0 0
        %1629 = vmatprep.subr.bf16.mxu0 0
        %1630 = vmatpush2.bf16.msra.mxu0 0
        %1631 = vmatprep.mubr.bf16.mxu0 0
        %1632 = vmatmul.mubr.bf16.gmra.mxu0 %v1582
        %v1633 = vpop.f32.mrf.mxu0
        %v1634 = vadd.f32 0.0, %v1633
        %v1635 = vpop.f32.mrf.mxu0
        %v1636 = vpop.f32.mrf.mxu0
        %v1637 = vadd.f32 0.0, %v1636
        %v1638 = vpop.f32.mrf.mxu0
        %1639 = vmatprep.mubr.bf16.mxu0 0
        %1640 = vmatmul.mubr.bf16.gmra.mxu0 %v1585
        %v1641 = vpop.f32.mrf.mxu0
        %v1642 = vadd.f32 0.0, %v1641
        %v1643 = vpop.f32.mrf.mxu0
        %v1644 = vpop.f32.mrf.mxu0
        %v1645 = vadd.f32 0.0, %v1644
        %v1646 = vpop.f32.mrf.mxu0
        %1647 = vmatprep.mubr.bf16.mxu0 0
        %1648 = vmatmul.mubr.bf16.gmra.mxu0 %v1588
        %v1649 = vpop.f32.mrf.mxu0
        %v1650 = vadd.f32 0.0, %v1649
        %v1651 = vpop.f32.mrf.mxu0
        %v1652 = vpop.f32.mrf.mxu0
        %v1653 = vadd.f32 0.0, %v1652
        %v1654 = vpop.f32.mrf.mxu0
        %1655 = vmatprep.mubr.bf16.mxu0 0
        %1656 = vmatmul.mubr.bf16.gmra.mxu0 %v1591
        %v1657 = vpop.f32.mrf.mxu0
        %v1658 = vadd.f32 0.0, %v1657
        %v1659 = vpop.f32.mrf.mxu0
        %v1660 = vpop.f32.mrf.mxu0
        %v1661 = vadd.f32 0.0, %v1660
        %v1662 = vpop.f32.mrf.mxu0
        %1663 = vmatprep.mubr.bf16.mxu0 0
        %1664 = vmatmul.mubr.bf16.gmra.mxu0 %v1594
        %v1665 = vpop.f32.mrf.mxu0
        %v1666 = vadd.f32 0.0, %v1665
        %v1667 = vpop.f32.mrf.mxu0
        %v1668 = vpop.f32.mrf.mxu0
        %v1669 = vpop.f32.mrf.mxu0
        %1670 = vdwg.mxu0
        %v1671 = vadd.f32 %v1556, %v1634
        %v1672 = vadd.f32 %v1557, %v1637
        %v1673 = vadd.f32 %v1558, %v1642
        %v1674 = vadd.f32 %v1559, %v1645
        %v1675 = vadd.f32 %v1560, %v1650
        %v1676 = vadd.f32 %v1561, %v1653
        %v1677 = vadd.f32 %v1562, %v1658
        %v1678 = vadd.f32 %v1563, %v1661
        %v1679 = vadd.f32 %v1564, %v1666
        %v1680 = vld [vmem:[%s303 + $0xb9] sm:$0xff]
        %v1681 = vld [vmem:[%s303 + $0xc1] sm:$0xff]
        %v1682 = vld [vmem:[%s303 + $0xc9] sm:$0xff]
        %v1683 = vld [vmem:[%s303 + $0xd1] sm:$0xff]
        %v1684 = vld [vmem:[%s303 + $0xd9] sm:$0xff]
        %v1685 = vld [vmem:[%s303 + $0xe1] sm:$0xff]
        %v1686 = vld [vmem:[%s303 + $0xe9] sm:$0xff]
        %v1687 = vld [vmem:[%s303 + $0xf1] sm:$0xff]
        %v1688 = vld [vmem:[%s303 + $0xf9] sm:$0x7f]
        %v1689 = vpack.c.bf16 %v1681, %v1680
        %v1690 = vpack.c.bf16 %v1683, %v1682
        %v1691 = vpack.c.bf16 %v1685, %v1684
        %v1692 = vpack.c.bf16 %v1687, %v1686
        %v1693 = vpack.c.bf16 %v1688, %v1688
        %s1694 = scalar_lea.vmem %s2, 24
        %v1695 = vld [vmem:[%s1694] sm:$0x3]
        %v1697 = vsel %vm345, %v1689, 0
        %v1700 = vsel %vm345, %v1690, 0
        %v1703 = vsel %vm345, %v1691, 0
        %v1706 = vsel %vm345, %v1692, 0
        %v1709 = vsel %vm345, %v1693, 0
        %v1712 = vand.u32 %v1695, %v364
        %1714 = vmatprep.subr.bf16.mxu0 0
        %1715 = vmatpush1.bf16.msra.mxu0 0
        %1716 = vmatprep.subr.bf16.mxu0 0
        %1717 = vmatpush1.bf16.msra.mxu0 0
        %1718 = vmatprep.subr.bf16.mxu0 0
        %1719 = vmatpush1.bf16.msra.mxu0 0
        %1720 = vmatprep.subr.bf16.mxu0 0
        %1721 = vmatpush1.bf16.msra.mxu0 0
        %1722 = vmatprep.subr.bf16.mxu0 0
        %1723 = vmatpush1.bf16.msra.mxu0 0
        %1724 = vmatprep.subr.bf16.mxu0 0
        %1725 = vmatpush1.bf16.msra.mxu0 0
        %1726 = vmatprep.subr.bf16.mxu0 0
        %1727 = vmatpush1.bf16.msra.mxu0 0
        %1728 = vmatprep.subr.bf16.mxu0 0
        %1729 = vmatpush1.bf16.msra.mxu0 %v1712
        %1730 = vmatprep.subr.bf16.mxu0 0
        %1731 = vmatpush2.bf16.msra.mxu0 0
        %1732 = vmatprep.subr.bf16.mxu0 0
        %1733 = vmatpush2.bf16.msra.mxu0 0
        %1734 = vmatprep.subr.bf16.mxu0 0
        %1735 = vmatpush2.bf16.msra.mxu0 0
        %1736 = vmatprep.subr.bf16.mxu0 0
        %1737 = vmatpush2.bf16.msra.mxu0 0
        %1738 = vmatprep.subr.bf16.mxu0 0
        %1739 = vmatpush2.bf16.msra.mxu0 0
        %1740 = vmatprep.subr.bf16.mxu0 0
        %1741 = vmatpush2.bf16.msra.mxu0 0
        %1742 = vmatprep.subr.bf16.mxu0 0
        %1743 = vmatpush2.bf16.msra.mxu0 0
        %1744 = vmatprep.subr.bf16.mxu0 0
        %1745 = vmatpush2.bf16.msra.mxu0 0
        %1746 = vmatprep.mubr.bf16.mxu0 0
        %1747 = vmatmul.mubr.bf16.gmra.mxu0 %v1697
        %v1748 = vpop.f32.mrf.mxu0
        %v1749 = vadd.f32 0.0, %v1748
        %v1750 = vpop.f32.mrf.mxu0
        %v1751 = vpop.f32.mrf.mxu0
        %v1752 = vadd.f32 0.0, %v1751
        %v1753 = vpop.f32.mrf.mxu0
        %1754 = vmatprep.mubr.bf16.mxu0 0
        %1755 = vmatmul.mubr.bf16.gmra.mxu0 %v1700
        %v1756 = vpop.f32.mrf.mxu0
        %v1757 = vadd.f32 0.0, %v1756
        %v1758 = vpop.f32.mrf.mxu0
        %v1759 = vpop.f32.mrf.mxu0
        %v1760 = vadd.f32 0.0, %v1759
        %v1761 = vpop.f32.mrf.mxu0
        %1762 = vmatprep.mubr.bf16.mxu0 0
        %1763 = vmatmul.mubr.bf16.gmra.mxu0 %v1703
        %v1764 = vpop.f32.mrf.mxu0
        %v1765 = vadd.f32 0.0, %v1764
        %v1766 = vpop.f32.mrf.mxu0
        %v1767 = vpop.f32.mrf.mxu0
        %v1768 = vadd.f32 0.0, %v1767
        %v1769 = vpop.f32.mrf.mxu0
        %1770 = vmatprep.mubr.bf16.mxu0 0
        %1771 = vmatmul.mubr.bf16.gmra.mxu0 %v1706
        %v1772 = vpop.f32.mrf.mxu0
        %v1773 = vadd.f32 0.0, %v1772
        %v1774 = vpop.f32.mrf.mxu0
        %v1775 = vpop.f32.mrf.mxu0
        %v1776 = vadd.f32 0.0, %v1775
        %v1777 = vpop.f32.mrf.mxu0
        %1778 = vmatprep.mubr.bf16.mxu0 0
        %1779 = vmatmul.mubr.bf16.gmra.mxu0 %v1709
        %v1780 = vpop.f32.mrf.mxu0
        %v1781 = vadd.f32 0.0, %v1780
        %v1782 = vpop.f32.mrf.mxu0
        %v1783 = vpop.f32.mrf.mxu0
        %v1784 = vpop.f32.mrf.mxu0
        %1785 = vdwg.mxu0
        %v1786 = vadd.f32 %v1671, %v1749
        %v1787 = vadd.f32 %v1672, %v1752
        %v1788 = vadd.f32 %v1673, %v1757
        %v1789 = vadd.f32 %v1674, %v1760
        %v1790 = vadd.f32 %v1675, %v1765
        %v1791 = vadd.f32 %v1676, %v1768
        %v1792 = vadd.f32 %v1677, %v1773
        %v1793 = vadd.f32 %v1678, %v1776
        %v1794 = vadd.f32 %v1679, %v1781
        %v1795 = vld [vmem:[%s303 + $0x111] sm:$0xff]
        %v1796 = vld [vmem:[%s303 + $0x119] sm:$0xff]
        %v1797 = vld [vmem:[%s303 + $0x121] sm:$0xff]
        %v1798 = vld [vmem:[%s303 + $0x129] sm:$0xff]
        %v1799 = vld [vmem:[%s303 + $0x131] sm:$0xff]
        %v1800 = vld [vmem:[%s303 + $0x139] sm:$0xff]
        %v1801 = vld [vmem:[%s303 + $0x141] sm:$0xff]
        %v1802 = vld [vmem:[%s303 + $0x149] sm:$0xff]
        %v1803 = vld [vmem:[%s303 + $0x151] sm:$0x7f]
        %v1804 = vpack.c.bf16 %v1796, %v1795
        %v1805 = vpack.c.bf16 %v1798, %v1797
        %v1806 = vpack.c.bf16 %v1800, %v1799
        %v1807 = vpack.c.bf16 %v1802, %v1801
        %v1808 = vpack.c.bf16 %v1803, %v1803
        %s1809 = scalar_lea.vmem %s2, 26
        %v1810 = vld [vmem:[%s1809] sm:$0x3]
        %v1812 = vsel %vm345, %v1804, 0
        %v1815 = vsel %vm345, %v1805, 0
        %v1818 = vsel %vm345, %v1806, 0
        %v1821 = vsel %vm345, %v1807, 0
        %v1824 = vsel %vm345, %v1808, 0
        %v1827 = vand.u32 %v1810, %v364
        %1829 = vmatprep.subr.bf16.mxu0 0
        %1830 = vmatpush1.bf16.msra.mxu0 0
        %1831 = vmatprep.subr.bf16.mxu0 0
        %1832 = vmatpush1.bf16.msra.mxu0 0
        %1833 = vmatprep.subr.bf16.mxu0 0
        %1834 = vmatpush1.bf16.msra.mxu0 0
        %1835 = vmatprep.subr.bf16.mxu0 0
        %1836 = vmatpush1.bf16.msra.mxu0 0
        %1837 = vmatprep.subr.bf16.mxu0 0
        %1838 = vmatpush1.bf16.msra.mxu0 0
        %1839 = vmatprep.subr.bf16.mxu0 0
        %1840 = vmatpush1.bf16.msra.mxu0 0
        %1841 = vmatprep.subr.bf16.mxu0 0
        %1842 = vmatpush1.bf16.msra.mxu0 0
        %1843 = vmatprep.subr.bf16.mxu0 0
        %1844 = vmatpush1.bf16.msra.mxu0 %v1827
        %1845 = vmatprep.subr.bf16.mxu0 0
        %1846 = vmatpush2.bf16.msra.mxu0 0
        %1847 = vmatprep.subr.bf16.mxu0 0
        %1848 = vmatpush2.bf16.msra.mxu0 0
        %1849 = vmatprep.subr.bf16.mxu0 0
        %1850 = vmatpush2.bf16.msra.mxu0 0
        %1851 = vmatprep.subr.bf16.mxu0 0
        %1852 = vmatpush2.bf16.msra.mxu0 0
        %1853 = vmatprep.subr.bf16.mxu0 0
        %1854 = vmatpush2.bf16.msra.mxu0 0
        %1855 = vmatprep.subr.bf16.mxu0 0
        %1856 = vmatpush2.bf16.msra.mxu0 0
        %1857 = vmatprep.subr.bf16.mxu0 0
        %1858 = vmatpush2.bf16.msra.mxu0 0
        %1859 = vmatprep.subr.bf16.mxu0 0
        %1860 = vmatpush2.bf16.msra.mxu0 0
        %1861 = vmatprep.mubr.bf16.mxu0 0
        %1862 = vmatmul.mubr.bf16.gmra.mxu0 %v1812
        %v1863 = vpop.f32.mrf.mxu0
        %v1864 = vadd.f32 0.0, %v1863
        %v1865 = vpop.f32.mrf.mxu0
        %v1866 = vpop.f32.mrf.mxu0
        %v1867 = vadd.f32 0.0, %v1866
        %v1868 = vpop.f32.mrf.mxu0
        %1869 = vmatprep.mubr.bf16.mxu0 0
        %1870 = vmatmul.mubr.bf16.gmra.mxu0 %v1815
        %v1871 = vpop.f32.mrf.mxu0
        %v1872 = vadd.f32 0.0, %v1871
        %v1873 = vpop.f32.mrf.mxu0
        %v1874 = vpop.f32.mrf.mxu0
        %v1875 = vadd.f32 0.0, %v1874
        %v1876 = vpop.f32.mrf.mxu0
        %1877 = vmatprep.mubr.bf16.mxu0 0
        %1878 = vmatmul.mubr.bf16.gmra.mxu0 %v1818
        %v1879 = vpop.f32.mrf.mxu0
        %v1880 = vadd.f32 0.0, %v1879
        %v1881 = vpop.f32.mrf.mxu0
        %v1882 = vpop.f32.mrf.mxu0
        %v1883 = vadd.f32 0.0, %v1882
        %v1884 = vpop.f32.mrf.mxu0
        %1885 = vmatprep.mubr.bf16.mxu0 0
        %1886 = vmatmul.mubr.bf16.gmra.mxu0 %v1821
        %v1887 = vpop.f32.mrf.mxu0
        %v1888 = vadd.f32 0.0, %v1887
        %v1889 = vpop.f32.mrf.mxu0
        %v1890 = vpop.f32.mrf.mxu0
        %v1891 = vadd.f32 0.0, %v1890
        %v1892 = vpop.f32.mrf.mxu0
        %1893 = vmatprep.mubr.bf16.mxu0 0
        %1894 = vmatmul.mubr.bf16.gmra.mxu0 %v1824
        %v1895 = vpop.f32.mrf.mxu0
        %v1896 = vadd.f32 0.0, %v1895
        %v1897 = vpop.f32.mrf.mxu0
        %v1898 = vpop.f32.mrf.mxu0
        %v1899 = vpop.f32.mrf.mxu0
        %1900 = vdwg.mxu0
        %v1901 = vadd.f32 %v1786, %v1864
        %v1902 = vadd.f32 %v1787, %v1867
        %v1903 = vadd.f32 %v1788, %v1872
        %v1904 = vadd.f32 %v1789, %v1875
        %v1905 = vadd.f32 %v1790, %v1880
        %v1906 = vadd.f32 %v1791, %v1883
        %v1907 = vadd.f32 %v1792, %v1888
        %v1908 = vadd.f32 %v1793, %v1891
        %v1909 = vadd.f32 %v1794, %v1896
        %v1910 = vld [vmem:[%s303 + $0xba] sm:$0xff]
        %v1911 = vld [vmem:[%s303 + $0xc2] sm:$0xff]
        %v1912 = vld [vmem:[%s303 + $0xca] sm:$0xff]
        %v1913 = vld [vmem:[%s303 + $0xd2] sm:$0xff]
        %v1914 = vld [vmem:[%s303 + $0xda] sm:$0xff]
        %v1915 = vld [vmem:[%s303 + $0xe2] sm:$0xff]
        %v1916 = vld [vmem:[%s303 + $0xea] sm:$0xff]
        %v1917 = vld [vmem:[%s303 + $0xf2] sm:$0xff]
        %v1918 = vld [vmem:[%s303 + $0xfa] sm:$0x7f]
        %v1919 = vpack.c.bf16 %v1911, %v1910
        %v1920 = vpack.c.bf16 %v1913, %v1912
        %v1921 = vpack.c.bf16 %v1915, %v1914
        %v1922 = vpack.c.bf16 %v1917, %v1916
        %v1923 = vpack.c.bf16 %v1918, %v1918
        %s1924 = scalar_lea.vmem %s2, 28
        %v1925 = vld [vmem:[%s1924] sm:$0x3]
        %v1927 = vsel %vm345, %v1919, 0
        %v1930 = vsel %vm345, %v1920, 0
        %v1933 = vsel %vm345, %v1921, 0
        %v1936 = vsel %vm345, %v1922, 0
        %v1939 = vsel %vm345, %v1923, 0
        %v1942 = vand.u32 %v1925, %v364
        %1944 = vmatprep.subr.bf16.mxu0 0
        %1945 = vmatpush1.bf16.msra.mxu0 0
        %1946 = vmatprep.subr.bf16.mxu0 0
        %1947 = vmatpush1.bf16.msra.mxu0 0
        %1948 = vmatprep.subr.bf16.mxu0 0
        %1949 = vmatpush1.bf16.msra.mxu0 0
        %1950 = vmatprep.subr.bf16.mxu0 0
        %1951 = vmatpush1.bf16.msra.mxu0 0
        %1952 = vmatprep.subr.bf16.mxu0 0
        %1953 = vmatpush1.bf16.msra.mxu0 0
        %1954 = vmatprep.subr.bf16.mxu0 0
        %1955 = vmatpush1.bf16.msra.mxu0 0
        %1956 = vmatprep.subr.bf16.mxu0 0
        %1957 = vmatpush1.bf16.msra.mxu0 0
        %1958 = vmatprep.subr.bf16.mxu0 0
        %1959 = vmatpush1.bf16.msra.mxu0 %v1942
        %1960 = vmatprep.subr.bf16.mxu0 0
        %1961 = vmatpush2.bf16.msra.mxu0 0
        %1962 = vmatprep.subr.bf16.mxu0 0
        %1963 = vmatpush2.bf16.msra.mxu0 0
        %1964 = vmatprep.subr.bf16.mxu0 0
        %1965 = vmatpush2.bf16.msra.mxu0 0
        %1966 = vmatprep.subr.bf16.mxu0 0
        %1967 = vmatpush2.bf16.msra.mxu0 0
        %1968 = vmatprep.subr.bf16.mxu0 0
        %1969 = vmatpush2.bf16.msra.mxu0 0
        %1970 = vmatprep.subr.bf16.mxu0 0
        %1971 = vmatpush2.bf16.msra.mxu0 0
        %1972 = vmatprep.subr.bf16.mxu0 0
        %1973 = vmatpush2.bf16.msra.mxu0 0
        %1974 = vmatprep.subr.bf16.mxu0 0
        %1975 = vmatpush2.bf16.msra.mxu0 0
        %1976 = vmatprep.mubr.bf16.mxu0 0
        %1977 = vmatmul.mubr.bf16.gmra.mxu0 %v1927
        %v1978 = vpop.f32.mrf.mxu0
        %v1979 = vadd.f32 0.0, %v1978
        %v1980 = vpop.f32.mrf.mxu0
        %v1981 = vpop.f32.mrf.mxu0
        %v1982 = vadd.f32 0.0, %v1981
        %v1983 = vpop.f32.mrf.mxu0
        %1984 = vmatprep.mubr.bf16.mxu0 0
        %1985 = vmatmul.mubr.bf16.gmra.mxu0 %v1930
        %v1986 = vpop.f32.mrf.mxu0
        %v1987 = vadd.f32 0.0, %v1986
        %v1988 = vpop.f32.mrf.mxu0
        %v1989 = vpop.f32.mrf.mxu0
        %v1990 = vadd.f32 0.0, %v1989
        %v1991 = vpop.f32.mrf.mxu0
        %1992 = vmatprep.mubr.bf16.mxu0 0
        %1993 = vmatmul.mubr.bf16.gmra.mxu0 %v1933
        %v1994 = vpop.f32.mrf.mxu0
        %v1995 = vadd.f32 0.0, %v1994
        %v1996 = vpop.f32.mrf.mxu0
        %v1997 = vpop.f32.mrf.mxu0
        %v1998 = vadd.f32 0.0, %v1997
        %v1999 = vpop.f32.mrf.mxu0
        %2000 = vmatprep.mubr.bf16.mxu0 0
        %2001 = vmatmul.mubr.bf16.gmra.mxu0 %v1936
        %v2002 = vpop.f32.mrf.mxu0
        %v2003 = vadd.f32 0.0, %v2002
        %v2004 = vpop.f32.mrf.mxu0
        %v2005 = vpop.f32.mrf.mxu0
        %v2006 = vadd.f32 0.0, %v2005
        %v2007 = vpop.f32.mrf.mxu0
        %2008 = vmatprep.mubr.bf16.mxu0 0
        %2009 = vmatmul.mubr.bf16.gmra.mxu0 %v1939
        %v2010 = vpop.f32.mrf.mxu0
        %v2011 = vadd.f32 0.0, %v2010
        %v2012 = vpop.f32.mrf.mxu0
        %v2013 = vpop.f32.mrf.mxu0
        %v2014 = vpop.f32.mrf.mxu0
        %2015 = vdwg.mxu0
        %v2016 = vadd.f32 %v1901, %v1979
        %v2017 = vadd.f32 %v1902, %v1982
        %v2018 = vadd.f32 %v1903, %v1987
        %v2019 = vadd.f32 %v1904, %v1990
        %v2020 = vadd.f32 %v1905, %v1995
        %v2021 = vadd.f32 %v1906, %v1998
        %v2022 = vadd.f32 %v1907, %v2003
        %v2023 = vadd.f32 %v1908, %v2006
        %v2024 = vadd.f32 %v1909, %v2011
        %v2025 = vld [vmem:[%s303 + $0x112] sm:$0xff]
        %v2026 = vld [vmem:[%s303 + $0x11a] sm:$0xff]
        %v2027 = vld [vmem:[%s303 + $0x122] sm:$0xff]
        %v2028 = vld [vmem:[%s303 + $0x12a] sm:$0xff]
        %v2029 = vld [vmem:[%s303 + $0x132] sm:$0xff]
        %v2030 = vld [vmem:[%s303 + $0x13a] sm:$0xff]
        %v2031 = vld [vmem:[%s303 + $0x142] sm:$0xff]
        %v2032 = vld [vmem:[%s303 + $0x14a] sm:$0xff]
        %v2033 = vld [vmem:[%s303 + $0x152] sm:$0x7f]
        %v2034 = vpack.c.bf16 %v2026, %v2025
        %v2035 = vpack.c.bf16 %v2028, %v2027
        %v2036 = vpack.c.bf16 %v2030, %v2029
        %v2037 = vpack.c.bf16 %v2032, %v2031
        %v2038 = vpack.c.bf16 %v2033, %v2033
        %s2039 = scalar_lea.vmem %s2, 30
        %v2040 = vld [vmem:[%s2039] sm:$0x3]
        %v2042 = vsel %vm345, %v2034, 0
        %v2045 = vsel %vm345, %v2035, 0
        %v2048 = vsel %vm345, %v2036, 0
        %v2051 = vsel %vm345, %v2037, 0
        %v2054 = vsel %vm345, %v2038, 0
        %v2057 = vand.u32 %v2040, %v364
        %2059 = vmatprep.subr.bf16.mxu0 0
        %2060 = vmatpush1.bf16.msra.mxu0 0
        %2061 = vmatprep.subr.bf16.mxu0 0
        %2062 = vmatpush1.bf16.msra.mxu0 0
        %2063 = vmatprep.subr.bf16.mxu0 0
        %2064 = vmatpush1.bf16.msra.mxu0 0
        %2065 = vmatprep.subr.bf16.mxu0 0
        %2066 = vmatpush1.bf16.msra.mxu0 0
        %2067 = vmatprep.subr.bf16.mxu0 0
        %2068 = vmatpush1.bf16.msra.mxu0 0
        %2069 = vmatprep.subr.bf16.mxu0 0
        %2070 = vmatpush1.bf16.msra.mxu0 0
        %2071 = vmatprep.subr.bf16.mxu0 0
        %2072 = vmatpush1.bf16.msra.mxu0 0
        %2073 = vmatprep.subr.bf16.mxu0 0
        %2074 = vmatpush1.bf16.msra.mxu0 %v2057
        %2075 = vmatprep.subr.bf16.mxu0 0
        %2076 = vmatpush2.bf16.msra.mxu0 0
        %2077 = vmatprep.subr.bf16.mxu0 0
        %2078 = vmatpush2.bf16.msra.mxu0 0
        %2079 = vmatprep.subr.bf16.mxu0 0
        %2080 = vmatpush2.bf16.msra.mxu0 0
        %2081 = vmatprep.subr.bf16.mxu0 0
        %2082 = vmatpush2.bf16.msra.mxu0 0
        %2083 = vmatprep.subr.bf16.mxu0 0
        %2084 = vmatpush2.bf16.msra.mxu0 0
        %2085 = vmatprep.subr.bf16.mxu0 0
        %2086 = vmatpush2.bf16.msra.mxu0 0
        %2087 = vmatprep.subr.bf16.mxu0 0
        %2088 = vmatpush2.bf16.msra.mxu0 0
        %2089 = vmatprep.subr.bf16.mxu0 0
        %2090 = vmatpush2.bf16.msra.mxu0 0
        %2091 = vmatprep.mubr.bf16.mxu0 0
        %2092 = vmatmul.mubr.bf16.gmra.mxu0 %v2042
        %v2093 = vpop.f32.mrf.mxu0
        %v2094 = vadd.f32 0.0, %v2093
        %v2095 = vpop.f32.mrf.mxu0
        %v2096 = vpop.f32.mrf.mxu0
        %v2097 = vadd.f32 0.0, %v2096
        %v2098 = vpop.f32.mrf.mxu0
        %2099 = vmatprep.mubr.bf16.mxu0 0
        %2100 = vmatmul.mubr.bf16.gmra.mxu0 %v2045
        %v2101 = vpop.f32.mrf.mxu0
        %v2102 = vadd.f32 0.0, %v2101
        %v2103 = vpop.f32.mrf.mxu0
        %v2104 = vpop.f32.mrf.mxu0
        %v2105 = vadd.f32 0.0, %v2104
        %v2106 = vpop.f32.mrf.mxu0
        %2107 = vmatprep.mubr.bf16.mxu0 0
        %2108 = vmatmul.mubr.bf16.gmra.mxu0 %v2048
        %v2109 = vpop.f32.mrf.mxu0
        %v2110 = vadd.f32 0.0, %v2109
        %v2111 = vpop.f32.mrf.mxu0
        %v2112 = vpop.f32.mrf.mxu0
        %v2113 = vadd.f32 0.0, %v2112
        %v2114 = vpop.f32.mrf.mxu0
        %2115 = vmatprep.mubr.bf16.mxu0 0
        %2116 = vmatmul.mubr.bf16.gmra.mxu0 %v2051
        %v2117 = vpop.f32.mrf.mxu0
        %v2118 = vadd.f32 0.0, %v2117
        %v2119 = vpop.f32.mrf.mxu0
        %v2120 = vpop.f32.mrf.mxu0
        %v2121 = vadd.f32 0.0, %v2120
        %v2122 = vpop.f32.mrf.mxu0
        %2123 = vmatprep.mubr.bf16.mxu0 0
        %2124 = vmatmul.mubr.bf16.gmra.mxu0 %v2054
        %v2125 = vpop.f32.mrf.mxu0
        %v2126 = vadd.f32 0.0, %v2125
        %v2127 = vpop.f32.mrf.mxu0
        %v2128 = vpop.f32.mrf.mxu0
        %v2129 = vpop.f32.mrf.mxu0
        %2130 = vdwg.mxu0
        %v2131 = vadd.f32 %v2016, %v2094
        %v2132 = vadd.f32 %v2017, %v2097
        %v2133 = vadd.f32 %v2018, %v2102
        %v2134 = vadd.f32 %v2019, %v2105
        %v2135 = vadd.f32 %v2020, %v2110
        %v2136 = vadd.f32 %v2021, %v2113
        %v2137 = vadd.f32 %v2022, %v2118
        %v2138 = vadd.f32 %v2023, %v2121
        %v2139 = vadd.f32 %v2024, %v2126
        %v2140 = vld [vmem:[%s1] sm:$0x1]
        %v2141 = vlaneseq
        %v2142 = vshrl.u32 %v2141, 7
        %v2143 = vsub.s32 0, %v2142
        %v2144 = vrot.slane %v2140, %v2143
        %v2145 = vadd.f32 %v2131, %v2144
        %v2146 = vadd.f32 %v2132, %v2144
        %v2147 = vadd.f32 %v2133, %v2144
        %v2148 = vadd.f32 %v2134, %v2144
        %v2149 = vadd.f32 %v2135, %v2144
        %v2150 = vadd.f32 %v2136, %v2144
        %v2151 = vadd.f32 %v2137, %v2144
        %v2152 = vadd.f32 %v2138, %v2144
        %v2153 = vadd.f32 %v2139, %v2144
        %vm2154 = vcmp.gt.f32.partialorder %v2145, 0.0
        %vm2155 = vcmp.gt.f32.partialorder %v2146, 0.0
        %vm2156 = vcmp.gt.f32.partialorder %v2147, 0.0
        %vm2157 = vcmp.gt.f32.partialorder %v2148, 0.0
        %vm2158 = vcmp.gt.f32.partialorder %v2149, 0.0
        %vm2159 = vcmp.gt.f32.partialorder %v2150, 0.0
        %vm2160 = vcmp.gt.f32.partialorder %v2151, 0.0
        %vm2161 = vcmp.gt.f32.partialorder %v2152, 0.0
        %vm2162 = vcmp.gt.f32.partialorder %v2153, 0.0
        %v2163 = vmul.f32 %v2145, 0.01
        %v2164 = vmul.f32 %v2146, 0.01
        %v2165 = vmul.f32 %v2147, 0.01
        %v2166 = vmul.f32 %v2148, 0.01
        %v2167 = vmul.f32 %v2149, 0.01
        %v2168 = vmul.f32 %v2150, 0.01
        %v2169 = vmul.f32 %v2151, 0.01
        %v2170 = vmul.f32 %v2152, 0.01
        %v2171 = vmul.f32 %v2153, 0.01
        %v2172 = vsel %vm2154, %v2145, %v2163
        %v2173 = vsel %vm2155, %v2146, %v2164
        %v2174 = vsel %vm2156, %v2147, %v2165
        %v2175 = vsel %vm2157, %v2148, %v2166
        %v2176 = vsel %vm2158, %v2149, %v2167
        %v2177 = vsel %vm2159, %v2150, %v2168
        %v2178 = vsel %vm2160, %v2151, %v2169
        %v2179 = vsel %vm2161, %v2152, %v2170
        %v2180 = vsel %vm2162, %v2153, %v2171
        %2181 = vst [vmem:[#allocation2] sm:$0xff] %v2172
        %2182 = vst [vmem:[#allocation2 + $0x8] sm:$0xff] %v2173
        %2183 = vst [vmem:[#allocation2 + $0x10] sm:$0xff] %v2174
        %2184 = vst [vmem:[#allocation2 + $0x18] sm:$0xff] %v2175
        %2185 = vst [vmem:[#allocation2 + $0x20] sm:$0xff] %v2176
        %2186 = vst [vmem:[#allocation2 + $0x28] sm:$0xff] %v2177
        %2187 = vst [vmem:[#allocation2 + $0x30] sm:$0xff] %v2178
        %2188 = vst [vmem:[#allocation2 + $0x38] sm:$0xff] %v2179
        %2189 = vst [vmem:[#allocation2 + $0x40] sm:$0x7f] %v2180
        %v2190 = vld [vmem:[#allocation2] ss:$2 sm:$0xf]
        %s2191 = scalar_lea.vmem [#allocation2], 1
        %v2192 = vld [vmem:[%s2191] ss:$2 sm:$0xf]
        %vm2193 = vcmask 1043456
        %v2194 = vsel %vm2193, %v2190, 0.0
        %2195 = vst [vmem:[#allocation3 + $0x60] sm:$0x1f] %v2194
        %v2197 = vrot.slane %v2192, 7
        %v2199 = vsel %vm361, 0.0, %v2197
        %2200 = vst [vmem:[#allocation3 + $0x40] sm:$0x1f] %v2199
        %s2201 = scalar_lea.vmem [#allocation2], 9
        %v2202 = vld [vmem:[%s2201] ss:$2 sm:$0xf]
        %s2203 = scalar_lea.vmem [#allocation2], 10
        %v2204 = vld [vmem:[%s2203] ss:$2 sm:$0xf]
        %v2205 = vsel %vm2193, %v2202, 0.0
        %2206 = vst [vmem:[#allocation3 + $0x25] sm:$0x1f] %v2205
        %v2208 = vrot.slane %v2204, 7
        %v2210 = vsel %vm361, 0.0, %v2208
        %2211 = vst [vmem:[#allocation3 + $0x5] sm:$0x1f] %v2210
        %s2212 = scalar_lea.vmem [#allocation2], 18
        %v2213 = vld [vmem:[%s2212] ss:$2 sm:$0xf]
        %s2214 = scalar_lea.vmem [#allocation2], 19
        %v2215 = vld [vmem:[%s2214] ss:$2 sm:$0xf]
        %v2216 = vsel %vm2193, %v2213, 0.0
        %2217 = vst [vmem:[#allocation3 + $0x65] sm:$0x1f] %v2216
        %v2219 = vrot.slane %v2215, 7
        %v2221 = vsel %vm361, 0.0, %v2219
        %2222 = vst [vmem:[#allocation3 + $0x45] sm:$0x1f] %v2221
        %s2223 = scalar_lea.vmem [#allocation2], 27
        %v2224 = vld [vmem:[%s2223] ss:$2 sm:$0xf]
        %s2225 = scalar_lea.vmem [#allocation2], 28
        %v2226 = vld [vmem:[%s2225] ss:$2 sm:$0xf]
        %v2227 = vsel %vm2193, %v2224, 0.0
        %2228 = vst [vmem:[#allocation3 + $0x2a] sm:$0x1f] %v2227
        %v2230 = vrot.slane %v2226, 7
        %v2232 = vsel %vm361, 0.0, %v2230
        %2233 = vst [vmem:[#allocation3 + $0xa] sm:$0x1f] %v2232
        %s2234 = scalar_lea.vmem [#allocation2], 36
        %v2235 = vld [vmem:[%s2234] ss:$2 sm:$0xf]
        %s2236 = scalar_lea.vmem [#allocation2], 37
        %v2237 = vld [vmem:[%s2236] ss:$2 sm:$0xf]
        %v2238 = vsel %vm2193, %v2235, 0.0
        %2239 = vst [vmem:[#allocation3 + $0x6a] sm:$0x1f] %v2238
        %v2241 = vrot.slane %v2237, 7
        %v2243 = vsel %vm361, 0.0, %v2241
        %2244 = vst [vmem:[#allocation3 + $0x4a] sm:$0x1f] %v2243
        %s2245 = scalar_lea.vmem [#allocation2], 45
        %v2246 = vld [vmem:[%s2245] ss:$2 sm:$0xf]
        %s2247 = scalar_lea.vmem [#allocation2], 46
        %v2248 = vld [vmem:[%s2247] ss:$2 sm:$0xf]
        %v2249 = vsel %vm2193, %v2246, 0.0
        %2250 = vst [vmem:[#allocation3 + $0x2f] sm:$0x1f] %v2249
        %v2252 = vrot.slane %v2248, 7
        %v2254 = vsel %vm361, 0.0, %v2252
        %2255 = vst [vmem:[#allocation3 + $0xf] sm:$0x1f] %v2254
        %s2256 = scalar_lea.vmem [#allocation2], 54
        %v2257 = vld [vmem:[%s2256] ss:$2 sm:$0xf]
        %s2258 = scalar_lea.vmem [#allocation2], 55
        %v2259 = vld [vmem:[%s2258] ss:$2 sm:$0xf]
        %v2260 = vsel %vm2193, %v2257, 0.0
        %2261 = vst [vmem:[#allocation3 + $0x6f] sm:$0x1f] %v2260
        %v2263 = vrot.slane %v2259, 7
        %v2265 = vsel %vm361, 0.0, %v2263
        %2266 = vst [vmem:[#allocation3 + $0x4f] sm:$0x1f] %v2265
        %s2267 = scalar_lea.vmem [#allocation2], 63
        %v2268 = vld [vmem:[%s2267] ss:$2 sm:$0xf]
        %s2269 = scalar_lea.vmem [#allocation2], 64
        %v2270 = vld [vmem:[%s2269] ss:$2 sm:$0xf]
        %v2271 = vsel %vm2193, %v2268, 0.0
        %2272 = vst [vmem:[#allocation3 + $0x34] sm:$0x1f] %v2271
        %v2274 = vrot.slane %v2270, 7
        %v2276 = vsel %vm361, 0.0, %v2274
        %2277 = vst [vmem:[#allocation3 + $0x14] sm:$0x1f] %v2276
        %v2278 = vld [vmem:[#allocation3] sm:$0xff]
        %v2279 = vld [vmem:[#allocation3 + $0x8] sm:$0xff]
        %v2280 = vld [vmem:[#allocation3 + $0x10] sm:$0x7]
        %v2281 = vpack.c.bf16 %v2279, %v2278
        %v2282 = vpack.c.bf16 %v2280, %v2280
        %v2283 = vld [vmem:[#allocation5] sm:$0xf]
        %v2284 = vld [vmem:[#allocation5 + $0x4] sm:$0xf]
        %v2285 = vld [vmem:[#allocation5 + $0x8] sm:$0xf]
        %v2286 = vld [vmem:[#allocation5 + $0xc] sm:$0xf]
        %v2287 = vld [vmem:[#allocation5 + $0x10] sm:$0xf]
        %v2288 = vld [vmem:[#allocation5 + $0x14] sm:$0xf]
        %v2289 = vld [vmem:[#allocation5 + $0x18] sm:$0xf]
        %v2290 = vld [vmem:[#allocation5 + $0x1c] sm:$0xf]
        %v2291 = vld [vmem:[#allocation5 + $0x20] sm:$0xf]
        %v2292 = vld [vmem:[#allocation5 + $0x24] sm:$0xf]
        %v2293 = vld [vmem:[#allocation5 + $0x28] sm:$0xf]
        %v2294 = vld [vmem:[#allocation5 + $0x2c] sm:$0xf]
        %v2295 = vld [vmem:[#allocation5 + $0x30] sm:$0xf]
        %v2296 = vld [vmem:[#allocation5 + $0x34] sm:$0xf]
        %v2297 = vld [vmem:[#allocation5 + $0x38] sm:$0xf]
        %v2298 = vld [vmem:[#allocation5 + $0x3c] sm:$0xf]
        %v2299 = vld [vmem:[#allocation3 + $0x20] sm:$0xff]
        %v2300 = vld [vmem:[#allocation3 + $0x28] sm:$0xff]
        %v2301 = vld [vmem:[#allocation3 + $0x30] sm:$0x7]
        %v2302 = vpack.c.bf16 %v2300, %v2299
        %v2303 = vpack.c.bf16 %v2301, %v2301
        %s2304 = scalar_lea.vmem [#allocation5], 64
        %v2305 = vld [vmem:[%s2304] sm:$0xf]
        %v2306 = vld [vmem:[%s2304 + $0x4] sm:$0xf]
        %v2307 = vld [vmem:[%s2304 + $0x8] sm:$0xf]
        %v2308 = vld [vmem:[%s2304 + $0xc] sm:$0xf]
        %v2309 = vld [vmem:[%s2304 + $0x10] sm:$0xf]
        %v2310 = vld [vmem:[%s2304 + $0x14] sm:$0xf]
        %v2311 = vld [vmem:[%s2304 + $0x18] sm:$0xf]
        %v2312 = vld [vmem:[%s2304 + $0x1c] sm:$0xf]
        %v2313 = vld [vmem:[%s2304 + $0x20] sm:$0xf]
        %v2314 = vld [vmem:[%s2304 + $0x24] sm:$0xf]
        %v2315 = vld [vmem:[%s2304 + $0x28] sm:$0xf]
        %v2316 = vld [vmem:[%s2304 + $0x2c] sm:$0xf]
        %v2317 = vld [vmem:[%s2304 + $0x30] sm:$0xf]
        %v2318 = vld [vmem:[%s2304 + $0x34] sm:$0xf]
        %v2319 = vld [vmem:[%s2304 + $0x38] sm:$0xf]
        %v2320 = vld [vmem:[%s2304 + $0x3c] sm:$0xf]
        %v2337 = vunpack.c.l.b16 %v2305
        %v2338 = vunpack.c.l.b16 %v2306
        %v2339 = vunpack.c.l.b16 %v2307
        %v2340 = vunpack.c.l.b16 %v2308
        %v2341 = vunpack.c.l.b16 %v2309
        %v2342 = vunpack.c.l.b16 %v2310
        %v2343 = vunpack.c.l.b16 %v2311
        %v2344 = vunpack.c.l.b16 %v2312
        %v2345 = vunpack.c.l.b16 %v2313
        %v2346 = vunpack.c.l.b16 %v2314
        %v2347 = vunpack.c.l.b16 %v2315
        %v2348 = vunpack.c.l.b16 %v2316
        %v2349 = vunpack.c.l.b16 %v2317
        %v2350 = vunpack.c.l.b16 %v2318
        %v2351 = vunpack.c.l.b16 %v2319
        %v2352 = vunpack.c.l.b16 %v2320
        %v2353 = vpack.c.b16 %v2338, %v2337
        %v2354 = vpack.c.b16 %v2340, %v2339
        %v2355 = vpack.c.b16 %v2342, %v2341
        %v2356 = vpack.c.b16 %v2344, %v2343
        %v2357 = vpack.c.b16 %v2346, %v2345
        %v2358 = vpack.c.b16 %v2348, %v2347
        %v2359 = vpack.c.b16 %v2350, %v2349
        %v2360 = vpack.c.b16 %v2352, %v2351
        %2369 = vmatprep.subr.bf16.mxu0 0
        %2370 = vmatpush1.bf16.msra.mxu0 %v2360
        %2371 = vmatprep.subr.bf16.mxu0 0
        %2372 = vmatpush1.bf16.msra.mxu0 %v2359
        %2373 = vmatprep.subr.bf16.mxu0 0
        %2374 = vmatpush1.bf16.msra.mxu0 %v2358
        %2375 = vmatprep.subr.bf16.mxu0 0
        %2376 = vmatpush1.bf16.msra.mxu0 %v2357
        %2377 = vmatprep.subr.bf16.mxu0 0
        %2378 = vmatpush1.bf16.msra.mxu0 %v2356
        %2379 = vmatprep.subr.bf16.mxu0 0
        %2380 = vmatpush1.bf16.msra.mxu0 %v2355
        %2381 = vmatprep.subr.bf16.mxu0 0
        %2382 = vmatpush1.bf16.msra.mxu0 %v2354
        %2383 = vmatprep.subr.bf16.mxu0 0
        %2384 = vmatpush1.bf16.msra.mxu0 %v2353
        %2385 = vmatprep.subr.bf16.mxu0 0
        %2386 = vmatpush2.bf16.msra.mxu0 0
        %2387 = vmatprep.subr.bf16.mxu0 0
        %2388 = vmatpush2.bf16.msra.mxu0 0
        %2389 = vmatprep.subr.bf16.mxu0 0
        %2390 = vmatpush2.bf16.msra.mxu0 0
        %2391 = vmatprep.subr.bf16.mxu0 0
        %2392 = vmatpush2.bf16.msra.mxu0 0
        %2393 = vmatprep.subr.bf16.mxu0 0
        %2394 = vmatpush2.bf16.msra.mxu0 0
        %2395 = vmatprep.subr.bf16.mxu0 0
        %2396 = vmatpush2.bf16.msra.mxu0 0
        %2397 = vmatprep.subr.bf16.mxu0 0
        %2398 = vmatpush2.bf16.msra.mxu0 0
        %2399 = vmatprep.subr.bf16.mxu0 0
        %2400 = vmatpush2.bf16.msra.mxu0 0
        %2401 = vmatprep.mubr.bf16.mxu0 0
        %2402 = vmatmul.mubr.bf16.gmra.mxu0 %v2302
        %v2403 = vpop.f32.mrf.mxu0
        %v2404 = vadd.f32 0.0, %v2403
        %v2405 = vpop.f32.mrf.mxu0
        %v2406 = vpop.f32.mrf.mxu0
        %v2407 = vadd.f32 0.0, %v2406
        %v2408 = vpop.f32.mrf.mxu0
        %2409 = vmatprep.mubr.bf16.mxu0 0
        %2410 = vmatmul.mubr.bf16.gmra.mxu0 %v2303
        %v2411 = vpop.f32.mrf.mxu0
        %v2412 = vadd.f32 0.0, %v2411
        %v2413 = vpop.f32.mrf.mxu0
        %v2414 = vpop.f32.mrf.mxu0
        %v2415 = vpop.f32.mrf.mxu0
        %2416 = vdwg.mxu0
        %v2433 = vunpack.c.l.b16 %v2283
        %v2434 = vunpack.c.l.b16 %v2284
        %v2435 = vunpack.c.l.b16 %v2285
        %v2436 = vunpack.c.l.b16 %v2286
        %v2437 = vunpack.c.l.b16 %v2287
        %v2438 = vunpack.c.l.b16 %v2288
        %v2439 = vunpack.c.l.b16 %v2289
        %v2440 = vunpack.c.l.b16 %v2290
        %v2441 = vunpack.c.l.b16 %v2291
        %v2442 = vunpack.c.l.b16 %v2292
        %v2443 = vunpack.c.l.b16 %v2293
        %v2444 = vunpack.c.l.b16 %v2294
        %v2445 = vunpack.c.l.b16 %v2295
        %v2446 = vunpack.c.l.b16 %v2296
        %v2447 = vunpack.c.l.b16 %v2297
        %v2448 = vunpack.c.l.b16 %v2298
        %v2449 = vpack.c.b16 %v2434, %v2433
        %v2450 = vpack.c.b16 %v2436, %v2435
        %v2451 = vpack.c.b16 %v2438, %v2437
        %v2452 = vpack.c.b16 %v2440, %v2439
        %v2453 = vpack.c.b16 %v2442, %v2441
        %v2454 = vpack.c.b16 %v2444, %v2443
        %v2455 = vpack.c.b16 %v2446, %v2445
        %v2456 = vpack.c.b16 %v2448, %v2447
        %2465 = vmatprep.subr.bf16.mxu0 0
        %2466 = vmatpush1.bf16.msra.mxu0 %v2456
        %2467 = vmatprep.subr.bf16.mxu0 0
        %2468 = vmatpush1.bf16.msra.mxu0 %v2455
        %2469 = vmatprep.subr.bf16.mxu0 0
        %2470 = vmatpush1.bf16.msra.mxu0 %v2454
        %2471 = vmatprep.subr.bf16.mxu0 0
        %2472 = vmatpush1.bf16.msra.mxu0 %v2453
        %2473 = vmatprep.subr.bf16.mxu0 0
        %2474 = vmatpush1.bf16.msra.mxu0 %v2452
        %2475 = vmatprep.subr.bf16.mxu0 0
        %2476 = vmatpush1.bf16.msra.mxu0 %v2451
        %2477 = vmatprep.subr.bf16.mxu0 0
        %2478 = vmatpush1.bf16.msra.mxu0 %v2450
        %2479 = vmatprep.subr.bf16.mxu0 0
        %2480 = vmatpush1.bf16.msra.mxu0 %v2449
        %2481 = vmatprep.subr.bf16.mxu0 0
        %2482 = vmatpush2.bf16.msra.mxu0 0
        %2483 = vmatprep.subr.bf16.mxu0 0
        %2484 = vmatpush2.bf16.msra.mxu0 0
        %2485 = vmatprep.subr.bf16.mxu0 0
        %2486 = vmatpush2.bf16.msra.mxu0 0
        %2487 = vmatprep.subr.bf16.mxu0 0
        %2488 = vmatpush2.bf16.msra.mxu0 0
        %2489 = vmatprep.subr.bf16.mxu0 0
        %2490 = vmatpush2.bf16.msra.mxu0 0
        %2491 = vmatprep.subr.bf16.mxu0 0
        %2492 = vmatpush2.bf16.msra.mxu0 0
        %2493 = vmatprep.subr.bf16.mxu0 0
        %2494 = vmatpush2.bf16.msra.mxu0 0
        %2495 = vmatprep.subr.bf16.mxu0 0
        %2496 = vmatpush2.bf16.msra.mxu0 0
        %2497 = vmatprep.mubr.bf16.mxu0 0
        %2498 = vmatmul.mubr.bf16.gmra.mxu0 %v2281
        %v2499 = vpop.f32.mrf.mxu0
        %v2500 = vadd.f32 %v2404, %v2499
        %v2501 = vpop.f32.mrf.mxu0
        %v2502 = vpop.f32.mrf.mxu0
        %v2503 = vadd.f32 %v2407, %v2502
        %v2504 = vpop.f32.mrf.mxu0
        %2505 = vmatprep.mubr.bf16.mxu0 0
        %2506 = vmatmul.mubr.bf16.gmra.mxu0 %v2282
        %v2507 = vpop.f32.mrf.mxu0
        %v2508 = vadd.f32 %v2412, %v2507
        %v2509 = vpop.f32.mrf.mxu0
        %v2510 = vpop.f32.mrf.mxu0
        %v2511 = vpop.f32.mrf.mxu0
        %2512 = vdwg.mxu0
        %v2513 = vld [vmem:[#allocation3 + $0x1] sm:$0xff]
        %v2514 = vld [vmem:[#allocation3 + $0x9] sm:$0xff]
        %v2515 = vld [vmem:[#allocation3 + $0x11] sm:$0x7]
        %v2516 = vpack.c.bf16 %v2514, %v2513
        %v2517 = vpack.c.bf16 %v2515, %v2515
        %s2518 = scalar_lea.vmem [#allocation5], 128
        %v2519 = vld [vmem:[%s2518] sm:$0xf]
        %v2520 = vld [vmem:[%s2518 + $0x4] sm:$0xf]
        %v2521 = vld [vmem:[%s2518 + $0x8] sm:$0xf]
        %v2522 = vld [vmem:[%s2518 + $0xc] sm:$0xf]
        %v2523 = vld [vmem:[%s2518 + $0x10] sm:$0xf]
        %v2524 = vld [vmem:[%s2518 + $0x14] sm:$0xf]
        %v2525 = vld [vmem:[%s2518 + $0x18] sm:$0xf]
        %v2526 = vld [vmem:[%s2518 + $0x1c] sm:$0xf]
        %v2527 = vld [vmem:[%s2518 + $0x20] sm:$0xf]
        %v2528 = vld [vmem:[%s2518 + $0x24] sm:$0xf]
        %v2529 = vld [vmem:[%s2518 + $0x28] sm:$0xf]
        %v2530 = vld [vmem:[%s2518 + $0x2c] sm:$0xf]
        %v2531 = vld [vmem:[%s2518 + $0x30] sm:$0xf]
        %v2532 = vld [vmem:[%s2518 + $0x34] sm:$0xf]
        %v2533 = vld [vmem:[%s2518 + $0x38] sm:$0xf]
        %v2534 = vld [vmem:[%s2518 + $0x3c] sm:$0xf]
        %v2551 = vunpack.c.l.b16 %v2519
        %v2552 = vunpack.c.l.b16 %v2520
        %v2553 = vunpack.c.l.b16 %v2521
        %v2554 = vunpack.c.l.b16 %v2522
        %v2555 = vunpack.c.l.b16 %v2523
        %v2556 = vunpack.c.l.b16 %v2524
        %v2557 = vunpack.c.l.b16 %v2525
        %v2558 = vunpack.c.l.b16 %v2526
        %v2559 = vunpack.c.l.b16 %v2527
        %v2560 = vunpack.c.l.b16 %v2528
        %v2561 = vunpack.c.l.b16 %v2529
        %v2562 = vunpack.c.l.b16 %v2530
        %v2563 = vunpack.c.l.b16 %v2531
        %v2564 = vunpack.c.l.b16 %v2532
        %v2565 = vunpack.c.l.b16 %v2533
        %v2566 = vunpack.c.l.b16 %v2534
        %v2567 = vpack.c.b16 %v2552, %v2551
        %v2568 = vpack.c.b16 %v2554, %v2553
        %v2569 = vpack.c.b16 %v2556, %v2555
        %v2570 = vpack.c.b16 %v2558, %v2557
        %v2571 = vpack.c.b16 %v2560, %v2559
        %v2572 = vpack.c.b16 %v2562, %v2561
        %v2573 = vpack.c.b16 %v2564, %v2563
        %v2574 = vpack.c.b16 %v2566, %v2565
        %2583 = vmatprep.subr.bf16.mxu0 0
        %2584 = vmatpush1.bf16.msra.mxu0 %v2574
        %2585 = vmatprep.subr.bf16.mxu0 0
        %2586 = vmatpush1.bf16.msra.mxu0 %v2573
        %2587 = vmatprep.subr.bf16.mxu0 0
        %2588 = vmatpush1.bf16.msra.mxu0 %v2572
        %2589 = vmatprep.subr.bf16.mxu0 0
        %2590 = vmatpush1.bf16.msra.mxu0 %v2571
        %2591 = vmatprep.subr.bf16.mxu0 0
        %2592 = vmatpush1.bf16.msra.mxu0 %v2570
        %2593 = vmatprep.subr.bf16.mxu0 0
        %2594 = vmatpush1.bf16.msra.mxu0 %v2569
        %2595 = vmatprep.subr.bf16.mxu0 0
        %2596 = vmatpush1.bf16.msra.mxu0 %v2568
        %2597 = vmatprep.subr.bf16.mxu0 0
        %2598 = vmatpush1.bf16.msra.mxu0 %v2567
        %2599 = vmatprep.subr.bf16.mxu0 0
        %2600 = vmatpush2.bf16.msra.mxu0 0
        %2601 = vmatprep.subr.bf16.mxu0 0
        %2602 = vmatpush2.bf16.msra.mxu0 0
        %2603 = vmatprep.subr.bf16.mxu0 0
        %2604 = vmatpush2.bf16.msra.mxu0 0
        %2605 = vmatprep.subr.bf16.mxu0 0
        %2606 = vmatpush2.bf16.msra.mxu0 0
        %2607 = vmatprep.subr.bf16.mxu0 0
        %2608 = vmatpush2.bf16.msra.mxu0 0
        %2609 = vmatprep.subr.bf16.mxu0 0
        %2610 = vmatpush2.bf16.msra.mxu0 0
        %2611 = vmatprep.subr.bf16.mxu0 0
        %2612 = vmatpush2.bf16.msra.mxu0 0
        %2613 = vmatprep.subr.bf16.mxu0 0
        %2614 = vmatpush2.bf16.msra.mxu0 0
        %2615 = vmatprep.mubr.bf16.mxu0 0
        %2616 = vmatmul.mubr.bf16.gmra.mxu0 %v2516
        %v2617 = vpop.f32.mrf.mxu0
        %v2618 = vadd.f32 0.0, %v2617
        %v2619 = vpop.f32.mrf.mxu0
        %v2620 = vpop.f32.mrf.mxu0
        %v2621 = vadd.f32 0.0, %v2620
        %v2622 = vpop.f32.mrf.mxu0
        %2623 = vmatprep.mubr.bf16.mxu0 0
        %2624 = vmatmul.mubr.bf16.gmra.mxu0 %v2517
        %v2625 = vpop.f32.mrf.mxu0
        %v2626 = vadd.f32 0.0, %v2625
        %v2627 = vpop.f32.mrf.mxu0
        %v2628 = vpop.f32.mrf.mxu0
        %v2629 = vpop.f32.mrf.mxu0
        %2630 = vdwg.mxu0
        %v2631 = vadd.f32 %v2500, %v2618
        %v2632 = vadd.f32 %v2503, %v2621
        %v2633 = vadd.f32 %v2508, %v2626
        %v2634 = vld [vmem:[#allocation3 + $0x21] sm:$0xff]
        %v2635 = vld [vmem:[#allocation3 + $0x29] sm:$0xff]
        %v2636 = vld [vmem:[#allocation3 + $0x31] sm:$0x7]
        %v2637 = vpack.c.bf16 %v2635, %v2634
        %v2638 = vpack.c.bf16 %v2636, %v2636
        %s2639 = scalar_lea.vmem [#allocation5], 192
        %v2640 = vld [vmem:[%s2639] sm:$0xf]
        %v2641 = vld [vmem:[%s2639 + $0x4] sm:$0xf]
        %v2642 = vld [vmem:[%s2639 + $0x8] sm:$0xf]
        %v2643 = vld [vmem:[%s2639 + $0xc] sm:$0xf]
        %v2644 = vld [vmem:[%s2639 + $0x10] sm:$0xf]
        %v2645 = vld [vmem:[%s2639 + $0x14] sm:$0xf]
        %v2646 = vld [vmem:[%s2639 + $0x18] sm:$0xf]
        %v2647 = vld [vmem:[%s2639 + $0x1c] sm:$0xf]
        %v2648 = vld [vmem:[%s2639 + $0x20] sm:$0xf]
        %v2649 = vld [vmem:[%s2639 + $0x24] sm:$0xf]
        %v2650 = vld [vmem:[%s2639 + $0x28] sm:$0xf]
        %v2651 = vld [vmem:[%s2639 + $0x2c] sm:$0xf]
        %v2652 = vld [vmem:[%s2639 + $0x30] sm:$0xf]
        %v2653 = vld [vmem:[%s2639 + $0x34] sm:$0xf]
        %v2654 = vld [vmem:[%s2639 + $0x38] sm:$0xf]
        %v2655 = vld [vmem:[%s2639 + $0x3c] sm:$0xf]
        %v2672 = vunpack.c.l.b16 %v2640
        %v2673 = vunpack.c.l.b16 %v2641
        %v2674 = vunpack.c.l.b16 %v2642
        %v2675 = vunpack.c.l.b16 %v2643
        %v2676 = vunpack.c.l.b16 %v2644
        %v2677 = vunpack.c.l.b16 %v2645
        %v2678 = vunpack.c.l.b16 %v2646
        %v2679 = vunpack.c.l.b16 %v2647
        %v2680 = vunpack.c.l.b16 %v2648
        %v2681 = vunpack.c.l.b16 %v2649
        %v2682 = vunpack.c.l.b16 %v2650
        %v2683 = vunpack.c.l.b16 %v2651
        %v2684 = vunpack.c.l.b16 %v2652
        %v2685 = vunpack.c.l.b16 %v2653
        %v2686 = vunpack.c.l.b16 %v2654
        %v2687 = vunpack.c.l.b16 %v2655
        %v2688 = vpack.c.b16 %v2673, %v2672
        %v2689 = vpack.c.b16 %v2675, %v2674
        %v2690 = vpack.c.b16 %v2677, %v2676
        %v2691 = vpack.c.b16 %v2679, %v2678
        %v2692 = vpack.c.b16 %v2681, %v2680
        %v2693 = vpack.c.b16 %v2683, %v2682
        %v2694 = vpack.c.b16 %v2685, %v2684
        %v2695 = vpack.c.b16 %v2687, %v2686
        %2704 = vmatprep.subr.bf16.mxu0 0
        %2705 = vmatpush1.bf16.msra.mxu0 %v2695
        %2706 = vmatprep.subr.bf16.mxu0 0
        %2707 = vmatpush1.bf16.msra.mxu0 %v2694
        %2708 = vmatprep.subr.bf16.mxu0 0
        %2709 = vmatpush1.bf16.msra.mxu0 %v2693
        %2710 = vmatprep.subr.bf16.mxu0 0
        %2711 = vmatpush1.bf16.msra.mxu0 %v2692
        %2712 = vmatprep.subr.bf16.mxu0 0
        %2713 = vmatpush1.bf16.msra.mxu0 %v2691
        %2714 = vmatprep.subr.bf16.mxu0 0
        %2715 = vmatpush1.bf16.msra.mxu0 %v2690
        %2716 = vmatprep.subr.bf16.mxu0 0
        %2717 = vmatpush1.bf16.msra.mxu0 %v2689
        %2718 = vmatprep.subr.bf16.mxu0 0
        %2719 = vmatpush1.bf16.msra.mxu0 %v2688
        %2720 = vmatprep.subr.bf16.mxu0 0
        %2721 = vmatpush2.bf16.msra.mxu0 0
        %2722 = vmatprep.subr.bf16.mxu0 0
        %2723 = vmatpush2.bf16.msra.mxu0 0
        %2724 = vmatprep.subr.bf16.mxu0 0
        %2725 = vmatpush2.bf16.msra.mxu0 0
        %2726 = vmatprep.subr.bf16.mxu0 0
        %2727 = vmatpush2.bf16.msra.mxu0 0
        %2728 = vmatprep.subr.bf16.mxu0 0
        %2729 = vmatpush2.bf16.msra.mxu0 0
        %2730 = vmatprep.subr.bf16.mxu0 0
        %2731 = vmatpush2.bf16.msra.mxu0 0
        %2732 = vmatprep.subr.bf16.mxu0 0
        %2733 = vmatpush2.bf16.msra.mxu0 0
        %2734 = vmatprep.subr.bf16.mxu0 0
        %2735 = vmatpush2.bf16.msra.mxu0 0
        %2736 = vmatprep.mubr.bf16.mxu0 0
        %2737 = vmatmul.mubr.bf16.gmra.mxu0 %v2637
        %v2738 = vpop.f32.mrf.mxu0
        %v2739 = vadd.f32 0.0, %v2738
        %v2740 = vpop.f32.mrf.mxu0
        %v2741 = vpop.f32.mrf.mxu0
        %v2742 = vadd.f32 0.0, %v2741
        %v2743 = vpop.f32.mrf.mxu0
        %2744 = vmatprep.mubr.bf16.mxu0 0
        %2745 = vmatmul.mubr.bf16.gmra.mxu0 %v2638
        %v2746 = vpop.f32.mrf.mxu0
        %v2747 = vadd.f32 0.0, %v2746
        %v2748 = vpop.f32.mrf.mxu0
        %v2749 = vpop.f32.mrf.mxu0
        %v2750 = vpop.f32.mrf.mxu0
        %2751 = vdwg.mxu0
        %v2752 = vadd.f32 %v2631, %v2739
        %v2753 = vadd.f32 %v2632, %v2742
        %v2754 = vadd.f32 %v2633, %v2747
        %v2755 = vld [vmem:[#allocation3 + $0x40] sm:$0xff]
        %v2756 = vld [vmem:[#allocation3 + $0x48] sm:$0xff]
        %v2757 = vld [vmem:[#allocation3 + $0x50] sm:$0x7]
        %v2758 = vpack.c.bf16 %v2756, %v2755
        %v2759 = vpack.c.bf16 %v2757, %v2757
        %s2760 = scalar_lea.vmem [#allocation5], 256
        %v2761 = vld [vmem:[%s2760] sm:$0xf]
        %v2762 = vld [vmem:[%s2760 + $0x4] sm:$0xf]
        %v2763 = vld [vmem:[%s2760 + $0x8] sm:$0xf]
        %v2764 = vld [vmem:[%s2760 + $0xc] sm:$0xf]
        %v2765 = vld [vmem:[%s2760 + $0x10] sm:$0xf]
        %v2766 = vld [vmem:[%s2760 + $0x14] sm:$0xf]
        %v2767 = vld [vmem:[%s2760 + $0x18] sm:$0xf]
        %v2768 = vld [vmem:[%s2760 + $0x1c] sm:$0xf]
        %v2769 = vld [vmem:[%s2760 + $0x20] sm:$0xf]
        %v2770 = vld [vmem:[%s2760 + $0x24] sm:$0xf]
        %v2771 = vld [vmem:[%s2760 + $0x28] sm:$0xf]
        %v2772 = vld [vmem:[%s2760 + $0x2c] sm:$0xf]
        %v2773 = vld [vmem:[%s2760 + $0x30] sm:$0xf]
        %v2774 = vld [vmem:[%s2760 + $0x34] sm:$0xf]
        %v2775 = vld [vmem:[%s2760 + $0x38] sm:$0xf]
        %v2776 = vld [vmem:[%s2760 + $0x3c] sm:$0xf]
        %v2793 = vunpack.c.l.b16 %v2761
        %v2794 = vunpack.c.l.b16 %v2762
        %v2795 = vunpack.c.l.b16 %v2763
        %v2796 = vunpack.c.l.b16 %v2764
        %v2797 = vunpack.c.l.b16 %v2765
        %v2798 = vunpack.c.l.b16 %v2766
        %v2799 = vunpack.c.l.b16 %v2767
        %v2800 = vunpack.c.l.b16 %v2768
        %v2801 = vunpack.c.l.b16 %v2769
        %v2802 = vunpack.c.l.b16 %v2770
        %v2803 = vunpack.c.l.b16 %v2771
        %v2804 = vunpack.c.l.b16 %v2772
        %v2805 = vunpack.c.l.b16 %v2773
        %v2806 = vunpack.c.l.b16 %v2774
        %v2807 = vunpack.c.l.b16 %v2775
        %v2808 = vunpack.c.l.b16 %v2776
        %v2809 = vpack.c.b16 %v2794, %v2793
        %v2810 = vpack.c.b16 %v2796, %v2795
        %v2811 = vpack.c.b16 %v2798, %v2797
        %v2812 = vpack.c.b16 %v2800, %v2799
        %v2813 = vpack.c.b16 %v2802, %v2801
        %v2814 = vpack.c.b16 %v2804, %v2803
        %v2815 = vpack.c.b16 %v2806, %v2805
        %v2816 = vpack.c.b16 %v2808, %v2807
        %2825 = vmatprep.subr.bf16.mxu0 0
        %2826 = vmatpush1.bf16.msra.mxu0 %v2816
        %2827 = vmatprep.subr.bf16.mxu0 0
        %2828 = vmatpush1.bf16.msra.mxu0 %v2815
        %2829 = vmatprep.subr.bf16.mxu0 0
        %2830 = vmatpush1.bf16.msra.mxu0 %v2814
        %2831 = vmatprep.subr.bf16.mxu0 0
        %2832 = vmatpush1.bf16.msra.mxu0 %v2813
        %2833 = vmatprep.subr.bf16.mxu0 0
        %2834 = vmatpush1.bf16.msra.mxu0 %v2812
        %2835 = vmatprep.subr.bf16.mxu0 0
        %2836 = vmatpush1.bf16.msra.mxu0 %v2811
        %2837 = vmatprep.subr.bf16.mxu0 0
        %2838 = vmatpush1.bf16.msra.mxu0 %v2810
        %2839 = vmatprep.subr.bf16.mxu0 0
        %2840 = vmatpush1.bf16.msra.mxu0 %v2809
        %2841 = vmatprep.subr.bf16.mxu0 0
        %2842 = vmatpush2.bf16.msra.mxu0 0
        %2843 = vmatprep.subr.bf16.mxu0 0
        %2844 = vmatpush2.bf16.msra.mxu0 0
        %2845 = vmatprep.subr.bf16.mxu0 0
        %2846 = vmatpush2.bf16.msra.mxu0 0
        %2847 = vmatprep.subr.bf16.mxu0 0
        %2848 = vmatpush2.bf16.msra.mxu0 0
        %2849 = vmatprep.subr.bf16.mxu0 0
        %2850 = vmatpush2.bf16.msra.mxu0 0
        %2851 = vmatprep.subr.bf16.mxu0 0
        %2852 = vmatpush2.bf16.msra.mxu0 0
        %2853 = vmatprep.subr.bf16.mxu0 0
        %2854 = vmatpush2.bf16.msra.mxu0 0
        %2855 = vmatprep.subr.bf16.mxu0 0
        %2856 = vmatpush2.bf16.msra.mxu0 0
        %2857 = vmatprep.mubr.bf16.mxu0 0
        %2858 = vmatmul.mubr.bf16.gmra.mxu0 %v2758
        %v2859 = vpop.f32.mrf.mxu0
        %v2860 = vadd.f32 0.0, %v2859
        %v2861 = vpop.f32.mrf.mxu0
        %v2862 = vpop.f32.mrf.mxu0
        %v2863 = vadd.f32 0.0, %v2862
        %v2864 = vpop.f32.mrf.mxu0
        %2865 = vmatprep.mubr.bf16.mxu0 0
        %2866 = vmatmul.mubr.bf16.gmra.mxu0 %v2759
        %v2867 = vpop.f32.mrf.mxu0
        %v2868 = vadd.f32 0.0, %v2867
        %v2869 = vpop.f32.mrf.mxu0
        %v2870 = vpop.f32.mrf.mxu0
        %v2871 = vpop.f32.mrf.mxu0
        %2872 = vdwg.mxu0
        %v2873 = vadd.f32 %v2752, %v2860
        %v2874 = vadd.f32 %v2753, %v2863
        %v2875 = vadd.f32 %v2754, %v2868
        %v2876 = vld [vmem:[#allocation3 + $0x60] sm:$0xff]
        %v2877 = vld [vmem:[#allocation3 + $0x68] sm:$0xff]
        %v2878 = vld [vmem:[#allocation3 + $0x70] sm:$0x7]
        %v2879 = vpack.c.bf16 %v2877, %v2876
        %v2880 = vpack.c.bf16 %v2878, %v2878
        %s2881 = scalar_lea.vmem [#allocation5], 320
        %v2882 = vld [vmem:[%s2881] sm:$0xf]
        %v2883 = vld [vmem:[%s2881 + $0x4] sm:$0xf]
        %v2884 = vld [vmem:[%s2881 + $0x8] sm:$0xf]
        %v2885 = vld [vmem:[%s2881 + $0xc] sm:$0xf]
        %v2886 = vld [vmem:[%s2881 + $0x10] sm:$0xf]
        %v2887 = vld [vmem:[%s2881 + $0x14] sm:$0xf]
        %v2888 = vld [vmem:[%s2881 + $0x18] sm:$0xf]
        %v2889 = vld [vmem:[%s2881 + $0x1c] sm:$0xf]
        %v2890 = vld [vmem:[%s2881 + $0x20] sm:$0xf]
        %v2891 = vld [vmem:[%s2881 + $0x24] sm:$0xf]
        %v2892 = vld [vmem:[%s2881 + $0x28] sm:$0xf]
        %v2893 = vld [vmem:[%s2881 + $0x2c] sm:$0xf]
        %v2894 = vld [vmem:[%s2881 + $0x30] sm:$0xf]
        %v2895 = vld [vmem:[%s2881 + $0x34] sm:$0xf]
        %v2896 = vld [vmem:[%s2881 + $0x38] sm:$0xf]
        %v2897 = vld [vmem:[%s2881 + $0x3c] sm:$0xf]
        %v2914 = vunpack.c.l.b16 %v2882
        %v2915 = vunpack.c.l.b16 %v2883
        %v2916 = vunpack.c.l.b16 %v2884
        %v2917 = vunpack.c.l.b16 %v2885
        %v2918 = vunpack.c.l.b16 %v2886
        %v2919 = vunpack.c.l.b16 %v2887
        %v2920 = vunpack.c.l.b16 %v2888
        %v2921 = vunpack.c.l.b16 %v2889
        %v2922 = vunpack.c.l.b16 %v2890
        %v2923 = vunpack.c.l.b16 %v2891
        %v2924 = vunpack.c.l.b16 %v2892
        %v2925 = vunpack.c.l.b16 %v2893
        %v2926 = vunpack.c.l.b16 %v2894
        %v2927 = vunpack.c.l.b16 %v2895
        %v2928 = vunpack.c.l.b16 %v2896
        %v2929 = vunpack.c.l.b16 %v2897
        %v2930 = vpack.c.b16 %v2915, %v2914
        %v2931 = vpack.c.b16 %v2917, %v2916
        %v2932 = vpack.c.b16 %v2919, %v2918
        %v2933 = vpack.c.b16 %v2921, %v2920
        %v2934 = vpack.c.b16 %v2923, %v2922
        %v2935 = vpack.c.b16 %v2925, %v2924
        %v2936 = vpack.c.b16 %v2927, %v2926
        %v2937 = vpack.c.b16 %v2929, %v2928
        %2946 = vmatprep.subr.bf16.mxu0 0
        %2947 = vmatpush1.bf16.msra.mxu0 %v2937
        %2948 = vmatprep.subr.bf16.mxu0 0
        %2949 = vmatpush1.bf16.msra.mxu0 %v2936
        %2950 = vmatprep.subr.bf16.mxu0 0
        %2951 = vmatpush1.bf16.msra.mxu0 %v2935
        %2952 = vmatprep.subr.bf16.mxu0 0
        %2953 = vmatpush1.bf16.msra.mxu0 %v2934
        %2954 = vmatprep.subr.bf16.mxu0 0
        %2955 = vmatpush1.bf16.msra.mxu0 %v2933
        %2956 = vmatprep.subr.bf16.mxu0 0
        %2957 = vmatpush1.bf16.msra.mxu0 %v2932
        %2958 = vmatprep.subr.bf16.mxu0 0
        %2959 = vmatpush1.bf16.msra.mxu0 %v2931
        %2960 = vmatprep.subr.bf16.mxu0 0
        %2961 = vmatpush1.bf16.msra.mxu0 %v2930
        %2962 = vmatprep.subr.bf16.mxu0 0
        %2963 = vmatpush2.bf16.msra.mxu0 0
        %2964 = vmatprep.subr.bf16.mxu0 0
        %2965 = vmatpush2.bf16.msra.mxu0 0
        %2966 = vmatprep.subr.bf16.mxu0 0
        %2967 = vmatpush2.bf16.msra.mxu0 0
        %2968 = vmatprep.subr.bf16.mxu0 0
        %2969 = vmatpush2.bf16.msra.mxu0 0
        %2970 = vmatprep.subr.bf16.mxu0 0
        %2971 = vmatpush2.bf16.msra.mxu0 0
        %2972 = vmatprep.subr.bf16.mxu0 0
        %2973 = vmatpush2.bf16.msra.mxu0 0
        %2974 = vmatprep.subr.bf16.mxu0 0
        %2975 = vmatpush2.bf16.msra.mxu0 0
        %2976 = vmatprep.subr.bf16.mxu0 0
        %2977 = vmatpush2.bf16.msra.mxu0 0
        %2978 = vmatprep.mubr.bf16.mxu0 0
        %2979 = vmatmul.mubr.bf16.gmra.mxu0 %v2879
        %v2980 = vpop.f32.mrf.mxu0
        %v2981 = vadd.f32 0.0, %v2980
        %v2982 = vpop.f32.mrf.mxu0
        %v2983 = vpop.f32.mrf.mxu0
        %v2984 = vadd.f32 0.0, %v2983
        %v2985 = vpop.f32.mrf.mxu0
        %2986 = vmatprep.mubr.bf16.mxu0 0
        %2987 = vmatmul.mubr.bf16.gmra.mxu0 %v2880
        %v2988 = vpop.f32.mrf.mxu0
        %v2989 = vadd.f32 0.0, %v2988
        %v2990 = vpop.f32.mrf.mxu0
        %v2991 = vpop.f32.mrf.mxu0
        %v2992 = vpop.f32.mrf.mxu0
        %2993 = vdwg.mxu0
        %v2994 = vadd.f32 %v2873, %v2981
        %v2995 = vadd.f32 %v2874, %v2984
        %v2996 = vadd.f32 %v2875, %v2989
        %v2997 = vld [vmem:[#allocation3 + $0x41] sm:$0xff]
        %v2998 = vld [vmem:[#allocation3 + $0x49] sm:$0xff]
        %v2999 = vld [vmem:[#allocation3 + $0x51] sm:$0x7]
        %v3000 = vpack.c.bf16 %v2998, %v2997
        %v3001 = vpack.c.bf16 %v2999, %v2999
        %s3002 = scalar_lea.vmem [#allocation5], 384
        %v3003 = vld [vmem:[%s3002] sm:$0xf]
        %v3004 = vld [vmem:[%s3002 + $0x4] sm:$0xf]
        %v3005 = vld [vmem:[%s3002 + $0x8] sm:$0xf]
        %v3006 = vld [vmem:[%s3002 + $0xc] sm:$0xf]
        %v3007 = vld [vmem:[%s3002 + $0x10] sm:$0xf]
        %v3008 = vld [vmem:[%s3002 + $0x14] sm:$0xf]
        %v3009 = vld [vmem:[%s3002 + $0x18] sm:$0xf]
        %v3010 = vld [vmem:[%s3002 + $0x1c] sm:$0xf]
        %v3011 = vld [vmem:[%s3002 + $0x20] sm:$0xf]
        %v3012 = vld [vmem:[%s3002 + $0x24] sm:$0xf]
        %v3013 = vld [vmem:[%s3002 + $0x28] sm:$0xf]
        %v3014 = vld [vmem:[%s3002 + $0x2c] sm:$0xf]
        %v3015 = vld [vmem:[%s3002 + $0x30] sm:$0xf]
        %v3016 = vld [vmem:[%s3002 + $0x34] sm:$0xf]
        %v3017 = vld [vmem:[%s3002 + $0x38] sm:$0xf]
        %v3018 = vld [vmem:[%s3002 + $0x3c] sm:$0xf]
        %v3035 = vunpack.c.l.b16 %v3003
        %v3036 = vunpack.c.l.b16 %v3004
        %v3037 = vunpack.c.l.b16 %v3005
        %v3038 = vunpack.c.l.b16 %v3006
        %v3039 = vunpack.c.l.b16 %v3007
        %v3040 = vunpack.c.l.b16 %v3008
        %v3041 = vunpack.c.l.b16 %v3009
        %v3042 = vunpack.c.l.b16 %v3010
        %v3043 = vunpack.c.l.b16 %v3011
        %v3044 = vunpack.c.l.b16 %v3012
        %v3045 = vunpack.c.l.b16 %v3013
        %v3046 = vunpack.c.l.b16 %v3014
        %v3047 = vunpack.c.l.b16 %v3015
        %v3048 = vunpack.c.l.b16 %v3016
        %v3049 = vunpack.c.l.b16 %v3017
        %v3050 = vunpack.c.l.b16 %v3018
        %v3051 = vpack.c.b16 %v3036, %v3035
        %v3052 = vpack.c.b16 %v3038, %v3037
        %v3053 = vpack.c.b16 %v3040, %v3039
        %v3054 = vpack.c.b16 %v3042, %v3041
        %v3055 = vpack.c.b16 %v3044, %v3043
        %v3056 = vpack.c.b16 %v3046, %v3045
        %v3057 = vpack.c.b16 %v3048, %v3047
        %v3058 = vpack.c.b16 %v3050, %v3049
        %3067 = vmatprep.subr.bf16.mxu0 0
        %3068 = vmatpush1.bf16.msra.mxu0 %v3058
        %3069 = vmatprep.subr.bf16.mxu0 0
        %3070 = vmatpush1.bf16.msra.mxu0 %v3057
        %3071 = vmatprep.subr.bf16.mxu0 0
        %3072 = vmatpush1.bf16.msra.mxu0 %v3056
        %3073 = vmatprep.subr.bf16.mxu0 0
        %3074 = vmatpush1.bf16.msra.mxu0 %v3055
        %3075 = vmatprep.subr.bf16.mxu0 0
        %3076 = vmatpush1.bf16.msra.mxu0 %v3054
        %3077 = vmatprep.subr.bf16.mxu0 0
        %3078 = vmatpush1.bf16.msra.mxu0 %v3053
        %3079 = vmatprep.subr.bf16.mxu0 0
        %3080 = vmatpush1.bf16.msra.mxu0 %v3052
        %3081 = vmatprep.subr.bf16.mxu0 0
        %3082 = vmatpush1.bf16.msra.mxu0 %v3051
        %3083 = vmatprep.subr.bf16.mxu0 0
        %3084 = vmatpush2.bf16.msra.mxu0 0
        %3085 = vmatprep.subr.bf16.mxu0 0
        %3086 = vmatpush2.bf16.msra.mxu0 0
        %3087 = vmatprep.subr.bf16.mxu0 0
        %3088 = vmatpush2.bf16.msra.mxu0 0
        %3089 = vmatprep.subr.bf16.mxu0 0
        %3090 = vmatpush2.bf16.msra.mxu0 0
        %3091 = vmatprep.subr.bf16.mxu0 0
        %3092 = vmatpush2.bf16.msra.mxu0 0
        %3093 = vmatprep.subr.bf16.mxu0 0
        %3094 = vmatpush2.bf16.msra.mxu0 0
        %3095 = vmatprep.subr.bf16.mxu0 0
        %3096 = vmatpush2.bf16.msra.mxu0 0
        %3097 = vmatprep.subr.bf16.mxu0 0
        %3098 = vmatpush2.bf16.msra.mxu0 0
        %3099 = vmatprep.mubr.bf16.mxu0 0
        %3100 = vmatmul.mubr.bf16.gmra.mxu0 %v3000
        %v3101 = vpop.f32.mrf.mxu0
        %v3102 = vadd.f32 0.0, %v3101
        %v3103 = vpop.f32.mrf.mxu0
        %v3104 = vpop.f32.mrf.mxu0
        %v3105 = vadd.f32 0.0, %v3104
        %v3106 = vpop.f32.mrf.mxu0
        %3107 = vmatprep.mubr.bf16.mxu0 0
        %3108 = vmatmul.mubr.bf16.gmra.mxu0 %v3001
        %v3109 = vpop.f32.mrf.mxu0
        %v3110 = vadd.f32 0.0, %v3109
        %v3111 = vpop.f32.mrf.mxu0
        %v3112 = vpop.f32.mrf.mxu0
        %v3113 = vpop.f32.mrf.mxu0
        %3114 = vdwg.mxu0
        %v3115 = vadd.f32 %v2994, %v3102
        %v3116 = vadd.f32 %v2995, %v3105
        %v3117 = vadd.f32 %v2996, %v3110
        %v3118 = vld [vmem:[#allocation3 + $0x61] sm:$0xff]
        %v3119 = vld [vmem:[#allocation3 + $0x69] sm:$0xff]
        %v3120 = vld [vmem:[#allocation3 + $0x71] sm:$0x7]
        %v3121 = vpack.c.bf16 %v3119, %v3118
        %v3122 = vpack.c.bf16 %v3120, %v3120
        %s3123 = scalar_lea.vmem [#allocation5], 448
        %v3124 = vld [vmem:[%s3123] sm:$0xf]
        %v3125 = vld [vmem:[%s3123 + $0x4] sm:$0xf]
        %v3126 = vld [vmem:[%s3123 + $0x8] sm:$0xf]
        %v3127 = vld [vmem:[%s3123 + $0xc] sm:$0xf]
        %v3128 = vld [vmem:[%s3123 + $0x10] sm:$0xf]
        %v3129 = vld [vmem:[%s3123 + $0x14] sm:$0xf]
        %v3130 = vld [vmem:[%s3123 + $0x18] sm:$0xf]
        %v3131 = vld [vmem:[%s3123 + $0x1c] sm:$0xf]
        %v3132 = vld [vmem:[%s3123 + $0x20] sm:$0xf]
        %v3133 = vld [vmem:[%s3123 + $0x24] sm:$0xf]
        %v3134 = vld [vmem:[%s3123 + $0x28] sm:$0xf]
        %v3135 = vld [vmem:[%s3123 + $0x2c] sm:$0xf]
        %v3136 = vld [vmem:[%s3123 + $0x30] sm:$0xf]
        %v3137 = vld [vmem:[%s3123 + $0x34] sm:$0xf]
        %v3138 = vld [vmem:[%s3123 + $0x38] sm:$0xf]
        %v3139 = vld [vmem:[%s3123 + $0x3c] sm:$0xf]
        %v3156 = vunpack.c.l.b16 %v3124
        %v3157 = vunpack.c.l.b16 %v3125
        %v3158 = vunpack.c.l.b16 %v3126
        %v3159 = vunpack.c.l.b16 %v3127
        %v3160 = vunpack.c.l.b16 %v3128
        %v3161 = vunpack.c.l.b16 %v3129
        %v3162 = vunpack.c.l.b16 %v3130
        %v3163 = vunpack.c.l.b16 %v3131
        %v3164 = vunpack.c.l.b16 %v3132
        %v3165 = vunpack.c.l.b16 %v3133
        %v3166 = vunpack.c.l.b16 %v3134
        %v3167 = vunpack.c.l.b16 %v3135
        %v3168 = vunpack.c.l.b16 %v3136
        %v3169 = vunpack.c.l.b16 %v3137
        %v3170 = vunpack.c.l.b16 %v3138
        %v3171 = vunpack.c.l.b16 %v3139
        %v3172 = vpack.c.b16 %v3157, %v3156
        %v3173 = vpack.c.b16 %v3159, %v3158
        %v3174 = vpack.c.b16 %v3161, %v3160
        %v3175 = vpack.c.b16 %v3163, %v3162
        %v3176 = vpack.c.b16 %v3165, %v3164
        %v3177 = vpack.c.b16 %v3167, %v3166
        %v3178 = vpack.c.b16 %v3169, %v3168
        %v3179 = vpack.c.b16 %v3171, %v3170
        %3188 = vmatprep.subr.bf16.mxu0 0
        %3189 = vmatpush1.bf16.msra.mxu0 %v3179
        %3190 = vmatprep.subr.bf16.mxu0 0
        %3191 = vmatpush1.bf16.msra.mxu0 %v3178
        %3192 = vmatprep.subr.bf16.mxu0 0
        %3193 = vmatpush1.bf16.msra.mxu0 %v3177
        %3194 = vmatprep.subr.bf16.mxu0 0
        %3195 = vmatpush1.bf16.msra.mxu0 %v3176
        %3196 = vmatprep.subr.bf16.mxu0 0
        %3197 = vmatpush1.bf16.msra.mxu0 %v3175
        %3198 = vmatprep.subr.bf16.mxu0 0
        %3199 = vmatpush1.bf16.msra.mxu0 %v3174
        %3200 = vmatprep.subr.bf16.mxu0 0
        %3201 = vmatpush1.bf16.msra.mxu0 %v3173
        %3202 = vmatprep.subr.bf16.mxu0 0
        %3203 = vmatpush1.bf16.msra.mxu0 %v3172
        %3204 = vmatprep.subr.bf16.mxu0 0
        %3205 = vmatpush2.bf16.msra.mxu0 0
        %3206 = vmatprep.subr.bf16.mxu0 0
        %3207 = vmatpush2.bf16.msra.mxu0 0
        %3208 = vmatprep.subr.bf16.mxu0 0
        %3209 = vmatpush2.bf16.msra.mxu0 0
        %3210 = vmatprep.subr.bf16.mxu0 0
        %3211 = vmatpush2.bf16.msra.mxu0 0
        %3212 = vmatprep.subr.bf16.mxu0 0
        %3213 = vmatpush2.bf16.msra.mxu0 0
        %3214 = vmatprep.subr.bf16.mxu0 0
        %3215 = vmatpush2.bf16.msra.mxu0 0
        %3216 = vmatprep.subr.bf16.mxu0 0
        %3217 = vmatpush2.bf16.msra.mxu0 0
        %3218 = vmatprep.subr.bf16.mxu0 0
        %3219 = vmatpush2.bf16.msra.mxu0 0
        %3220 = vmatprep.mubr.bf16.mxu0 0
        %3221 = vmatmul.mubr.bf16.gmra.mxu0 %v3121
        %v3222 = vpop.f32.mrf.mxu0
        %v3223 = vadd.f32 0.0, %v3222
        %v3224 = vpop.f32.mrf.mxu0
        %v3225 = vpop.f32.mrf.mxu0
        %v3226 = vadd.f32 0.0, %v3225
        %v3227 = vpop.f32.mrf.mxu0
        %3228 = vmatprep.mubr.bf16.mxu0 0
        %3229 = vmatmul.mubr.bf16.gmra.mxu0 %v3122
        %v3230 = vpop.f32.mrf.mxu0
        %v3231 = vadd.f32 0.0, %v3230
        %v3232 = vpop.f32.mrf.mxu0
        %v3233 = vpop.f32.mrf.mxu0
        %v3234 = vpop.f32.mrf.mxu0
        %3235 = vdwg.mxu0
        %v3236 = vadd.f32 %v3115, %v3223
        %v3237 = vadd.f32 %v3116, %v3226
        %v3238 = vadd.f32 %v3117, %v3231
        %v3239 = vld [vmem:[#allocation3 + $0x5] sm:$0xff]
        %v3240 = vld [vmem:[#allocation3 + $0xd] sm:$0xff]
        %v3241 = vld [vmem:[#allocation3 + $0x15] sm:$0x7]
        %v3242 = vpack.c.bf16 %v3240, %v3239
        %v3243 = vpack.c.bf16 %v3241, %v3241
        %s3244 = scalar_lea.vmem [#allocation5], 512
        %v3245 = vld [vmem:[%s3244] sm:$0xf]
        %v3246 = vld [vmem:[%s3244 + $0x4] sm:$0xf]
        %v3247 = vld [vmem:[%s3244 + $0x8] sm:$0xf]
        %v3248 = vld [vmem:[%s3244 + $0xc] sm:$0xf]
        %v3249 = vld [vmem:[%s3244 + $0x10] sm:$0xf]
        %v3250 = vld [vmem:[%s3244 + $0x14] sm:$0xf]
        %v3251 = vld [vmem:[%s3244 + $0x18] sm:$0xf]
        %v3252 = vld [vmem:[%s3244 + $0x1c] sm:$0xf]
        %v3253 = vld [vmem:[%s3244 + $0x20] sm:$0xf]
        %v3254 = vld [vmem:[%s3244 + $0x24] sm:$0xf]
        %v3255 = vld [vmem:[%s3244 + $0x28] sm:$0xf]
        %v3256 = vld [vmem:[%s3244 + $0x2c] sm:$0xf]
        %v3257 = vld [vmem:[%s3244 + $0x30] sm:$0xf]
        %v3258 = vld [vmem:[%s3244 + $0x34] sm:$0xf]
        %v3259 = vld [vmem:[%s3244 + $0x38] sm:$0xf]
        %v3260 = vld [vmem:[%s3244 + $0x3c] sm:$0xf]
        %v3277 = vunpack.c.l.b16 %v3245
        %v3278 = vunpack.c.l.b16 %v3246
        %v3279 = vunpack.c.l.b16 %v3247
        %v3280 = vunpack.c.l.b16 %v3248
        %v3281 = vunpack.c.l.b16 %v3249
        %v3282 = vunpack.c.l.b16 %v3250
        %v3283 = vunpack.c.l.b16 %v3251
        %v3284 = vunpack.c.l.b16 %v3252
        %v3285 = vunpack.c.l.b16 %v3253
        %v3286 = vunpack.c.l.b16 %v3254
        %v3287 = vunpack.c.l.b16 %v3255
        %v3288 = vunpack.c.l.b16 %v3256
        %v3289 = vunpack.c.l.b16 %v3257
        %v3290 = vunpack.c.l.b16 %v3258
        %v3291 = vunpack.c.l.b16 %v3259
        %v3292 = vunpack.c.l.b16 %v3260
        %v3293 = vpack.c.b16 %v3278, %v3277
        %v3294 = vpack.c.b16 %v3280, %v3279
        %v3295 = vpack.c.b16 %v3282, %v3281
        %v3296 = vpack.c.b16 %v3284, %v3283
        %v3297 = vpack.c.b16 %v3286, %v3285
        %v3298 = vpack.c.b16 %v3288, %v3287
        %v3299 = vpack.c.b16 %v3290, %v3289
        %v3300 = vpack.c.b16 %v3292, %v3291
        %3309 = vmatprep.subr.bf16.mxu0 0
        %3310 = vmatpush1.bf16.msra.mxu0 %v3300
        %3311 = vmatprep.subr.bf16.mxu0 0
        %3312 = vmatpush1.bf16.msra.mxu0 %v3299
        %3313 = vmatprep.subr.bf16.mxu0 0
        %3314 = vmatpush1.bf16.msra.mxu0 %v3298
        %3315 = vmatprep.subr.bf16.mxu0 0
        %3316 = vmatpush1.bf16.msra.mxu0 %v3297
        %3317 = vmatprep.subr.bf16.mxu0 0
        %3318 = vmatpush1.bf16.msra.mxu0 %v3296
        %3319 = vmatprep.subr.bf16.mxu0 0
        %3320 = vmatpush1.bf16.msra.mxu0 %v3295
        %3321 = vmatprep.subr.bf16.mxu0 0
        %3322 = vmatpush1.bf16.msra.mxu0 %v3294
        %3323 = vmatprep.subr.bf16.mxu0 0
        %3324 = vmatpush1.bf16.msra.mxu0 %v3293
        %3325 = vmatprep.subr.bf16.mxu0 0
        %3326 = vmatpush2.bf16.msra.mxu0 0
        %3327 = vmatprep.subr.bf16.mxu0 0
        %3328 = vmatpush2.bf16.msra.mxu0 0
        %3329 = vmatprep.subr.bf16.mxu0 0
        %3330 = vmatpush2.bf16.msra.mxu0 0
        %3331 = vmatprep.subr.bf16.mxu0 0
        %3332 = vmatpush2.bf16.msra.mxu0 0
        %3333 = vmatprep.subr.bf16.mxu0 0
        %3334 = vmatpush2.bf16.msra.mxu0 0
        %3335 = vmatprep.subr.bf16.mxu0 0
        %3336 = vmatpush2.bf16.msra.mxu0 0
        %3337 = vmatprep.subr.bf16.mxu0 0
        %3338 = vmatpush2.bf16.msra.mxu0 0
        %3339 = vmatprep.subr.bf16.mxu0 0
        %3340 = vmatpush2.bf16.msra.mxu0 0
        %3341 = vmatprep.mubr.bf16.mxu0 0
        %3342 = vmatmul.mubr.bf16.gmra.mxu0 %v3242
        %v3343 = vpop.f32.mrf.mxu0
        %v3344 = vadd.f32 0.0, %v3343
        %v3345 = vpop.f32.mrf.mxu0
        %v3346 = vpop.f32.mrf.mxu0
        %v3347 = vadd.f32 0.0, %v3346
        %v3348 = vpop.f32.mrf.mxu0
        %3349 = vmatprep.mubr.bf16.mxu0 0
        %3350 = vmatmul.mubr.bf16.gmra.mxu0 %v3243
        %v3351 = vpop.f32.mrf.mxu0
        %v3352 = vadd.f32 0.0, %v3351
        %v3353 = vpop.f32.mrf.mxu0
        %v3354 = vpop.f32.mrf.mxu0
        %v3355 = vpop.f32.mrf.mxu0
        %3356 = vdwg.mxu0
        %v3357 = vadd.f32 %v3236, %v3344
        %v3358 = vadd.f32 %v3237, %v3347
        %v3359 = vadd.f32 %v3238, %v3352
        %v3360 = vld [vmem:[#allocation3 + $0x25] sm:$0xff]
        %v3361 = vld [vmem:[#allocation3 + $0x2d] sm:$0xff]
        %v3362 = vld [vmem:[#allocation3 + $0x35] sm:$0x7]
        %v3363 = vpack.c.bf16 %v3361, %v3360
        %v3364 = vpack.c.bf16 %v3362, %v3362
        %s3365 = scalar_lea.vmem [#allocation5], 576
        %v3366 = vld [vmem:[%s3365] sm:$0xf]
        %v3367 = vld [vmem:[%s3365 + $0x4] sm:$0xf]
        %v3368 = vld [vmem:[%s3365 + $0x8] sm:$0xf]
        %v3369 = vld [vmem:[%s3365 + $0xc] sm:$0xf]
        %v3370 = vld [vmem:[%s3365 + $0x10] sm:$0xf]
        %v3371 = vld [vmem:[%s3365 + $0x14] sm:$0xf]
        %v3372 = vld [vmem:[%s3365 + $0x18] sm:$0xf]
        %v3373 = vld [vmem:[%s3365 + $0x1c] sm:$0xf]
        %v3374 = vld [vmem:[%s3365 + $0x20] sm:$0xf]
        %v3375 = vld [vmem:[%s3365 + $0x24] sm:$0xf]
        %v3376 = vld [vmem:[%s3365 + $0x28] sm:$0xf]
        %v3377 = vld [vmem:[%s3365 + $0x2c] sm:$0xf]
        %v3378 = vld [vmem:[%s3365 + $0x30] sm:$0xf]
        %v3379 = vld [vmem:[%s3365 + $0x34] sm:$0xf]
        %v3380 = vld [vmem:[%s3365 + $0x38] sm:$0xf]
        %v3381 = vld [vmem:[%s3365 + $0x3c] sm:$0xf]
        %v3398 = vunpack.c.l.b16 %v3366
        %v3399 = vunpack.c.l.b16 %v3367
        %v3400 = vunpack.c.l.b16 %v3368
        %v3401 = vunpack.c.l.b16 %v3369
        %v3402 = vunpack.c.l.b16 %v3370
        %v3403 = vunpack.c.l.b16 %v3371
        %v3404 = vunpack.c.l.b16 %v3372
        %v3405 = vunpack.c.l.b16 %v3373
        %v3406 = vunpack.c.l.b16 %v3374
        %v3407 = vunpack.c.l.b16 %v3375
        %v3408 = vunpack.c.l.b16 %v3376
        %v3409 = vunpack.c.l.b16 %v3377
        %v3410 = vunpack.c.l.b16 %v3378
        %v3411 = vunpack.c.l.b16 %v3379
        %v3412 = vunpack.c.l.b16 %v3380
        %v3413 = vunpack.c.l.b16 %v3381
        %v3414 = vpack.c.b16 %v3399, %v3398
        %v3415 = vpack.c.b16 %v3401, %v3400
        %v3416 = vpack.c.b16 %v3403, %v3402
        %v3417 = vpack.c.b16 %v3405, %v3404
        %v3418 = vpack.c.b16 %v3407, %v3406
        %v3419 = vpack.c.b16 %v3409, %v3408
        %v3420 = vpack.c.b16 %v3411, %v3410
        %v3421 = vpack.c.b16 %v3413, %v3412
        %3430 = vmatprep.subr.bf16.mxu0 0
        %3431 = vmatpush1.bf16.msra.mxu0 %v3421
        %3432 = vmatprep.subr.bf16.mxu0 0
        %3433 = vmatpush1.bf16.msra.mxu0 %v3420
        %3434 = vmatprep.subr.bf16.mxu0 0
        %3435 = vmatpush1.bf16.msra.mxu0 %v3419
        %3436 = vmatprep.subr.bf16.mxu0 0
        %3437 = vmatpush1.bf16.msra.mxu0 %v3418
        %3438 = vmatprep.subr.bf16.mxu0 0
        %3439 = vmatpush1.bf16.msra.mxu0 %v3417
        %3440 = vmatprep.subr.bf16.mxu0 0
        %3441 = vmatpush1.bf16.msra.mxu0 %v3416
        %3442 = vmatprep.subr.bf16.mxu0 0
        %3443 = vmatpush1.bf16.msra.mxu0 %v3415
        %3444 = vmatprep.subr.bf16.mxu0 0
        %3445 = vmatpush1.bf16.msra.mxu0 %v3414
        %3446 = vmatprep.subr.bf16.mxu0 0
        %3447 = vmatpush2.bf16.msra.mxu0 0
        %3448 = vmatprep.subr.bf16.mxu0 0
        %3449 = vmatpush2.bf16.msra.mxu0 0
        %3450 = vmatprep.subr.bf16.mxu0 0
        %3451 = vmatpush2.bf16.msra.mxu0 0
        %3452 = vmatprep.subr.bf16.mxu0 0
        %3453 = vmatpush2.bf16.msra.mxu0 0
        %3454 = vmatprep.subr.bf16.mxu0 0
        %3455 = vmatpush2.bf16.msra.mxu0 0
        %3456 = vmatprep.subr.bf16.mxu0 0
        %3457 = vmatpush2.bf16.msra.mxu0 0
        %3458 = vmatprep.subr.bf16.mxu0 0
        %3459 = vmatpush2.bf16.msra.mxu0 0
        %3460 = vmatprep.subr.bf16.mxu0 0
        %3461 = vmatpush2.bf16.msra.mxu0 0
        %3462 = vmatprep.mubr.bf16.mxu0 0
        %3463 = vmatmul.mubr.bf16.gmra.mxu0 %v3363
        %v3464 = vpop.f32.mrf.mxu0
        %v3465 = vadd.f32 0.0, %v3464
        %v3466 = vpop.f32.mrf.mxu0
        %v3467 = vpop.f32.mrf.mxu0
        %v3468 = vadd.f32 0.0, %v3467
        %v3469 = vpop.f32.mrf.mxu0
        %3470 = vmatprep.mubr.bf16.mxu0 0
        %3471 = vmatmul.mubr.bf16.gmra.mxu0 %v3364
        %v3472 = vpop.f32.mrf.mxu0
        %v3473 = vadd.f32 0.0, %v3472
        %v3474 = vpop.f32.mrf.mxu0
        %v3475 = vpop.f32.mrf.mxu0
        %v3476 = vpop.f32.mrf.mxu0
        %3477 = vdwg.mxu0
        %v3478 = vadd.f32 %v3357, %v3465
        %v3479 = vadd.f32 %v3358, %v3468
        %v3480 = vadd.f32 %v3359, %v3473
        %v3481 = vld [vmem:[#allocation3 + $0x6] sm:$0xff]
        %v3482 = vld [vmem:[#allocation3 + $0xe] sm:$0xff]
        %v3483 = vld [vmem:[#allocation3 + $0x16] sm:$0x7]
        %v3484 = vpack.c.bf16 %v3482, %v3481
        %v3485 = vpack.c.bf16 %v3483, %v3483
        %s3486 = scalar_lea.vmem [#allocation5], 640
        %v3487 = vld [vmem:[%s3486] sm:$0xf]
        %v3488 = vld [vmem:[%s3486 + $0x4] sm:$0xf]
        %v3489 = vld [vmem:[%s3486 + $0x8] sm:$0xf]
        %v3490 = vld [vmem:[%s3486 + $0xc] sm:$0xf]
        %v3491 = vld [vmem:[%s3486 + $0x10] sm:$0xf]
        %v3492 = vld [vmem:[%s3486 + $0x14] sm:$0xf]
        %v3493 = vld [vmem:[%s3486 + $0x18] sm:$0xf]
        %v3494 = vld [vmem:[%s3486 + $0x1c] sm:$0xf]
        %v3495 = vld [vmem:[%s3486 + $0x20] sm:$0xf]
        %v3496 = vld [vmem:[%s3486 + $0x24] sm:$0xf]
        %v3497 = vld [vmem:[%s3486 + $0x28] sm:$0xf]
        %v3498 = vld [vmem:[%s3486 + $0x2c] sm:$0xf]
        %v3499 = vld [vmem:[%s3486 + $0x30] sm:$0xf]
        %v3500 = vld [vmem:[%s3486 + $0x34] sm:$0xf]
        %v3501 = vld [vmem:[%s3486 + $0x38] sm:$0xf]
        %v3502 = vld [vmem:[%s3486 + $0x3c] sm:$0xf]
        %v3519 = vunpack.c.l.b16 %v3487
        %v3520 = vunpack.c.l.b16 %v3488
        %v3521 = vunpack.c.l.b16 %v3489
        %v3522 = vunpack.c.l.b16 %v3490
        %v3523 = vunpack.c.l.b16 %v3491
        %v3524 = vunpack.c.l.b16 %v3492
        %v3525 = vunpack.c.l.b16 %v3493
        %v3526 = vunpack.c.l.b16 %v3494
        %v3527 = vunpack.c.l.b16 %v3495
        %v3528 = vunpack.c.l.b16 %v3496
        %v3529 = vunpack.c.l.b16 %v3497
        %v3530 = vunpack.c.l.b16 %v3498
        %v3531 = vunpack.c.l.b16 %v3499
        %v3532 = vunpack.c.l.b16 %v3500
        %v3533 = vunpack.c.l.b16 %v3501
        %v3534 = vunpack.c.l.b16 %v3502
        %v3535 = vpack.c.b16 %v3520, %v3519
        %v3536 = vpack.c.b16 %v3522, %v3521
        %v3537 = vpack.c.b16 %v3524, %v3523
        %v3538 = vpack.c.b16 %v3526, %v3525
        %v3539 = vpack.c.b16 %v3528, %v3527
        %v3540 = vpack.c.b16 %v3530, %v3529
        %v3541 = vpack.c.b16 %v3532, %v3531
        %v3542 = vpack.c.b16 %v3534, %v3533
        %3551 = vmatprep.subr.bf16.mxu0 0
        %3552 = vmatpush1.bf16.msra.mxu0 %v3542
        %3553 = vmatprep.subr.bf16.mxu0 0
        %3554 = vmatpush1.bf16.msra.mxu0 %v3541
        %3555 = vmatprep.subr.bf16.mxu0 0
        %3556 = vmatpush1.bf16.msra.mxu0 %v3540
        %3557 = vmatprep.subr.bf16.mxu0 0
        %3558 = vmatpush1.bf16.msra.mxu0 %v3539
        %3559 = vmatprep.subr.bf16.mxu0 0
        %3560 = vmatpush1.bf16.msra.mxu0 %v3538
        %3561 = vmatprep.subr.bf16.mxu0 0
        %3562 = vmatpush1.bf16.msra.mxu0 %v3537
        %3563 = vmatprep.subr.bf16.mxu0 0
        %3564 = vmatpush1.bf16.msra.mxu0 %v3536
        %3565 = vmatprep.subr.bf16.mxu0 0
        %3566 = vmatpush1.bf16.msra.mxu0 %v3535
        %3567 = vmatprep.subr.bf16.mxu0 0
        %3568 = vmatpush2.bf16.msra.mxu0 0
        %3569 = vmatprep.subr.bf16.mxu0 0
        %3570 = vmatpush2.bf16.msra.mxu0 0
        %3571 = vmatprep.subr.bf16.mxu0 0
        %3572 = vmatpush2.bf16.msra.mxu0 0
        %3573 = vmatprep.subr.bf16.mxu0 0
        %3574 = vmatpush2.bf16.msra.mxu0 0
        %3575 = vmatprep.subr.bf16.mxu0 0
        %3576 = vmatpush2.bf16.msra.mxu0 0
        %3577 = vmatprep.subr.bf16.mxu0 0
        %3578 = vmatpush2.bf16.msra.mxu0 0
        %3579 = vmatprep.subr.bf16.mxu0 0
        %3580 = vmatpush2.bf16.msra.mxu0 0
        %3581 = vmatprep.subr.bf16.mxu0 0
        %3582 = vmatpush2.bf16.msra.mxu0 0
        %3583 = vmatprep.mubr.bf16.mxu0 0
        %3584 = vmatmul.mubr.bf16.gmra.mxu0 %v3484
        %v3585 = vpop.f32.mrf.mxu0
        %v3586 = vadd.f32 0.0, %v3585
        %v3587 = vpop.f32.mrf.mxu0
        %v3588 = vpop.f32.mrf.mxu0
        %v3589 = vadd.f32 0.0, %v3588
        %v3590 = vpop.f32.mrf.mxu0
        %3591 = vmatprep.mubr.bf16.mxu0 0
        %3592 = vmatmul.mubr.bf16.gmra.mxu0 %v3485
        %v3593 = vpop.f32.mrf.mxu0
        %v3594 = vadd.f32 0.0, %v3593
        %v3595 = vpop.f32.mrf.mxu0
        %v3596 = vpop.f32.mrf.mxu0
        %v3597 = vpop.f32.mrf.mxu0
        %3598 = vdwg.mxu0
        %v3599 = vadd.f32 %v3478, %v3586
        %v3600 = vadd.f32 %v3479, %v3589
        %v3601 = vadd.f32 %v3480, %v3594
        %v3602 = vld [vmem:[#allocation3 + $0x26] sm:$0xff]
        %v3603 = vld [vmem:[#allocation3 + $0x2e] sm:$0xff]
        %v3604 = vld [vmem:[#allocation3 + $0x36] sm:$0x7]
        %v3605 = vpack.c.bf16 %v3603, %v3602
        %v3606 = vpack.c.bf16 %v3604, %v3604
        %s3607 = scalar_lea.vmem [#allocation5], 704
        %v3608 = vld [vmem:[%s3607] sm:$0xf]
        %v3609 = vld [vmem:[%s3607 + $0x4] sm:$0xf]
        %v3610 = vld [vmem:[%s3607 + $0x8] sm:$0xf]
        %v3611 = vld [vmem:[%s3607 + $0xc] sm:$0xf]
        %v3612 = vld [vmem:[%s3607 + $0x10] sm:$0xf]
        %v3613 = vld [vmem:[%s3607 + $0x14] sm:$0xf]
        %v3614 = vld [vmem:[%s3607 + $0x18] sm:$0xf]
        %v3615 = vld [vmem:[%s3607 + $0x1c] sm:$0xf]
        %v3616 = vld [vmem:[%s3607 + $0x20] sm:$0xf]
        %v3617 = vld [vmem:[%s3607 + $0x24] sm:$0xf]
        %v3618 = vld [vmem:[%s3607 + $0x28] sm:$0xf]
        %v3619 = vld [vmem:[%s3607 + $0x2c] sm:$0xf]
        %v3620 = vld [vmem:[%s3607 + $0x30] sm:$0xf]
        %v3621 = vld [vmem:[%s3607 + $0x34] sm:$0xf]
        %v3622 = vld [vmem:[%s3607 + $0x38] sm:$0xf]
        %v3623 = vld [vmem:[%s3607 + $0x3c] sm:$0xf]
        %v3640 = vunpack.c.l.b16 %v3608
        %v3641 = vunpack.c.l.b16 %v3609
        %v3642 = vunpack.c.l.b16 %v3610
        %v3643 = vunpack.c.l.b16 %v3611
        %v3644 = vunpack.c.l.b16 %v3612
        %v3645 = vunpack.c.l.b16 %v3613
        %v3646 = vunpack.c.l.b16 %v3614
        %v3647 = vunpack.c.l.b16 %v3615
        %v3648 = vunpack.c.l.b16 %v3616
        %v3649 = vunpack.c.l.b16 %v3617
        %v3650 = vunpack.c.l.b16 %v3618
        %v3651 = vunpack.c.l.b16 %v3619
        %v3652 = vunpack.c.l.b16 %v3620
        %v3653 = vunpack.c.l.b16 %v3621
        %v3654 = vunpack.c.l.b16 %v3622
        %v3655 = vunpack.c.l.b16 %v3623
        %v3656 = vpack.c.b16 %v3641, %v3640
        %v3657 = vpack.c.b16 %v3643, %v3642
        %v3658 = vpack.c.b16 %v3645, %v3644
        %v3659 = vpack.c.b16 %v3647, %v3646
        %v3660 = vpack.c.b16 %v3649, %v3648
        %v3661 = vpack.c.b16 %v3651, %v3650
        %v3662 = vpack.c.b16 %v3653, %v3652
        %v3663 = vpack.c.b16 %v3655, %v3654
        %3672 = vmatprep.subr.bf16.mxu0 0
        %3673 = vmatpush1.bf16.msra.mxu0 %v3663
        %3674 = vmatprep.subr.bf16.mxu0 0
        %3675 = vmatpush1.bf16.msra.mxu0 %v3662
        %3676 = vmatprep.subr.bf16.mxu0 0
        %3677 = vmatpush1.bf16.msra.mxu0 %v3661
        %3678 = vmatprep.subr.bf16.mxu0 0
        %3679 = vmatpush1.bf16.msra.mxu0 %v3660
        %3680 = vmatprep.subr.bf16.mxu0 0
        %3681 = vmatpush1.bf16.msra.mxu0 %v3659
        %3682 = vmatprep.subr.bf16.mxu0 0
        %3683 = vmatpush1.bf16.msra.mxu0 %v3658
        %3684 = vmatprep.subr.bf16.mxu0 0
        %3685 = vmatpush1.bf16.msra.mxu0 %v3657
        %3686 = vmatprep.subr.bf16.mxu0 0
        %3687 = vmatpush1.bf16.msra.mxu0 %v3656
        %3688 = vmatprep.subr.bf16.mxu0 0
        %3689 = vmatpush2.bf16.msra.mxu0 0
        %3690 = vmatprep.subr.bf16.mxu0 0
        %3691 = vmatpush2.bf16.msra.mxu0 0
        %3692 = vmatprep.subr.bf16.mxu0 0
        %3693 = vmatpush2.bf16.msra.mxu0 0
        %3694 = vmatprep.subr.bf16.mxu0 0
        %3695 = vmatpush2.bf16.msra.mxu0 0
        %3696 = vmatprep.subr.bf16.mxu0 0
        %3697 = vmatpush2.bf16.msra.mxu0 0
        %3698 = vmatprep.subr.bf16.mxu0 0
        %3699 = vmatpush2.bf16.msra.mxu0 0
        %3700 = vmatprep.subr.bf16.mxu0 0
        %3701 = vmatpush2.bf16.msra.mxu0 0
        %3702 = vmatprep.subr.bf16.mxu0 0
        %3703 = vmatpush2.bf16.msra.mxu0 0
        %3704 = vmatprep.mubr.bf16.mxu0 0
        %3705 = vmatmul.mubr.bf16.gmra.mxu0 %v3605
        %v3706 = vpop.f32.mrf.mxu0
        %v3707 = vadd.f32 0.0, %v3706
        %v3708 = vpop.f32.mrf.mxu0
        %v3709 = vpop.f32.mrf.mxu0
        %v3710 = vadd.f32 0.0, %v3709
        %v3711 = vpop.f32.mrf.mxu0
        %3712 = vmatprep.mubr.bf16.mxu0 0
        %3713 = vmatmul.mubr.bf16.gmra.mxu0 %v3606
        %v3714 = vpop.f32.mrf.mxu0
        %v3715 = vadd.f32 0.0, %v3714
        %v3716 = vpop.f32.mrf.mxu0
        %v3717 = vpop.f32.mrf.mxu0
        %v3718 = vpop.f32.mrf.mxu0
        %3719 = vdwg.mxu0
        %v3720 = vadd.f32 %v3599, %v3707
        %v3721 = vadd.f32 %v3600, %v3710
        %v3722 = vadd.f32 %v3601, %v3715
        %v3723 = vld [vmem:[#allocation3 + $0x45] sm:$0xff]
        %v3724 = vld [vmem:[#allocation3 + $0x4d] sm:$0xff]
        %v3725 = vld [vmem:[#allocation3 + $0x55] sm:$0x7]
        %v3726 = vpack.c.bf16 %v3724, %v3723
        %v3727 = vpack.c.bf16 %v3725, %v3725
        %s3728 = scalar_lea.vmem [#allocation5], 768
        %v3729 = vld [vmem:[%s3728] sm:$0xf]
        %v3730 = vld [vmem:[%s3728 + $0x4] sm:$0xf]
        %v3731 = vld [vmem:[%s3728 + $0x8] sm:$0xf]
        %v3732 = vld [vmem:[%s3728 + $0xc] sm:$0xf]
        %v3733 = vld [vmem:[%s3728 + $0x10] sm:$0xf]
        %v3734 = vld [vmem:[%s3728 + $0x14] sm:$0xf]
        %v3735 = vld [vmem:[%s3728 + $0x18] sm:$0xf]
        %v3736 = vld [vmem:[%s3728 + $0x1c] sm:$0xf]
        %v3737 = vld [vmem:[%s3728 + $0x20] sm:$0xf]
        %v3738 = vld [vmem:[%s3728 + $0x24] sm:$0xf]
        %v3739 = vld [vmem:[%s3728 + $0x28] sm:$0xf]
        %v3740 = vld [vmem:[%s3728 + $0x2c] sm:$0xf]
        %v3741 = vld [vmem:[%s3728 + $0x30] sm:$0xf]
        %v3742 = vld [vmem:[%s3728 + $0x34] sm:$0xf]
        %v3743 = vld [vmem:[%s3728 + $0x38] sm:$0xf]
        %v3744 = vld [vmem:[%s3728 + $0x3c] sm:$0xf]
        %v3761 = vunpack.c.l.b16 %v3729
        %v3762 = vunpack.c.l.b16 %v3730
        %v3763 = vunpack.c.l.b16 %v3731
        %v3764 = vunpack.c.l.b16 %v3732
        %v3765 = vunpack.c.l.b16 %v3733
        %v3766 = vunpack.c.l.b16 %v3734
        %v3767 = vunpack.c.l.b16 %v3735
        %v3768 = vunpack.c.l.b16 %v3736
        %v3769 = vunpack.c.l.b16 %v3737
        %v3770 = vunpack.c.l.b16 %v3738
        %v3771 = vunpack.c.l.b16 %v3739
        %v3772 = vunpack.c.l.b16 %v3740
        %v3773 = vunpack.c.l.b16 %v3741
        %v3774 = vunpack.c.l.b16 %v3742
        %v3775 = vunpack.c.l.b16 %v3743
        %v3776 = vunpack.c.l.b16 %v3744
        %v3777 = vpack.c.b16 %v3762, %v3761
        %v3778 = vpack.c.b16 %v3764, %v3763
        %v3779 = vpack.c.b16 %v3766, %v3765
        %v3780 = vpack.c.b16 %v3768, %v3767
        %v3781 = vpack.c.b16 %v3770, %v3769
        %v3782 = vpack.c.b16 %v3772, %v3771
        %v3783 = vpack.c.b16 %v3774, %v3773
        %v3784 = vpack.c.b16 %v3776, %v3775
        %3793 = vmatprep.subr.bf16.mxu0 0
        %3794 = vmatpush1.bf16.msra.mxu0 %v3784
        %3795 = vmatprep.subr.bf16.mxu0 0
        %3796 = vmatpush1.bf16.msra.mxu0 %v3783
        %3797 = vmatprep.subr.bf16.mxu0 0
        %3798 = vmatpush1.bf16.msra.mxu0 %v3782
        %3799 = vmatprep.subr.bf16.mxu0 0
        %3800 = vmatpush1.bf16.msra.mxu0 %v3781
        %3801 = vmatprep.subr.bf16.mxu0 0
        %3802 = vmatpush1.bf16.msra.mxu0 %v3780
        %3803 = vmatprep.subr.bf16.mxu0 0
        %3804 = vmatpush1.bf16.msra.mxu0 %v3779
        %3805 = vmatprep.subr.bf16.mxu0 0
        %3806 = vmatpush1.bf16.msra.mxu0 %v3778
        %3807 = vmatprep.subr.bf16.mxu0 0
        %3808 = vmatpush1.bf16.msra.mxu0 %v3777
        %3809 = vmatprep.subr.bf16.mxu0 0
        %3810 = vmatpush2.bf16.msra.mxu0 0
        %3811 = vmatprep.subr.bf16.mxu0 0
        %3812 = vmatpush2.bf16.msra.mxu0 0
        %3813 = vmatprep.subr.bf16.mxu0 0
        %3814 = vmatpush2.bf16.msra.mxu0 0
        %3815 = vmatprep.subr.bf16.mxu0 0
        %3816 = vmatpush2.bf16.msra.mxu0 0
        %3817 = vmatprep.subr.bf16.mxu0 0
        %3818 = vmatpush2.bf16.msra.mxu0 0
        %3819 = vmatprep.subr.bf16.mxu0 0
        %3820 = vmatpush2.bf16.msra.mxu0 0
        %3821 = vmatprep.subr.bf16.mxu0 0
        %3822 = vmatpush2.bf16.msra.mxu0 0
        %3823 = vmatprep.subr.bf16.mxu0 0
        %3824 = vmatpush2.bf16.msra.mxu0 0
        %3825 = vmatprep.mubr.bf16.mxu0 0
        %3826 = vmatmul.mubr.bf16.gmra.mxu0 %v3726
        %v3827 = vpop.f32.mrf.mxu0
        %v3828 = vadd.f32 0.0, %v3827
        %v3829 = vpop.f32.mrf.mxu0
        %v3830 = vpop.f32.mrf.mxu0
        %v3831 = vadd.f32 0.0, %v3830
        %v3832 = vpop.f32.mrf.mxu0
        %3833 = vmatprep.mubr.bf16.mxu0 0
        %3834 = vmatmul.mubr.bf16.gmra.mxu0 %v3727
        %v3835 = vpop.f32.mrf.mxu0
        %v3836 = vadd.f32 0.0, %v3835
        %v3837 = vpop.f32.mrf.mxu0
        %v3838 = vpop.f32.mrf.mxu0
        %v3839 = vpop.f32.mrf.mxu0
        %3840 = vdwg.mxu0
        %v3841 = vadd.f32 %v3720, %v3828
        %v3842 = vadd.f32 %v3721, %v3831
        %v3843 = vadd.f32 %v3722, %v3836
        %v3844 = vld [vmem:[#allocation3 + $0x65] sm:$0xff]
        %v3845 = vld [vmem:[#allocation3 + $0x6d] sm:$0xff]
        %v3846 = vld [vmem:[#allocation3 + $0x75] sm:$0x7]
        %v3847 = vpack.c.bf16 %v3845, %v3844
        %v3848 = vpack.c.bf16 %v3846, %v3846
        %s3849 = scalar_lea.vmem [#allocation5], 832
        %v3850 = vld [vmem:[%s3849] sm:$0xf]
        %v3851 = vld [vmem:[%s3849 + $0x4] sm:$0xf]
        %v3852 = vld [vmem:[%s3849 + $0x8] sm:$0xf]
        %v3853 = vld [vmem:[%s3849 + $0xc] sm:$0xf]
        %v3854 = vld [vmem:[%s3849 + $0x10] sm:$0xf]
        %v3855 = vld [vmem:[%s3849 + $0x14] sm:$0xf]
        %v3856 = vld [vmem:[%s3849 + $0x18] sm:$0xf]
        %v3857 = vld [vmem:[%s3849 + $0x1c] sm:$0xf]
        %v3858 = vld [vmem:[%s3849 + $0x20] sm:$0xf]
        %v3859 = vld [vmem:[%s3849 + $0x24] sm:$0xf]
        %v3860 = vld [vmem:[%s3849 + $0x28] sm:$0xf]
        %v3861 = vld [vmem:[%s3849 + $0x2c] sm:$0xf]
        %v3862 = vld [vmem:[%s3849 + $0x30] sm:$0xf]
        %v3863 = vld [vmem:[%s3849 + $0x34] sm:$0xf]
        %v3864 = vld [vmem:[%s3849 + $0x38] sm:$0xf]
        %v3865 = vld [vmem:[%s3849 + $0x3c] sm:$0xf]
        %v3882 = vunpack.c.l.b16 %v3850
        %v3883 = vunpack.c.l.b16 %v3851
        %v3884 = vunpack.c.l.b16 %v3852
        %v3885 = vunpack.c.l.b16 %v3853
        %v3886 = vunpack.c.l.b16 %v3854
        %v3887 = vunpack.c.l.b16 %v3855
        %v3888 = vunpack.c.l.b16 %v3856
        %v3889 = vunpack.c.l.b16 %v3857
        %v3890 = vunpack.c.l.b16 %v3858
        %v3891 = vunpack.c.l.b16 %v3859
        %v3892 = vunpack.c.l.b16 %v3860
        %v3893 = vunpack.c.l.b16 %v3861
        %v3894 = vunpack.c.l.b16 %v3862
        %v3895 = vunpack.c.l.b16 %v3863
        %v3896 = vunpack.c.l.b16 %v3864
        %v3897 = vunpack.c.l.b16 %v3865
        %v3898 = vpack.c.b16 %v3883, %v3882
        %v3899 = vpack.c.b16 %v3885, %v3884
        %v3900 = vpack.c.b16 %v3887, %v3886
        %v3901 = vpack.c.b16 %v3889, %v3888
        %v3902 = vpack.c.b16 %v3891, %v3890
        %v3903 = vpack.c.b16 %v3893, %v3892
        %v3904 = vpack.c.b16 %v3895, %v3894
        %v3905 = vpack.c.b16 %v3897, %v3896
        %3914 = vmatprep.subr.bf16.mxu0 0
        %3915 = vmatpush1.bf16.msra.mxu0 %v3905
        %3916 = vmatprep.subr.bf16.mxu0 0
        %3917 = vmatpush1.bf16.msra.mxu0 %v3904
        %3918 = vmatprep.subr.bf16.mxu0 0
        %3919 = vmatpush1.bf16.msra.mxu0 %v3903
        %3920 = vmatprep.subr.bf16.mxu0 0
        %3921 = vmatpush1.bf16.msra.mxu0 %v3902
        %3922 = vmatprep.subr.bf16.mxu0 0
        %3923 = vmatpush1.bf16.msra.mxu0 %v3901
        %3924 = vmatprep.subr.bf16.mxu0 0
        %3925 = vmatpush1.bf16.msra.mxu0 %v3900
        %3926 = vmatprep.subr.bf16.mxu0 0
        %3927 = vmatpush1.bf16.msra.mxu0 %v3899
        %3928 = vmatprep.subr.bf16.mxu0 0
        %3929 = vmatpush1.bf16.msra.mxu0 %v3898
        %3930 = vmatprep.subr.bf16.mxu0 0
        %3931 = vmatpush2.bf16.msra.mxu0 0
        %3932 = vmatprep.subr.bf16.mxu0 0
        %3933 = vmatpush2.bf16.msra.mxu0 0
        %3934 = vmatprep.subr.bf16.mxu0 0
        %3935 = vmatpush2.bf16.msra.mxu0 0
        %3936 = vmatprep.subr.bf16.mxu0 0
        %3937 = vmatpush2.bf16.msra.mxu0 0
        %3938 = vmatprep.subr.bf16.mxu0 0
        %3939 = vmatpush2.bf16.msra.mxu0 0
        %3940 = vmatprep.subr.bf16.mxu0 0
        %3941 = vmatpush2.bf16.msra.mxu0 0
        %3942 = vmatprep.subr.bf16.mxu0 0
        %3943 = vmatpush2.bf16.msra.mxu0 0
        %3944 = vmatprep.subr.bf16.mxu0 0
        %3945 = vmatpush2.bf16.msra.mxu0 0
        %3946 = vmatprep.mubr.bf16.mxu0 0
        %3947 = vmatmul.mubr.bf16.gmra.mxu0 %v3847
        %v3948 = vpop.f32.mrf.mxu0
        %v3949 = vadd.f32 0.0, %v3948
        %v3950 = vpop.f32.mrf.mxu0
        %v3951 = vpop.f32.mrf.mxu0
        %v3952 = vadd.f32 0.0, %v3951
        %v3953 = vpop.f32.mrf.mxu0
        %3954 = vmatprep.mubr.bf16.mxu0 0
        %3955 = vmatmul.mubr.bf16.gmra.mxu0 %v3848
        %v3956 = vpop.f32.mrf.mxu0
        %v3957 = vadd.f32 0.0, %v3956
        %v3958 = vpop.f32.mrf.mxu0
        %v3959 = vpop.f32.mrf.mxu0
        %v3960 = vpop.f32.mrf.mxu0
        %3961 = vdwg.mxu0
        %v3962 = vadd.f32 %v3841, %v3949
        %v3963 = vadd.f32 %v3842, %v3952
        %v3964 = vadd.f32 %v3843, %v3957
        %v3965 = vld [vmem:[#allocation3 + $0x46] sm:$0xff]
        %v3966 = vld [vmem:[#allocation3 + $0x4e] sm:$0xff]
        %v3967 = vld [vmem:[#allocation3 + $0x56] sm:$0x7]
        %v3968 = vpack.c.bf16 %v3966, %v3965
        %v3969 = vpack.c.bf16 %v3967, %v3967
        %s3970 = scalar_lea.vmem [#allocation5], 896
        %v3971 = vld [vmem:[%s3970] sm:$0xf]
        %v3972 = vld [vmem:[%s3970 + $0x4] sm:$0xf]
        %v3973 = vld [vmem:[%s3970 + $0x8] sm:$0xf]
        %v3974 = vld [vmem:[%s3970 + $0xc] sm:$0xf]
        %v3975 = vld [vmem:[%s3970 + $0x10] sm:$0xf]
        %v3976 = vld [vmem:[%s3970 + $0x14] sm:$0xf]
        %v3977 = vld [vmem:[%s3970 + $0x18] sm:$0xf]
        %v3978 = vld [vmem:[%s3970 + $0x1c] sm:$0xf]
        %v3979 = vld [vmem:[%s3970 + $0x20] sm:$0xf]
        %v3980 = vld [vmem:[%s3970 + $0x24] sm:$0xf]
        %v3981 = vld [vmem:[%s3970 + $0x28] sm:$0xf]
        %v3982 = vld [vmem:[%s3970 + $0x2c] sm:$0xf]
        %v3983 = vld [vmem:[%s3970 + $0x30] sm:$0xf]
        %v3984 = vld [vmem:[%s3970 + $0x34] sm:$0xf]
        %v3985 = vld [vmem:[%s3970 + $0x38] sm:$0xf]
        %v3986 = vld [vmem:[%s3970 + $0x3c] sm:$0xf]
        %v4003 = vunpack.c.l.b16 %v3971
        %v4004 = vunpack.c.l.b16 %v3972
        %v4005 = vunpack.c.l.b16 %v3973
        %v4006 = vunpack.c.l.b16 %v3974
        %v4007 = vunpack.c.l.b16 %v3975
        %v4008 = vunpack.c.l.b16 %v3976
        %v4009 = vunpack.c.l.b16 %v3977
        %v4010 = vunpack.c.l.b16 %v3978
        %v4011 = vunpack.c.l.b16 %v3979
        %v4012 = vunpack.c.l.b16 %v3980
        %v4013 = vunpack.c.l.b16 %v3981
        %v4014 = vunpack.c.l.b16 %v3982
        %v4015 = vunpack.c.l.b16 %v3983
        %v4016 = vunpack.c.l.b16 %v3984
        %v4017 = vunpack.c.l.b16 %v3985
        %v4018 = vunpack.c.l.b16 %v3986
        %v4019 = vpack.c.b16 %v4004, %v4003
        %v4020 = vpack.c.b16 %v4006, %v4005
        %v4021 = vpack.c.b16 %v4008, %v4007
        %v4022 = vpack.c.b16 %v4010, %v4009
        %v4023 = vpack.c.b16 %v4012, %v4011
        %v4024 = vpack.c.b16 %v4014, %v4013
        %v4025 = vpack.c.b16 %v4016, %v4015
        %v4026 = vpack.c.b16 %v4018, %v4017
        %4035 = vmatprep.subr.bf16.mxu0 0
        %4036 = vmatpush1.bf16.msra.mxu0 %v4026
        %4037 = vmatprep.subr.bf16.mxu0 0
        %4038 = vmatpush1.bf16.msra.mxu0 %v4025
        %4039 = vmatprep.subr.bf16.mxu0 0
        %4040 = vmatpush1.bf16.msra.mxu0 %v4024
        %4041 = vmatprep.subr.bf16.mxu0 0
        %4042 = vmatpush1.bf16.msra.mxu0 %v4023
        %4043 = vmatprep.subr.bf16.mxu0 0
        %4044 = vmatpush1.bf16.msra.mxu0 %v4022
        %4045 = vmatprep.subr.bf16.mxu0 0
        %4046 = vmatpush1.bf16.msra.mxu0 %v4021
        %4047 = vmatprep.subr.bf16.mxu0 0
        %4048 = vmatpush1.bf16.msra.mxu0 %v4020
        %4049 = vmatprep.subr.bf16.mxu0 0
        %4050 = vmatpush1.bf16.msra.mxu0 %v4019
        %4051 = vmatprep.subr.bf16.mxu0 0
        %4052 = vmatpush2.bf16.msra.mxu0 0
        %4053 = vmatprep.subr.bf16.mxu0 0
        %4054 = vmatpush2.bf16.msra.mxu0 0
        %4055 = vmatprep.subr.bf16.mxu0 0
        %4056 = vmatpush2.bf16.msra.mxu0 0
        %4057 = vmatprep.subr.bf16.mxu0 0
        %4058 = vmatpush2.bf16.msra.mxu0 0
        %4059 = vmatprep.subr.bf16.mxu0 0
        %4060 = vmatpush2.bf16.msra.mxu0 0
        %4061 = vmatprep.subr.bf16.mxu0 0
        %4062 = vmatpush2.bf16.msra.mxu0 0
        %4063 = vmatprep.subr.bf16.mxu0 0
        %4064 = vmatpush2.bf16.msra.mxu0 0
        %4065 = vmatprep.subr.bf16.mxu0 0
        %4066 = vmatpush2.bf16.msra.mxu0 0
        %4067 = vmatprep.mubr.bf16.mxu0 0
        %4068 = vmatmul.mubr.bf16.gmra.mxu0 %v3968
        %v4069 = vpop.f32.mrf.mxu0
        %v4070 = vadd.f32 0.0, %v4069
        %v4071 = vpop.f32.mrf.mxu0
        %v4072 = vpop.f32.mrf.mxu0
        %v4073 = vadd.f32 0.0, %v4072
        %v4074 = vpop.f32.mrf.mxu0
        %4075 = vmatprep.mubr.bf16.mxu0 0
        %4076 = vmatmul.mubr.bf16.gmra.mxu0 %v3969
        %v4077 = vpop.f32.mrf.mxu0
        %v4078 = vadd.f32 0.0, %v4077
        %v4079 = vpop.f32.mrf.mxu0
        %v4080 = vpop.f32.mrf.mxu0
        %v4081 = vpop.f32.mrf.mxu0
        %4082 = vdwg.mxu0
        %v4083 = vadd.f32 %v3962, %v4070
        %v4084 = vadd.f32 %v3963, %v4073
        %v4085 = vadd.f32 %v3964, %v4078
        %v4086 = vld [vmem:[#allocation3 + $0x66] sm:$0xff]
        %v4087 = vld [vmem:[#allocation3 + $0x6e] sm:$0xff]
        %v4088 = vld [vmem:[#allocation3 + $0x76] sm:$0x7]
        %v4089 = vpack.c.bf16 %v4087, %v4086
        %v4090 = vpack.c.bf16 %v4088, %v4088
        %s4091 = scalar_lea.vmem [#allocation5], 960
        %v4092 = vld [vmem:[%s4091] sm:$0xf]
        %v4093 = vld [vmem:[%s4091 + $0x4] sm:$0xf]
        %v4094 = vld [vmem:[%s4091 + $0x8] sm:$0xf]
        %v4095 = vld [vmem:[%s4091 + $0xc] sm:$0xf]
        %v4096 = vld [vmem:[%s4091 + $0x10] sm:$0xf]
        %v4097 = vld [vmem:[%s4091 + $0x14] sm:$0xf]
        %v4098 = vld [vmem:[%s4091 + $0x18] sm:$0xf]
        %v4099 = vld [vmem:[%s4091 + $0x1c] sm:$0xf]
        %v4100 = vld [vmem:[%s4091 + $0x20] sm:$0xf]
        %v4101 = vld [vmem:[%s4091 + $0x24] sm:$0xf]
        %v4102 = vld [vmem:[%s4091 + $0x28] sm:$0xf]
        %v4103 = vld [vmem:[%s4091 + $0x2c] sm:$0xf]
        %v4104 = vld [vmem:[%s4091 + $0x30] sm:$0xf]
        %v4105 = vld [vmem:[%s4091 + $0x34] sm:$0xf]
        %v4106 = vld [vmem:[%s4091 + $0x38] sm:$0xf]
        %v4107 = vld [vmem:[%s4091 + $0x3c] sm:$0xf]
        %v4124 = vunpack.c.l.b16 %v4092
        %v4125 = vunpack.c.l.b16 %v4093
        %v4126 = vunpack.c.l.b16 %v4094
        %v4127 = vunpack.c.l.b16 %v4095
        %v4128 = vunpack.c.l.b16 %v4096
        %v4129 = vunpack.c.l.b16 %v4097
        %v4130 = vunpack.c.l.b16 %v4098
        %v4131 = vunpack.c.l.b16 %v4099
        %v4132 = vunpack.c.l.b16 %v4100
        %v4133 = vunpack.c.l.b16 %v4101
        %v4134 = vunpack.c.l.b16 %v4102
        %v4135 = vunpack.c.l.b16 %v4103
        %v4136 = vunpack.c.l.b16 %v4104
        %v4137 = vunpack.c.l.b16 %v4105
        %v4138 = vunpack.c.l.b16 %v4106
        %v4139 = vunpack.c.l.b16 %v4107
        %v4140 = vpack.c.b16 %v4125, %v4124
        %v4141 = vpack.c.b16 %v4127, %v4126
        %v4142 = vpack.c.b16 %v4129, %v4128
        %v4143 = vpack.c.b16 %v4131, %v4130
        %v4144 = vpack.c.b16 %v4133, %v4132
        %v4145 = vpack.c.b16 %v4135, %v4134
        %v4146 = vpack.c.b16 %v4137, %v4136
        %v4147 = vpack.c.b16 %v4139, %v4138
        %4156 = vmatprep.subr.bf16.mxu0 0
        %4157 = vmatpush1.bf16.msra.mxu0 %v4147
        %4158 = vmatprep.subr.bf16.mxu0 0
        %4159 = vmatpush1.bf16.msra.mxu0 %v4146
        %4160 = vmatprep.subr.bf16.mxu0 0
        %4161 = vmatpush1.bf16.msra.mxu0 %v4145
        %4162 = vmatprep.subr.bf16.mxu0 0
        %4163 = vmatpush1.bf16.msra.mxu0 %v4144
        %4164 = vmatprep.subr.bf16.mxu0 0
        %4165 = vmatpush1.bf16.msra.mxu0 %v4143
        %4166 = vmatprep.subr.bf16.mxu0 0
        %4167 = vmatpush1.bf16.msra.mxu0 %v4142
        %4168 = vmatprep.subr.bf16.mxu0 0
        %4169 = vmatpush1.bf16.msra.mxu0 %v4141
        %4170 = vmatprep.subr.bf16.mxu0 0
        %4171 = vmatpush1.bf16.msra.mxu0 %v4140
        %4172 = vmatprep.subr.bf16.mxu0 0
        %4173 = vmatpush2.bf16.msra.mxu0 0
        %4174 = vmatprep.subr.bf16.mxu0 0
        %4175 = vmatpush2.bf16.msra.mxu0 0
        %4176 = vmatprep.subr.bf16.mxu0 0
        %4177 = vmatpush2.bf16.msra.mxu0 0
        %4178 = vmatprep.subr.bf16.mxu0 0
        %4179 = vmatpush2.bf16.msra.mxu0 0
        %4180 = vmatprep.subr.bf16.mxu0 0
        %4181 = vmatpush2.bf16.msra.mxu0 0
        %4182 = vmatprep.subr.bf16.mxu0 0
        %4183 = vmatpush2.bf16.msra.mxu0 0
        %4184 = vmatprep.subr.bf16.mxu0 0
        %4185 = vmatpush2.bf16.msra.mxu0 0
        %4186 = vmatprep.subr.bf16.mxu0 0
        %4187 = vmatpush2.bf16.msra.mxu0 0
        %4188 = vmatprep.mubr.bf16.mxu0 0
        %4189 = vmatmul.mubr.bf16.gmra.mxu0 %v4089
        %v4190 = vpop.f32.mrf.mxu0
        %v4191 = vadd.f32 0.0, %v4190
        %v4192 = vpop.f32.mrf.mxu0
        %v4193 = vpop.f32.mrf.mxu0
        %v4194 = vadd.f32 0.0, %v4193
        %v4195 = vpop.f32.mrf.mxu0
        %4196 = vmatprep.mubr.bf16.mxu0 0
        %4197 = vmatmul.mubr.bf16.gmra.mxu0 %v4090
        %v4198 = vpop.f32.mrf.mxu0
        %v4199 = vadd.f32 0.0, %v4198
        %v4200 = vpop.f32.mrf.mxu0
        %v4201 = vpop.f32.mrf.mxu0
        %v4202 = vpop.f32.mrf.mxu0
        %4203 = vdwg.mxu0
        %v4204 = vadd.f32 %v4083, %v4191
        %v4205 = vadd.f32 %v4084, %v4194
        %v4206 = vadd.f32 %v4085, %v4199
        %v4207 = vld [vmem:[%s1 + $0x1] sm:$0x1]
        %v4208 = vlaneseq
        %v4209 = vshrl.u32 %v4208, 7
        %v4210 = vsub.s32 0, %v4209
        %v4211 = vrot.slane %v4207, %v4210
        %v4212 = vadd.f32 %v4204, %v4211
        %v4213 = vadd.f32 %v4205, %v4211
        %v4214 = vadd.f32 %v4206, %v4211
        %vm4215 = vcmp.gt.f32.partialorder %v4212, 0.0
        %vm4216 = vcmp.gt.f32.partialorder %v4213, 0.0
        %vm4217 = vcmp.gt.f32.partialorder %v4214, 0.0
        %v4218 = vmul.f32 %v4212, 0.01
        %v4219 = vmul.f32 %v4213, 0.01
        %v4220 = vmul.f32 %v4214, 0.01
        %v4221 = vsel %vm4215, %v4212, %v4218
        %v4222 = vsel %vm4216, %v4213, %v4219
        %v4223 = vsel %vm4217, %v4214, %v4220
        %4224 = vst [vmem:[#allocation2] sm:$0xff] %v4221
        %4225 = vst [vmem:[#allocation2 + $0x8] sm:$0xff] %v4222
        %4226 = vst [vmem:[#allocation2 + $0x10] sm:$0x7] %v4223
        %v4227 = vld [vmem:[#allocation2] sm:$0xf]
        %v4229 = vrot.slane %v4227, 7
        %v4231 = vsel %vm361, 0.0, %v4229
        %vm4232 = vcmask 1044480
        %v4233 = vsel %vm4232, %v4231, 0.0
        %4234 = vst [vmem:[#allocation4 + $0x6] sm:$0x3f] %v4233
        %v4235 = vld [vmem:[#allocation2 + $0x5] sm:$0xf]
        %v4237 = vrot.slane %v4235, 7
        %v4239 = vsel %vm361, 0.0, %v4237
        %v4240 = vsel %vm4232, %v4239, 0.0
        %4241 = vst [vmem:[#allocation4 + $0xc] sm:$0x3f] %v4240
        %v4242 = vld [vmem:[#allocation2 + $0xa] sm:$0xf]
        %v4244 = vrot.slane %v4242, 7
        %v4246 = vsel %vm361, 0.0, %v4244
        %v4247 = vsel %vm4232, %v4246, 0.0
        %4248 = vst [vmem:[#allocation4 + $0x12] sm:$0x3f] %v4247
        %v4249 = vld [vmem:[#allocation2 + $0xf] sm:$0xf]
        %v4251 = vrot.slane %v4249, 7
        %v4253 = vsel %vm361, 0.0, %v4251
        %v4254 = vsel %vm4232, %v4253, 0.0
        %4255 = vst [vmem:[#allocation4 + $0x18] sm:$0x3f] %v4254
        %v4256 = vld [vmem:[#allocation4] sm:$0xff]
        %v4257 = vld [vmem:[#allocation4 + $0x8] sm:$0xff]
        %v4258 = vld [vmem:[#allocation4 + $0x10] sm:$0x3f]
        %v4259 = vpack.c.bf16 %v4257, %v4256
        %v4260 = vpack.c.bf16 %v4258, %v4258
        %v4261 = vld [vmem:[%s4] sm:$0xf]
        %v4262 = vld [vmem:[%s4 + $0x4] sm:$0xf]
        %v4263 = vld [vmem:[%s4 + $0x8] sm:$0xf]
        %v4264 = vld [vmem:[%s4 + $0xc] sm:$0xf]
        %v4265 = vld [vmem:[%s4 + $0x10] sm:$0xf]
        %v4266 = vld [vmem:[%s4 + $0x14] sm:$0xf]
        %v4267 = vld [vmem:[%s4 + $0x18] sm:$0xf]
        %v4268 = vld [vmem:[%s4 + $0x1c] sm:$0xf]
        %v4269 = vld [vmem:[%s4 + $0x20] sm:$0xf]
        %v4270 = vld [vmem:[%s4 + $0x24] sm:$0xf]
        %v4271 = vld [vmem:[%s4 + $0x28] sm:$0xf]
        %v4272 = vld [vmem:[%s4 + $0x2c] sm:$0xf]
        %v4273 = vld [vmem:[%s4 + $0x30] sm:$0xf]
        %v4274 = vld [vmem:[%s4 + $0x34] sm:$0xf]
        %v4275 = vld [vmem:[%s4 + $0x38] sm:$0xf]
        %v4276 = vld [vmem:[%s4 + $0x3c] sm:$0xf]
        %v4277 = vld [vmem:[#allocation4 + $0x1] sm:$0xff]
        %v4278 = vld [vmem:[#allocation4 + $0x9] sm:$0xff]
        %v4279 = vld [vmem:[#allocation4 + $0x11] sm:$0x3f]
        %v4280 = vpack.c.bf16 %v4278, %v4277
        %v4281 = vpack.c.bf16 %v4279, %v4279
        %s4282 = scalar_lea.vmem %s4, 64
        %v4283 = vld [vmem:[%s4282] sm:$0xf]
        %v4284 = vld [vmem:[%s4282 + $0x4] sm:$0xf]
        %v4285 = vld [vmem:[%s4282 + $0x8] sm:$0xf]
        %v4286 = vld [vmem:[%s4282 + $0xc] sm:$0xf]
        %v4287 = vld [vmem:[%s4282 + $0x10] sm:$0xf]
        %v4288 = vld [vmem:[%s4282 + $0x14] sm:$0xf]
        %v4289 = vld [vmem:[%s4282 + $0x18] sm:$0xf]
        %v4290 = vld [vmem:[%s4282 + $0x1c] sm:$0xf]
        %v4291 = vld [vmem:[%s4282 + $0x20] sm:$0xf]
        %v4292 = vld [vmem:[%s4282 + $0x24] sm:$0xf]
        %v4293 = vld [vmem:[%s4282 + $0x28] sm:$0xf]
        %v4294 = vld [vmem:[%s4282 + $0x2c] sm:$0xf]
        %v4295 = vld [vmem:[%s4282 + $0x30] sm:$0xf]
        %v4296 = vld [vmem:[%s4282 + $0x34] sm:$0xf]
        %v4297 = vld [vmem:[%s4282 + $0x38] sm:$0xf]
        %v4298 = vld [vmem:[%s4282 + $0x3c] sm:$0xf]
        %v4315 = vunpack.c.l.b16 %v4283
        %v4316 = vunpack.c.l.b16 %v4284
        %v4317 = vunpack.c.l.b16 %v4285
        %v4318 = vunpack.c.l.b16 %v4286
        %v4319 = vunpack.c.l.b16 %v4287
        %v4320 = vunpack.c.l.b16 %v4288
        %v4321 = vunpack.c.l.b16 %v4289
        %v4322 = vunpack.c.l.b16 %v4290
        %v4323 = vunpack.c.l.b16 %v4291
        %v4324 = vunpack.c.l.b16 %v4292
        %v4325 = vunpack.c.l.b16 %v4293
        %v4326 = vunpack.c.l.b16 %v4294
        %v4327 = vunpack.c.l.b16 %v4295
        %v4328 = vunpack.c.l.b16 %v4296
        %v4329 = vunpack.c.l.b16 %v4297
        %v4330 = vunpack.c.l.b16 %v4298
        %v4331 = vpack.c.b16 %v4316, %v4315
        %v4332 = vpack.c.b16 %v4318, %v4317
        %v4333 = vpack.c.b16 %v4320, %v4319
        %v4334 = vpack.c.b16 %v4322, %v4321
        %v4335 = vpack.c.b16 %v4324, %v4323
        %v4336 = vpack.c.b16 %v4326, %v4325
        %v4337 = vpack.c.b16 %v4328, %v4327
        %v4338 = vpack.c.b16 %v4330, %v4329
        %4347 = vmatprep.subr.bf16.mxu0 0
        %4348 = vmatpush1.bf16.msra.mxu0 %v4338
        %4349 = vmatprep.subr.bf16.mxu0 0
        %4350 = vmatpush1.bf16.msra.mxu0 %v4337
        %4351 = vmatprep.subr.bf16.mxu0 0
        %4352 = vmatpush1.bf16.msra.mxu0 %v4336
        %4353 = vmatprep.subr.bf16.mxu0 0
        %4354 = vmatpush1.bf16.msra.mxu0 %v4335
        %4355 = vmatprep.subr.bf16.mxu0 0
        %4356 = vmatpush1.bf16.msra.mxu0 %v4334
        %4357 = vmatprep.subr.bf16.mxu0 0
        %4358 = vmatpush1.bf16.msra.mxu0 %v4333
        %4359 = vmatprep.subr.bf16.mxu0 0
        %4360 = vmatpush1.bf16.msra.mxu0 %v4332
        %4361 = vmatprep.subr.bf16.mxu0 0
        %4362 = vmatpush1.bf16.msra.mxu0 %v4331
        %4363 = vmatprep.subr.bf16.mxu0 0
        %4364 = vmatpush2.bf16.msra.mxu0 0
        %4365 = vmatprep.subr.bf16.mxu0 0
        %4366 = vmatpush2.bf16.msra.mxu0 0
        %4367 = vmatprep.subr.bf16.mxu0 0
        %4368 = vmatpush2.bf16.msra.mxu0 0
        %4369 = vmatprep.subr.bf16.mxu0 0
        %4370 = vmatpush2.bf16.msra.mxu0 0
        %4371 = vmatprep.subr.bf16.mxu0 0
        %4372 = vmatpush2.bf16.msra.mxu0 0
        %4373 = vmatprep.subr.bf16.mxu0 0
        %4374 = vmatpush2.bf16.msra.mxu0 0
        %4375 = vmatprep.subr.bf16.mxu0 0
        %4376 = vmatpush2.bf16.msra.mxu0 0
        %4377 = vmatprep.subr.bf16.mxu0 0
        %4378 = vmatpush2.bf16.msra.mxu0 0
        %4379 = vmatprep.mubr.bf16.mxu0 0
        %4380 = vmatmul.mubr.bf16.gmra.mxu0 %v4280
        %v4381 = vpop.f32.mrf.mxu0
        %v4382 = vadd.f32 0.0, %v4381
        %v4383 = vpop.f32.mrf.mxu0
        %v4384 = vpop.f32.mrf.mxu0
        %v4385 = vadd.f32 0.0, %v4384
        %v4386 = vpop.f32.mrf.mxu0
        %4387 = vmatprep.mubr.bf16.mxu0 0
        %4388 = vmatmul.mubr.bf16.gmra.mxu0 %v4281
        %v4389 = vpop.f32.mrf.mxu0
        %v4390 = vadd.f32 0.0, %v4389
        %v4391 = vpop.f32.mrf.mxu0
        %v4392 = vpop.f32.mrf.mxu0
        %v4393 = vpop.f32.mrf.mxu0
        %4394 = vdwg.mxu0
        %v4411 = vunpack.c.l.b16 %v4261
        %v4412 = vunpack.c.l.b16 %v4262
        %v4413 = vunpack.c.l.b16 %v4263
        %v4414 = vunpack.c.l.b16 %v4264
        %v4415 = vunpack.c.l.b16 %v4265
        %v4416 = vunpack.c.l.b16 %v4266
        %v4417 = vunpack.c.l.b16 %v4267
        %v4418 = vunpack.c.l.b16 %v4268
        %v4419 = vunpack.c.l.b16 %v4269
        %v4420 = vunpack.c.l.b16 %v4270
        %v4421 = vunpack.c.l.b16 %v4271
        %v4422 = vunpack.c.l.b16 %v4272
        %v4423 = vunpack.c.l.b16 %v4273
        %v4424 = vunpack.c.l.b16 %v4274
        %v4425 = vunpack.c.l.b16 %v4275
        %v4426 = vunpack.c.l.b16 %v4276
        %v4427 = vpack.c.b16 %v4412, %v4411
        %v4428 = vpack.c.b16 %v4414, %v4413
        %v4429 = vpack.c.b16 %v4416, %v4415
        %v4430 = vpack.c.b16 %v4418, %v4417
        %v4431 = vpack.c.b16 %v4420, %v4419
        %v4432 = vpack.c.b16 %v4422, %v4421
        %v4433 = vpack.c.b16 %v4424, %v4423
        %v4434 = vpack.c.b16 %v4426, %v4425
        %4443 = vmatprep.subr.bf16.mxu0 0
        %4444 = vmatpush1.bf16.msra.mxu0 %v4434
        %4445 = vmatprep.subr.bf16.mxu0 0
        %4446 = vmatpush1.bf16.msra.mxu0 %v4433
        %4447 = vmatprep.subr.bf16.mxu0 0
        %4448 = vmatpush1.bf16.msra.mxu0 %v4432
        %4449 = vmatprep.subr.bf16.mxu0 0
        %4450 = vmatpush1.bf16.msra.mxu0 %v4431
        %4451 = vmatprep.subr.bf16.mxu0 0
        %4452 = vmatpush1.bf16.msra.mxu0 %v4430
        %4453 = vmatprep.subr.bf16.mxu0 0
        %4454 = vmatpush1.bf16.msra.mxu0 %v4429
        %4455 = vmatprep.subr.bf16.mxu0 0
        %4456 = vmatpush1.bf16.msra.mxu0 %v4428
        %4457 = vmatprep.subr.bf16.mxu0 0
        %4458 = vmatpush1.bf16.msra.mxu0 %v4427
        %4459 = vmatprep.subr.bf16.mxu0 0
        %4460 = vmatpush2.bf16.msra.mxu0 0
        %4461 = vmatprep.subr.bf16.mxu0 0
        %4462 = vmatpush2.bf16.msra.mxu0 0
        %4463 = vmatprep.subr.bf16.mxu0 0
        %4464 = vmatpush2.bf16.msra.mxu0 0
        %4465 = vmatprep.subr.bf16.mxu0 0
        %4466 = vmatpush2.bf16.msra.mxu0 0
        %4467 = vmatprep.subr.bf16.mxu0 0
        %4468 = vmatpush2.bf16.msra.mxu0 0
        %4469 = vmatprep.subr.bf16.mxu0 0
        %4470 = vmatpush2.bf16.msra.mxu0 0
        %4471 = vmatprep.subr.bf16.mxu0 0
        %4472 = vmatpush2.bf16.msra.mxu0 0
        %4473 = vmatprep.subr.bf16.mxu0 0
        %4474 = vmatpush2.bf16.msra.mxu0 0
        %4475 = vmatprep.mubr.bf16.mxu0 0
        %4476 = vmatmul.mubr.bf16.gmra.mxu0 %v4259
        %v4477 = vpop.f32.mrf.mxu0
        %v4478 = vadd.f32 %v4382, %v4477
        %v4479 = vpop.f32.mrf.mxu0
        %v4480 = vpop.f32.mrf.mxu0
        %v4481 = vadd.f32 %v4385, %v4480
        %v4482 = vpop.f32.mrf.mxu0
        %4483 = vmatprep.mubr.bf16.mxu0 0
        %4484 = vmatmul.mubr.bf16.gmra.mxu0 %v4260
        %v4485 = vpop.f32.mrf.mxu0
        %v4486 = vadd.f32 %v4390, %v4485
        %v4487 = vpop.f32.mrf.mxu0
        %v4488 = vpop.f32.mrf.mxu0
        %v4489 = vpop.f32.mrf.mxu0
        %4490 = vdwg.mxu0
        %v4491 = vld [vmem:[#allocation4 + $0x2] sm:$0xff]
        %v4492 = vld [vmem:[#allocation4 + $0xa] sm:$0xff]
        %v4493 = vld [vmem:[#allocation4 + $0x12] sm:$0x3f]
        %v4494 = vpack.c.bf16 %v4492, %v4491
        %v4495 = vpack.c.bf16 %v4493, %v4493
        %s4496 = scalar_lea.vmem %s4, 128
        %v4497 = vld [vmem:[%s4496] sm:$0xf]
        %v4498 = vld [vmem:[%s4496 + $0x4] sm:$0xf]
        %v4499 = vld [vmem:[%s4496 + $0x8] sm:$0xf]
        %v4500 = vld [vmem:[%s4496 + $0xc] sm:$0xf]
        %v4501 = vld [vmem:[%s4496 + $0x10] sm:$0xf]
        %v4502 = vld [vmem:[%s4496 + $0x14] sm:$0xf]
        %v4503 = vld [vmem:[%s4496 + $0x18] sm:$0xf]
        %v4504 = vld [vmem:[%s4496 + $0x1c] sm:$0xf]
        %v4505 = vld [vmem:[%s4496 + $0x20] sm:$0xf]
        %v4506 = vld [vmem:[%s4496 + $0x24] sm:$0xf]
        %v4507 = vld [vmem:[%s4496 + $0x28] sm:$0xf]
        %v4508 = vld [vmem:[%s4496 + $0x2c] sm:$0xf]
        %v4509 = vld [vmem:[%s4496 + $0x30] sm:$0xf]
        %v4510 = vld [vmem:[%s4496 + $0x34] sm:$0xf]
        %v4511 = vld [vmem:[%s4496 + $0x38] sm:$0xf]
        %v4512 = vld [vmem:[%s4496 + $0x3c] sm:$0xf]
        %v4529 = vunpack.c.l.b16 %v4497
        %v4530 = vunpack.c.l.b16 %v4498
        %v4531 = vunpack.c.l.b16 %v4499
        %v4532 = vunpack.c.l.b16 %v4500
        %v4533 = vunpack.c.l.b16 %v4501
        %v4534 = vunpack.c.l.b16 %v4502
        %v4535 = vunpack.c.l.b16 %v4503
        %v4536 = vunpack.c.l.b16 %v4504
        %v4537 = vunpack.c.l.b16 %v4505
        %v4538 = vunpack.c.l.b16 %v4506
        %v4539 = vunpack.c.l.b16 %v4507
        %v4540 = vunpack.c.l.b16 %v4508
        %v4541 = vunpack.c.l.b16 %v4509
        %v4542 = vunpack.c.l.b16 %v4510
        %v4543 = vunpack.c.l.b16 %v4511
        %v4544 = vunpack.c.l.b16 %v4512
        %v4545 = vpack.c.b16 %v4530, %v4529
        %v4546 = vpack.c.b16 %v4532, %v4531
        %v4547 = vpack.c.b16 %v4534, %v4533
        %v4548 = vpack.c.b16 %v4536, %v4535
        %v4549 = vpack.c.b16 %v4538, %v4537
        %v4550 = vpack.c.b16 %v4540, %v4539
        %v4551 = vpack.c.b16 %v4542, %v4541
        %v4552 = vpack.c.b16 %v4544, %v4543
        %4561 = vmatprep.subr.bf16.mxu0 0
        %4562 = vmatpush1.bf16.msra.mxu0 %v4552
        %4563 = vmatprep.subr.bf16.mxu0 0
        %4564 = vmatpush1.bf16.msra.mxu0 %v4551
        %4565 = vmatprep.subr.bf16.mxu0 0
        %4566 = vmatpush1.bf16.msra.mxu0 %v4550
        %4567 = vmatprep.subr.bf16.mxu0 0
        %4568 = vmatpush1.bf16.msra.mxu0 %v4549
        %4569 = vmatprep.subr.bf16.mxu0 0
        %4570 = vmatpush1.bf16.msra.mxu0 %v4548
        %4571 = vmatprep.subr.bf16.mxu0 0
        %4572 = vmatpush1.bf16.msra.mxu0 %v4547
        %4573 = vmatprep.subr.bf16.mxu0 0
        %4574 = vmatpush1.bf16.msra.mxu0 %v4546
        %4575 = vmatprep.subr.bf16.mxu0 0
        %4576 = vmatpush1.bf16.msra.mxu0 %v4545
        %4577 = vmatprep.subr.bf16.mxu0 0
        %4578 = vmatpush2.bf16.msra.mxu0 0
        %4579 = vmatprep.subr.bf16.mxu0 0
        %4580 = vmatpush2.bf16.msra.mxu0 0
        %4581 = vmatprep.subr.bf16.mxu0 0
        %4582 = vmatpush2.bf16.msra.mxu0 0
        %4583 = vmatprep.subr.bf16.mxu0 0
        %4584 = vmatpush2.bf16.msra.mxu0 0
        %4585 = vmatprep.subr.bf16.mxu0 0
        %4586 = vmatpush2.bf16.msra.mxu0 0
        %4587 = vmatprep.subr.bf16.mxu0 0
        %4588 = vmatpush2.bf16.msra.mxu0 0
        %4589 = vmatprep.subr.bf16.mxu0 0
        %4590 = vmatpush2.bf16.msra.mxu0 0
        %4591 = vmatprep.subr.bf16.mxu0 0
        %4592 = vmatpush2.bf16.msra.mxu0 0
        %4593 = vmatprep.mubr.bf16.mxu0 0
        %4594 = vmatmul.mubr.bf16.gmra.mxu0 %v4494
        %v4595 = vpop.f32.mrf.mxu0
        %v4596 = vadd.f32 0.0, %v4595
        %v4597 = vpop.f32.mrf.mxu0
        %v4598 = vpop.f32.mrf.mxu0
        %v4599 = vadd.f32 0.0, %v4598
        %v4600 = vpop.f32.mrf.mxu0
        %4601 = vmatprep.mubr.bf16.mxu0 0
        %4602 = vmatmul.mubr.bf16.gmra.mxu0 %v4495
        %v4603 = vpop.f32.mrf.mxu0
        %v4604 = vadd.f32 0.0, %v4603
        %v4605 = vpop.f32.mrf.mxu0
        %v4606 = vpop.f32.mrf.mxu0
        %v4607 = vpop.f32.mrf.mxu0
        %4608 = vdwg.mxu0
        %v4609 = vadd.f32 %v4478, %v4596
        %v4610 = vadd.f32 %v4481, %v4599
        %v4611 = vadd.f32 %v4486, %v4604
        %v4612 = vld [vmem:[#allocation4 + $0x6] sm:$0xff]
        %v4613 = vld [vmem:[#allocation4 + $0xe] sm:$0xff]
        %v4614 = vld [vmem:[#allocation4 + $0x16] sm:$0x3f]
        %v4615 = vpack.c.bf16 %v4613, %v4612
        %v4616 = vpack.c.bf16 %v4614, %v4614
        %s4617 = scalar_lea.vmem %s4, 192
        %v4618 = vld [vmem:[%s4617] sm:$0xf]
        %v4619 = vld [vmem:[%s4617 + $0x4] sm:$0xf]
        %v4620 = vld [vmem:[%s4617 + $0x8] sm:$0xf]
        %v4621 = vld [vmem:[%s4617 + $0xc] sm:$0xf]
        %v4622 = vld [vmem:[%s4617 + $0x10] sm:$0xf]
        %v4623 = vld [vmem:[%s4617 + $0x14] sm:$0xf]
        %v4624 = vld [vmem:[%s4617 + $0x18] sm:$0xf]
        %v4625 = vld [vmem:[%s4617 + $0x1c] sm:$0xf]
        %v4626 = vld [vmem:[%s4617 + $0x20] sm:$0xf]
        %v4627 = vld [vmem:[%s4617 + $0x24] sm:$0xf]
        %v4628 = vld [vmem:[%s4617 + $0x28] sm:$0xf]
        %v4629 = vld [vmem:[%s4617 + $0x2c] sm:$0xf]
        %v4630 = vld [vmem:[%s4617 + $0x30] sm:$0xf]
        %v4631 = vld [vmem:[%s4617 + $0x34] sm:$0xf]
        %v4632 = vld [vmem:[%s4617 + $0x38] sm:$0xf]
        %v4633 = vld [vmem:[%s4617 + $0x3c] sm:$0xf]
        %v4650 = vunpack.c.l.b16 %v4618
        %v4651 = vunpack.c.l.b16 %v4619
        %v4652 = vunpack.c.l.b16 %v4620
        %v4653 = vunpack.c.l.b16 %v4621
        %v4654 = vunpack.c.l.b16 %v4622
        %v4655 = vunpack.c.l.b16 %v4623
        %v4656 = vunpack.c.l.b16 %v4624
        %v4657 = vunpack.c.l.b16 %v4625
        %v4658 = vunpack.c.l.b16 %v4626
        %v4659 = vunpack.c.l.b16 %v4627
        %v4660 = vunpack.c.l.b16 %v4628
        %v4661 = vunpack.c.l.b16 %v4629
        %v4662 = vunpack.c.l.b16 %v4630
        %v4663 = vunpack.c.l.b16 %v4631
        %v4664 = vunpack.c.l.b16 %v4632
        %v4665 = vunpack.c.l.b16 %v4633
        %v4666 = vpack.c.b16 %v4651, %v4650
        %v4667 = vpack.c.b16 %v4653, %v4652
        %v4668 = vpack.c.b16 %v4655, %v4654
        %v4669 = vpack.c.b16 %v4657, %v4656
        %v4670 = vpack.c.b16 %v4659, %v4658
        %v4671 = vpack.c.b16 %v4661, %v4660
        %v4672 = vpack.c.b16 %v4663, %v4662
        %v4673 = vpack.c.b16 %v4665, %v4664
        %4682 = vmatprep.subr.bf16.mxu0 0
        %4683 = vmatpush1.bf16.msra.mxu0 %v4673
        %4684 = vmatprep.subr.bf16.mxu0 0
        %4685 = vmatpush1.bf16.msra.mxu0 %v4672
        %4686 = vmatprep.subr.bf16.mxu0 0
        %4687 = vmatpush1.bf16.msra.mxu0 %v4671
        %4688 = vmatprep.subr.bf16.mxu0 0
        %4689 = vmatpush1.bf16.msra.mxu0 %v4670
        %4690 = vmatprep.subr.bf16.mxu0 0
        %4691 = vmatpush1.bf16.msra.mxu0 %v4669
        %4692 = vmatprep.subr.bf16.mxu0 0
        %4693 = vmatpush1.bf16.msra.mxu0 %v4668
        %4694 = vmatprep.subr.bf16.mxu0 0
        %4695 = vmatpush1.bf16.msra.mxu0 %v4667
        %4696 = vmatprep.subr.bf16.mxu0 0
        %4697 = vmatpush1.bf16.msra.mxu0 %v4666
        %4698 = vmatprep.subr.bf16.mxu0 0
        %4699 = vmatpush2.bf16.msra.mxu0 0
        %4700 = vmatprep.subr.bf16.mxu0 0
        %4701 = vmatpush2.bf16.msra.mxu0 0
        %4702 = vmatprep.subr.bf16.mxu0 0
        %4703 = vmatpush2.bf16.msra.mxu0 0
        %4704 = vmatprep.subr.bf16.mxu0 0
        %4705 = vmatpush2.bf16.msra.mxu0 0
        %4706 = vmatprep.subr.bf16.mxu0 0
        %4707 = vmatpush2.bf16.msra.mxu0 0
        %4708 = vmatprep.subr.bf16.mxu0 0
        %4709 = vmatpush2.bf16.msra.mxu0 0
        %4710 = vmatprep.subr.bf16.mxu0 0
        %4711 = vmatpush2.bf16.msra.mxu0 0
        %4712 = vmatprep.subr.bf16.mxu0 0
        %4713 = vmatpush2.bf16.msra.mxu0 0
        %4714 = vmatprep.mubr.bf16.mxu0 0
        %4715 = vmatmul.mubr.bf16.gmra.mxu0 %v4615
        %v4716 = vpop.f32.mrf.mxu0
        %v4717 = vadd.f32 0.0, %v4716
        %v4718 = vpop.f32.mrf.mxu0
        %v4719 = vpop.f32.mrf.mxu0
        %v4720 = vadd.f32 0.0, %v4719
        %v4721 = vpop.f32.mrf.mxu0
        %4722 = vmatprep.mubr.bf16.mxu0 0
        %4723 = vmatmul.mubr.bf16.gmra.mxu0 %v4616
        %v4724 = vpop.f32.mrf.mxu0
        %v4725 = vadd.f32 0.0, %v4724
        %v4726 = vpop.f32.mrf.mxu0
        %v4727 = vpop.f32.mrf.mxu0
        %v4728 = vpop.f32.mrf.mxu0
        %4729 = vdwg.mxu0
        %v4730 = vadd.f32 %v4609, %v4717
        %v4731 = vadd.f32 %v4610, %v4720
        %v4732 = vadd.f32 %v4611, %v4725
        %v4733 = vld [vmem:[#allocation4 + $0x7] sm:$0xff]
        %v4734 = vld [vmem:[#allocation4 + $0xf] sm:$0xff]
        %v4735 = vld [vmem:[#allocation4 + $0x17] sm:$0x3f]
        %v4736 = vpack.c.bf16 %v4734, %v4733
        %v4737 = vpack.c.bf16 %v4735, %v4735
        %s4738 = scalar_lea.vmem %s4, 256
        %v4739 = vld [vmem:[%s4738] sm:$0xf]
        %v4740 = vld [vmem:[%s4738 + $0x4] sm:$0xf]
        %v4741 = vld [vmem:[%s4738 + $0x8] sm:$0xf]
        %v4742 = vld [vmem:[%s4738 + $0xc] sm:$0xf]
        %v4743 = vld [vmem:[%s4738 + $0x10] sm:$0xf]
        %v4744 = vld [vmem:[%s4738 + $0x14] sm:$0xf]
        %v4745 = vld [vmem:[%s4738 + $0x18] sm:$0xf]
        %v4746 = vld [vmem:[%s4738 + $0x1c] sm:$0xf]
        %v4747 = vld [vmem:[%s4738 + $0x20] sm:$0xf]
        %v4748 = vld [vmem:[%s4738 + $0x24] sm:$0xf]
        %v4749 = vld [vmem:[%s4738 + $0x28] sm:$0xf]
        %v4750 = vld [vmem:[%s4738 + $0x2c] sm:$0xf]
        %v4751 = vld [vmem:[%s4738 + $0x30] sm:$0xf]
        %v4752 = vld [vmem:[%s4738 + $0x34] sm:$0xf]
        %v4753 = vld [vmem:[%s4738 + $0x38] sm:$0xf]
        %v4754 = vld [vmem:[%s4738 + $0x3c] sm:$0xf]
        %v4771 = vunpack.c.l.b16 %v4739
        %v4772 = vunpack.c.l.b16 %v4740
        %v4773 = vunpack.c.l.b16 %v4741
        %v4774 = vunpack.c.l.b16 %v4742
        %v4775 = vunpack.c.l.b16 %v4743
        %v4776 = vunpack.c.l.b16 %v4744
        %v4777 = vunpack.c.l.b16 %v4745
        %v4778 = vunpack.c.l.b16 %v4746
        %v4779 = vunpack.c.l.b16 %v4747
        %v4780 = vunpack.c.l.b16 %v4748
        %v4781 = vunpack.c.l.b16 %v4749
        %v4782 = vunpack.c.l.b16 %v4750
        %v4783 = vunpack.c.l.b16 %v4751
        %v4784 = vunpack.c.l.b16 %v4752
        %v4785 = vunpack.c.l.b16 %v4753
        %v4786 = vunpack.c.l.b16 %v4754
        %v4787 = vpack.c.b16 %v4772, %v4771
        %v4788 = vpack.c.b16 %v4774, %v4773
        %v4789 = vpack.c.b16 %v4776, %v4775
        %v4790 = vpack.c.b16 %v4778, %v4777
        %v4791 = vpack.c.b16 %v4780, %v4779
        %v4792 = vpack.c.b16 %v4782, %v4781
        %v4793 = vpack.c.b16 %v4784, %v4783
        %v4794 = vpack.c.b16 %v4786, %v4785
        %4803 = vmatprep.subr.bf16.mxu0 0
        %4804 = vmatpush1.bf16.msra.mxu0 %v4794
        %4805 = vmatprep.subr.bf16.mxu0 0
        %4806 = vmatpush1.bf16.msra.mxu0 %v4793
        %4807 = vmatprep.subr.bf16.mxu0 0
        %4808 = vmatpush1.bf16.msra.mxu0 %v4792
        %4809 = vmatprep.subr.bf16.mxu0 0
        %4810 = vmatpush1.bf16.msra.mxu0 %v4791
        %4811 = vmatprep.subr.bf16.mxu0 0
        %4812 = vmatpush1.bf16.msra.mxu0 %v4790
        %4813 = vmatprep.subr.bf16.mxu0 0
        %4814 = vmatpush1.bf16.msra.mxu0 %v4789
        %4815 = vmatprep.subr.bf16.mxu0 0
        %4816 = vmatpush1.bf16.msra.mxu0 %v4788
        %4817 = vmatprep.subr.bf16.mxu0 0
        %4818 = vmatpush1.bf16.msra.mxu0 %v4787
        %4819 = vmatprep.subr.bf16.mxu0 0
        %4820 = vmatpush2.bf16.msra.mxu0 0
        %4821 = vmatprep.subr.bf16.mxu0 0
        %4822 = vmatpush2.bf16.msra.mxu0 0
        %4823 = vmatprep.subr.bf16.mxu0 0
        %4824 = vmatpush2.bf16.msra.mxu0 0
        %4825 = vmatprep.subr.bf16.mxu0 0
        %4826 = vmatpush2.bf16.msra.mxu0 0
        %4827 = vmatprep.subr.bf16.mxu0 0
        %4828 = vmatpush2.bf16.msra.mxu0 0
        %4829 = vmatprep.subr.bf16.mxu0 0
        %4830 = vmatpush2.bf16.msra.mxu0 0
        %4831 = vmatprep.subr.bf16.mxu0 0
        %4832 = vmatpush2.bf16.msra.mxu0 0
        %4833 = vmatprep.subr.bf16.mxu0 0
        %4834 = vmatpush2.bf16.msra.mxu0 0
        %4835 = vmatprep.mubr.bf16.mxu0 0
        %4836 = vmatmul.mubr.bf16.gmra.mxu0 %v4736
        %v4837 = vpop.f32.mrf.mxu0
        %v4838 = vadd.f32 0.0, %v4837
        %v4839 = vpop.f32.mrf.mxu0
        %v4840 = vpop.f32.mrf.mxu0
        %v4841 = vadd.f32 0.0, %v4840
        %v4842 = vpop.f32.mrf.mxu0
        %4843 = vmatprep.mubr.bf16.mxu0 0
        %4844 = vmatmul.mubr.bf16.gmra.mxu0 %v4737
        %v4845 = vpop.f32.mrf.mxu0
        %v4846 = vadd.f32 0.0, %v4845
        %v4847 = vpop.f32.mrf.mxu0
        %v4848 = vpop.f32.mrf.mxu0
        %v4849 = vpop.f32.mrf.mxu0
        %4850 = vdwg.mxu0
        %v4851 = vadd.f32 %v4730, %v4838
        %v4852 = vadd.f32 %v4731, %v4841
        %v4853 = vadd.f32 %v4732, %v4846
        %v4854 = vld [vmem:[#allocation4 + $0x8] sm:$0xff]
        %v4855 = vld [vmem:[#allocation4 + $0x10] sm:$0xff]
        %v4856 = vld [vmem:[#allocation4 + $0x18] sm:$0x3f]
        %v4857 = vpack.c.bf16 %v4855, %v4854
        %v4858 = vpack.c.bf16 %v4856, %v4856
        %s4859 = scalar_lea.vmem %s4, 320
        %v4860 = vld [vmem:[%s4859] sm:$0xf]
        %v4861 = vld [vmem:[%s4859 + $0x4] sm:$0xf]
        %v4862 = vld [vmem:[%s4859 + $0x8] sm:$0xf]
        %v4863 = vld [vmem:[%s4859 + $0xc] sm:$0xf]
        %v4864 = vld [vmem:[%s4859 + $0x10] sm:$0xf]
        %v4865 = vld [vmem:[%s4859 + $0x14] sm:$0xf]
        %v4866 = vld [vmem:[%s4859 + $0x18] sm:$0xf]
        %v4867 = vld [vmem:[%s4859 + $0x1c] sm:$0xf]
        %v4868 = vld [vmem:[%s4859 + $0x20] sm:$0xf]
        %v4869 = vld [vmem:[%s4859 + $0x24] sm:$0xf]
        %v4870 = vld [vmem:[%s4859 + $0x28] sm:$0xf]
        %v4871 = vld [vmem:[%s4859 + $0x2c] sm:$0xf]
        %v4872 = vld [vmem:[%s4859 + $0x30] sm:$0xf]
        %v4873 = vld [vmem:[%s4859 + $0x34] sm:$0xf]
        %v4874 = vld [vmem:[%s4859 + $0x38] sm:$0xf]
        %v4875 = vld [vmem:[%s4859 + $0x3c] sm:$0xf]
        %v4892 = vunpack.c.l.b16 %v4860
        %v4893 = vunpack.c.l.b16 %v4861
        %v4894 = vunpack.c.l.b16 %v4862
        %v4895 = vunpack.c.l.b16 %v4863
        %v4896 = vunpack.c.l.b16 %v4864
        %v4897 = vunpack.c.l.b16 %v4865
        %v4898 = vunpack.c.l.b16 %v4866
        %v4899 = vunpack.c.l.b16 %v4867
        %v4900 = vunpack.c.l.b16 %v4868
        %v4901 = vunpack.c.l.b16 %v4869
        %v4902 = vunpack.c.l.b16 %v4870
        %v4903 = vunpack.c.l.b16 %v4871
        %v4904 = vunpack.c.l.b16 %v4872
        %v4905 = vunpack.c.l.b16 %v4873
        %v4906 = vunpack.c.l.b16 %v4874
        %v4907 = vunpack.c.l.b16 %v4875
        %v4908 = vpack.c.b16 %v4893, %v4892
        %v4909 = vpack.c.b16 %v4895, %v4894
        %v4910 = vpack.c.b16 %v4897, %v4896
        %v4911 = vpack.c.b16 %v4899, %v4898
        %v4912 = vpack.c.b16 %v4901, %v4900
        %v4913 = vpack.c.b16 %v4903, %v4902
        %v4914 = vpack.c.b16 %v4905, %v4904
        %v4915 = vpack.c.b16 %v4907, %v4906
        %4924 = vmatprep.subr.bf16.mxu0 0
        %4925 = vmatpush1.bf16.msra.mxu0 %v4915
        %4926 = vmatprep.subr.bf16.mxu0 0
        %4927 = vmatpush1.bf16.msra.mxu0 %v4914
        %4928 = vmatprep.subr.bf16.mxu0 0
        %4929 = vmatpush1.bf16.msra.mxu0 %v4913
        %4930 = vmatprep.subr.bf16.mxu0 0
        %4931 = vmatpush1.bf16.msra.mxu0 %v4912
        %4932 = vmatprep.subr.bf16.mxu0 0
        %4933 = vmatpush1.bf16.msra.mxu0 %v4911
        %4934 = vmatprep.subr.bf16.mxu0 0
        %4935 = vmatpush1.bf16.msra.mxu0 %v4910
        %4936 = vmatprep.subr.bf16.mxu0 0
        %4937 = vmatpush1.bf16.msra.mxu0 %v4909
        %4938 = vmatprep.subr.bf16.mxu0 0
        %4939 = vmatpush1.bf16.msra.mxu0 %v4908
        %4940 = vmatprep.subr.bf16.mxu0 0
        %4941 = vmatpush2.bf16.msra.mxu0 0
        %4942 = vmatprep.subr.bf16.mxu0 0
        %4943 = vmatpush2.bf16.msra.mxu0 0
        %4944 = vmatprep.subr.bf16.mxu0 0
        %4945 = vmatpush2.bf16.msra.mxu0 0
        %4946 = vmatprep.subr.bf16.mxu0 0
        %4947 = vmatpush2.bf16.msra.mxu0 0
        %4948 = vmatprep.subr.bf16.mxu0 0
        %4949 = vmatpush2.bf16.msra.mxu0 0
        %4950 = vmatprep.subr.bf16.mxu0 0
        %4951 = vmatpush2.bf16.msra.mxu0 0
        %4952 = vmatprep.subr.bf16.mxu0 0
        %4953 = vmatpush2.bf16.msra.mxu0 0
        %4954 = vmatprep.subr.bf16.mxu0 0
        %4955 = vmatpush2.bf16.msra.mxu0 0
        %4956 = vmatprep.mubr.bf16.mxu0 0
        %4957 = vmatmul.mubr.bf16.gmra.mxu0 %v4857
        %v4958 = vpop.f32.mrf.mxu0
        %v4959 = vadd.f32 0.0, %v4958
        %v4960 = vpop.f32.mrf.mxu0
        %v4961 = vpop.f32.mrf.mxu0
        %v4962 = vadd.f32 0.0, %v4961
        %v4963 = vpop.f32.mrf.mxu0
        %4964 = vmatprep.mubr.bf16.mxu0 0
        %4965 = vmatmul.mubr.bf16.gmra.mxu0 %v4858
        %v4966 = vpop.f32.mrf.mxu0
        %v4967 = vadd.f32 0.0, %v4966
        %v4968 = vpop.f32.mrf.mxu0
        %v4969 = vpop.f32.mrf.mxu0
        %v4970 = vpop.f32.mrf.mxu0
        %4971 = vdwg.mxu0
        %v4972 = vadd.f32 %v4851, %v4959
        %v4973 = vadd.f32 %v4852, %v4962
        %v4974 = vadd.f32 %v4853, %v4967
        %v4975 = vld [vmem:[#allocation4 + $0xc] sm:$0xff]
        %v4976 = vld [vmem:[#allocation4 + $0x14] sm:$0xff]
        %v4977 = vld [vmem:[#allocation4 + $0x1c] sm:$0x3f]
        %v4978 = vpack.c.bf16 %v4976, %v4975
        %v4979 = vpack.c.bf16 %v4977, %v4977
        %s4980 = scalar_lea.vmem %s4, 384
        %v4981 = vld [vmem:[%s4980] sm:$0xf]
        %v4982 = vld [vmem:[%s4980 + $0x4] sm:$0xf]
        %v4983 = vld [vmem:[%s4980 + $0x8] sm:$0xf]
        %v4984 = vld [vmem:[%s4980 + $0xc] sm:$0xf]
        %v4985 = vld [vmem:[%s4980 + $0x10] sm:$0xf]
        %v4986 = vld [vmem:[%s4980 + $0x14] sm:$0xf]
        %v4987 = vld [vmem:[%s4980 + $0x18] sm:$0xf]
        %v4988 = vld [vmem:[%s4980 + $0x1c] sm:$0xf]
        %v4989 = vld [vmem:[%s4980 + $0x20] sm:$0xf]
        %v4990 = vld [vmem:[%s4980 + $0x24] sm:$0xf]
        %v4991 = vld [vmem:[%s4980 + $0x28] sm:$0xf]
        %v4992 = vld [vmem:[%s4980 + $0x2c] sm:$0xf]
        %v4993 = vld [vmem:[%s4980 + $0x30] sm:$0xf]
        %v4994 = vld [vmem:[%s4980 + $0x34] sm:$0xf]
        %v4995 = vld [vmem:[%s4980 + $0x38] sm:$0xf]
        %v4996 = vld [vmem:[%s4980 + $0x3c] sm:$0xf]
        %v5013 = vunpack.c.l.b16 %v4981
        %v5014 = vunpack.c.l.b16 %v4982
        %v5015 = vunpack.c.l.b16 %v4983
        %v5016 = vunpack.c.l.b16 %v4984
        %v5017 = vunpack.c.l.b16 %v4985
        %v5018 = vunpack.c.l.b16 %v4986
        %v5019 = vunpack.c.l.b16 %v4987
        %v5020 = vunpack.c.l.b16 %v4988
        %v5021 = vunpack.c.l.b16 %v4989
        %v5022 = vunpack.c.l.b16 %v4990
        %v5023 = vunpack.c.l.b16 %v4991
        %v5024 = vunpack.c.l.b16 %v4992
        %v5025 = vunpack.c.l.b16 %v4993
        %v5026 = vunpack.c.l.b16 %v4994
        %v5027 = vunpack.c.l.b16 %v4995
        %v5028 = vunpack.c.l.b16 %v4996
        %v5029 = vpack.c.b16 %v5014, %v5013
        %v5030 = vpack.c.b16 %v5016, %v5015
        %v5031 = vpack.c.b16 %v5018, %v5017
        %v5032 = vpack.c.b16 %v5020, %v5019
        %v5033 = vpack.c.b16 %v5022, %v5021
        %v5034 = vpack.c.b16 %v5024, %v5023
        %v5035 = vpack.c.b16 %v5026, %v5025
        %v5036 = vpack.c.b16 %v5028, %v5027
        %5045 = vmatprep.subr.bf16.mxu0 0
        %5046 = vmatpush1.bf16.msra.mxu0 %v5036
        %5047 = vmatprep.subr.bf16.mxu0 0
        %5048 = vmatpush1.bf16.msra.mxu0 %v5035
        %5049 = vmatprep.subr.bf16.mxu0 0
        %5050 = vmatpush1.bf16.msra.mxu0 %v5034
        %5051 = vmatprep.subr.bf16.mxu0 0
        %5052 = vmatpush1.bf16.msra.mxu0 %v5033
        %5053 = vmatprep.subr.bf16.mxu0 0
        %5054 = vmatpush1.bf16.msra.mxu0 %v5032
        %5055 = vmatprep.subr.bf16.mxu0 0
        %5056 = vmatpush1.bf16.msra.mxu0 %v5031
        %5057 = vmatprep.subr.bf16.mxu0 0
        %5058 = vmatpush1.bf16.msra.mxu0 %v5030
        %5059 = vmatprep.subr.bf16.mxu0 0
        %5060 = vmatpush1.bf16.msra.mxu0 %v5029
        %5061 = vmatprep.subr.bf16.mxu0 0
        %5062 = vmatpush2.bf16.msra.mxu0 0
        %5063 = vmatprep.subr.bf16.mxu0 0
        %5064 = vmatpush2.bf16.msra.mxu0 0
        %5065 = vmatprep.subr.bf16.mxu0 0
        %5066 = vmatpush2.bf16.msra.mxu0 0
        %5067 = vmatprep.subr.bf16.mxu0 0
        %5068 = vmatpush2.bf16.msra.mxu0 0
        %5069 = vmatprep.subr.bf16.mxu0 0
        %5070 = vmatpush2.bf16.msra.mxu0 0
        %5071 = vmatprep.subr.bf16.mxu0 0
        %5072 = vmatpush2.bf16.msra.mxu0 0
        %5073 = vmatprep.subr.bf16.mxu0 0
        %5074 = vmatpush2.bf16.msra.mxu0 0
        %5075 = vmatprep.subr.bf16.mxu0 0
        %5076 = vmatpush2.bf16.msra.mxu0 0
        %5077 = vmatprep.mubr.bf16.mxu0 0
        %5078 = vmatmul.mubr.bf16.gmra.mxu0 %v4978
        %v5079 = vpop.f32.mrf.mxu0
        %v5080 = vadd.f32 0.0, %v5079
        %v5081 = vpop.f32.mrf.mxu0
        %v5082 = vpop.f32.mrf.mxu0
        %v5083 = vadd.f32 0.0, %v5082
        %v5084 = vpop.f32.mrf.mxu0
        %5085 = vmatprep.mubr.bf16.mxu0 0
        %5086 = vmatmul.mubr.bf16.gmra.mxu0 %v4979
        %v5087 = vpop.f32.mrf.mxu0
        %v5088 = vadd.f32 0.0, %v5087
        %v5089 = vpop.f32.mrf.mxu0
        %v5090 = vpop.f32.mrf.mxu0
        %v5091 = vpop.f32.mrf.mxu0
        %5092 = vdwg.mxu0
        %v5093 = vadd.f32 %v4972, %v5080
        %v5094 = vadd.f32 %v4973, %v5083
        %v5095 = vadd.f32 %v4974, %v5088
        %v5096 = vld [vmem:[#allocation4 + $0xd] sm:$0xff]
        %v5097 = vld [vmem:[#allocation4 + $0x15] sm:$0xff]
        %v5098 = vld [vmem:[#allocation4 + $0x1d] sm:$0x3f]
        %v5099 = vpack.c.bf16 %v5097, %v5096
        %v5100 = vpack.c.bf16 %v5098, %v5098
        %s5101 = scalar_lea.vmem %s4, 448
        %v5102 = vld [vmem:[%s5101] sm:$0xf]
        %v5103 = vld [vmem:[%s5101 + $0x4] sm:$0xf]
        %v5104 = vld [vmem:[%s5101 + $0x8] sm:$0xf]
        %v5105 = vld [vmem:[%s5101 + $0xc] sm:$0xf]
        %v5106 = vld [vmem:[%s5101 + $0x10] sm:$0xf]
        %v5107 = vld [vmem:[%s5101 + $0x14] sm:$0xf]
        %v5108 = vld [vmem:[%s5101 + $0x18] sm:$0xf]
        %v5109 = vld [vmem:[%s5101 + $0x1c] sm:$0xf]
        %v5110 = vld [vmem:[%s5101 + $0x20] sm:$0xf]
        %v5111 = vld [vmem:[%s5101 + $0x24] sm:$0xf]
        %v5112 = vld [vmem:[%s5101 + $0x28] sm:$0xf]
        %v5113 = vld [vmem:[%s5101 + $0x2c] sm:$0xf]
        %v5114 = vld [vmem:[%s5101 + $0x30] sm:$0xf]
        %v5115 = vld [vmem:[%s5101 + $0x34] sm:$0xf]
        %v5116 = vld [vmem:[%s5101 + $0x38] sm:$0xf]
        %v5117 = vld [vmem:[%s5101 + $0x3c] sm:$0xf]
        %v5134 = vunpack.c.l.b16 %v5102
        %v5135 = vunpack.c.l.b16 %v5103
        %v5136 = vunpack.c.l.b16 %v5104
        %v5137 = vunpack.c.l.b16 %v5105
        %v5138 = vunpack.c.l.b16 %v5106
        %v5139 = vunpack.c.l.b16 %v5107
        %v5140 = vunpack.c.l.b16 %v5108
        %v5141 = vunpack.c.l.b16 %v5109
        %v5142 = vunpack.c.l.b16 %v5110
        %v5143 = vunpack.c.l.b16 %v5111
        %v5144 = vunpack.c.l.b16 %v5112
        %v5145 = vunpack.c.l.b16 %v5113
        %v5146 = vunpack.c.l.b16 %v5114
        %v5147 = vunpack.c.l.b16 %v5115
        %v5148 = vunpack.c.l.b16 %v5116
        %v5149 = vunpack.c.l.b16 %v5117
        %v5150 = vpack.c.b16 %v5135, %v5134
        %v5151 = vpack.c.b16 %v5137, %v5136
        %v5152 = vpack.c.b16 %v5139, %v5138
        %v5153 = vpack.c.b16 %v5141, %v5140
        %v5154 = vpack.c.b16 %v5143, %v5142
        %v5155 = vpack.c.b16 %v5145, %v5144
        %v5156 = vpack.c.b16 %v5147, %v5146
        %v5157 = vpack.c.b16 %v5149, %v5148
        %5166 = vmatprep.subr.bf16.mxu0 0
        %5167 = vmatpush1.bf16.msra.mxu0 %v5157
        %5168 = vmatprep.subr.bf16.mxu0 0
        %5169 = vmatpush1.bf16.msra.mxu0 %v5156
        %5170 = vmatprep.subr.bf16.mxu0 0
        %5171 = vmatpush1.bf16.msra.mxu0 %v5155
        %5172 = vmatprep.subr.bf16.mxu0 0
        %5173 = vmatpush1.bf16.msra.mxu0 %v5154
        %5174 = vmatprep.subr.bf16.mxu0 0
        %5175 = vmatpush1.bf16.msra.mxu0 %v5153
        %5176 = vmatprep.subr.bf16.mxu0 0
        %5177 = vmatpush1.bf16.msra.mxu0 %v5152
        %5178 = vmatprep.subr.bf16.mxu0 0
        %5179 = vmatpush1.bf16.msra.mxu0 %v5151
        %5180 = vmatprep.subr.bf16.mxu0 0
        %5181 = vmatpush1.bf16.msra.mxu0 %v5150
        %5182 = vmatprep.subr.bf16.mxu0 0
        %5183 = vmatpush2.bf16.msra.mxu0 0
        %5184 = vmatprep.subr.bf16.mxu0 0
        %5185 = vmatpush2.bf16.msra.mxu0 0
        %5186 = vmatprep.subr.bf16.mxu0 0
        %5187 = vmatpush2.bf16.msra.mxu0 0
        %5188 = vmatprep.subr.bf16.mxu0 0
        %5189 = vmatpush2.bf16.msra.mxu0 0
        %5190 = vmatprep.subr.bf16.mxu0 0
        %5191 = vmatpush2.bf16.msra.mxu0 0
        %5192 = vmatprep.subr.bf16.mxu0 0
        %5193 = vmatpush2.bf16.msra.mxu0 0
        %5194 = vmatprep.subr.bf16.mxu0 0
        %5195 = vmatpush2.bf16.msra.mxu0 0
        %5196 = vmatprep.subr.bf16.mxu0 0
        %5197 = vmatpush2.bf16.msra.mxu0 0
        %5198 = vmatprep.mubr.bf16.mxu0 0
        %5199 = vmatmul.mubr.bf16.gmra.mxu0 %v5099
        %v5200 = vpop.f32.mrf.mxu0
        %v5201 = vadd.f32 0.0, %v5200
        %v5202 = vpop.f32.mrf.mxu0
        %v5203 = vpop.f32.mrf.mxu0
        %v5204 = vadd.f32 0.0, %v5203
        %v5205 = vpop.f32.mrf.mxu0
        %5206 = vmatprep.mubr.bf16.mxu0 0
        %5207 = vmatmul.mubr.bf16.gmra.mxu0 %v5100
        %v5208 = vpop.f32.mrf.mxu0
        %v5209 = vadd.f32 0.0, %v5208
        %v5210 = vpop.f32.mrf.mxu0
        %v5211 = vpop.f32.mrf.mxu0
        %v5212 = vpop.f32.mrf.mxu0
        %5213 = vdwg.mxu0
        %v5214 = vadd.f32 %v5093, %v5201
        %v5215 = vadd.f32 %v5094, %v5204
        %v5216 = vadd.f32 %v5095, %v5209
        %v5217 = vld [vmem:[#allocation4 + $0xe] sm:$0xff]
        %v5218 = vld [vmem:[#allocation4 + $0x16] sm:$0xff]
        %v5219 = vld [vmem:[#allocation4 + $0x1e] sm:$0x3f]
        %v5220 = vpack.c.bf16 %v5218, %v5217
        %v5221 = vpack.c.bf16 %v5219, %v5219
        %s5222 = scalar_lea.vmem %s4, 512
        %v5223 = vld [vmem:[%s5222] sm:$0xf]
        %v5224 = vld [vmem:[%s5222 + $0x4] sm:$0xf]
        %v5225 = vld [vmem:[%s5222 + $0x8] sm:$0xf]
        %v5226 = vld [vmem:[%s5222 + $0xc] sm:$0xf]
        %v5227 = vld [vmem:[%s5222 + $0x10] sm:$0xf]
        %v5228 = vld [vmem:[%s5222 + $0x14] sm:$0xf]
        %v5229 = vld [vmem:[%s5222 + $0x18] sm:$0xf]
        %v5230 = vld [vmem:[%s5222 + $0x1c] sm:$0xf]
        %v5231 = vld [vmem:[%s5222 + $0x20] sm:$0xf]
        %v5232 = vld [vmem:[%s5222 + $0x24] sm:$0xf]
        %v5233 = vld [vmem:[%s5222 + $0x28] sm:$0xf]
        %v5234 = vld [vmem:[%s5222 + $0x2c] sm:$0xf]
        %v5235 = vld [vmem:[%s5222 + $0x30] sm:$0xf]
        %v5236 = vld [vmem:[%s5222 + $0x34] sm:$0xf]
        %v5237 = vld [vmem:[%s5222 + $0x38] sm:$0xf]
        %v5238 = vld [vmem:[%s5222 + $0x3c] sm:$0xf]
        %v5255 = vunpack.c.l.b16 %v5223
        %v5256 = vunpack.c.l.b16 %v5224
        %v5257 = vunpack.c.l.b16 %v5225
        %v5258 = vunpack.c.l.b16 %v5226
        %v5259 = vunpack.c.l.b16 %v5227
        %v5260 = vunpack.c.l.b16 %v5228
        %v5261 = vunpack.c.l.b16 %v5229
        %v5262 = vunpack.c.l.b16 %v5230
        %v5263 = vunpack.c.l.b16 %v5231
        %v5264 = vunpack.c.l.b16 %v5232
        %v5265 = vunpack.c.l.b16 %v5233
        %v5266 = vunpack.c.l.b16 %v5234
        %v5267 = vunpack.c.l.b16 %v5235
        %v5268 = vunpack.c.l.b16 %v5236
        %v5269 = vunpack.c.l.b16 %v5237
        %v5270 = vunpack.c.l.b16 %v5238
        %v5271 = vpack.c.b16 %v5256, %v5255
        %v5272 = vpack.c.b16 %v5258, %v5257
        %v5273 = vpack.c.b16 %v5260, %v5259
        %v5274 = vpack.c.b16 %v5262, %v5261
        %v5275 = vpack.c.b16 %v5264, %v5263
        %v5276 = vpack.c.b16 %v5266, %v5265
        %v5277 = vpack.c.b16 %v5268, %v5267
        %v5278 = vpack.c.b16 %v5270, %v5269
        %5287 = vmatprep.subr.bf16.mxu0 0
        %5288 = vmatpush1.bf16.msra.mxu0 %v5278
        %5289 = vmatprep.subr.bf16.mxu0 0
        %5290 = vmatpush1.bf16.msra.mxu0 %v5277
        %5291 = vmatprep.subr.bf16.mxu0 0
        %5292 = vmatpush1.bf16.msra.mxu0 %v5276
        %5293 = vmatprep.subr.bf16.mxu0 0
        %5294 = vmatpush1.bf16.msra.mxu0 %v5275
        %5295 = vmatprep.subr.bf16.mxu0 0
        %5296 = vmatpush1.bf16.msra.mxu0 %v5274
        %5297 = vmatprep.subr.bf16.mxu0 0
        %5298 = vmatpush1.bf16.msra.mxu0 %v5273
        %5299 = vmatprep.subr.bf16.mxu0 0
        %5300 = vmatpush1.bf16.msra.mxu0 %v5272
        %5301 = vmatprep.subr.bf16.mxu0 0
        %5302 = vmatpush1.bf16.msra.mxu0 %v5271
        %5303 = vmatprep.subr.bf16.mxu0 0
        %5304 = vmatpush2.bf16.msra.mxu0 0
        %5305 = vmatprep.subr.bf16.mxu0 0
        %5306 = vmatpush2.bf16.msra.mxu0 0
        %5307 = vmatprep.subr.bf16.mxu0 0
        %5308 = vmatpush2.bf16.msra.mxu0 0
        %5309 = vmatprep.subr.bf16.mxu0 0
        %5310 = vmatpush2.bf16.msra.mxu0 0
        %5311 = vmatprep.subr.bf16.mxu0 0
        %5312 = vmatpush2.bf16.msra.mxu0 0
        %5313 = vmatprep.subr.bf16.mxu0 0
        %5314 = vmatpush2.bf16.msra.mxu0 0
        %5315 = vmatprep.subr.bf16.mxu0 0
        %5316 = vmatpush2.bf16.msra.mxu0 0
        %5317 = vmatprep.subr.bf16.mxu0 0
        %5318 = vmatpush2.bf16.msra.mxu0 0
        %5319 = vmatprep.mubr.bf16.mxu0 0
        %5320 = vmatmul.mubr.bf16.gmra.mxu0 %v5220
        %v5321 = vpop.f32.mrf.mxu0
        %v5322 = vadd.f32 0.0, %v5321
        %v5323 = vpop.f32.mrf.mxu0
        %v5324 = vpop.f32.mrf.mxu0
        %v5325 = vadd.f32 0.0, %v5324
        %v5326 = vpop.f32.mrf.mxu0
        %5327 = vmatprep.mubr.bf16.mxu0 0
        %5328 = vmatmul.mubr.bf16.gmra.mxu0 %v5221
        %v5329 = vpop.f32.mrf.mxu0
        %v5330 = vadd.f32 0.0, %v5329
        %v5331 = vpop.f32.mrf.mxu0
        %v5332 = vpop.f32.mrf.mxu0
        %v5333 = vpop.f32.mrf.mxu0
        %5334 = vdwg.mxu0
        %v5335 = vadd.f32 %v5214, %v5322
        %v5336 = vadd.f32 %v5215, %v5325
        %v5337 = vadd.f32 %v5216, %v5330
        %5338 = vst [vmem:[%s291] sm:$0xff] %v5335
        %5339 = vst [vmem:[%s291 + $0x8] sm:$0xff] %v5336
        %5340 = vst [vmem:[%s291 + $0x10] sm:$0x3f] %v5337
        %v5341 = vld [vmem:[#allocation4 + $0x7] sm:$0xff]
        %v5342 = vld [vmem:[#allocation4 + $0xf] sm:$0xff]
        %v5343 = vld [vmem:[#allocation4 + $0x17] sm:$0xff]
        %v5344 = vlaneseq
        %v5345 = vand.u32 %v5344, 127
        %v5346 = vld [vmem:[%s5] sm:$0xff]
        %v5347 = vld [vmem:[%s5 + $0x8] sm:$0xff]
        %v5348 = vld [vmem:[%s5 + $0x10] sm:$0xff]
        %v5349 = vmul.f32 %v5341, %v5346
        %v5350 = vmul.f32 %v5342, %v5347
        %v5351 = vmul.f32 %v5343, %v5348
        %v5352 = vadd.f32 %v5349, %v5350
        %v5353 = vadd.f32 %v5352, %v5351
        %v5354 = vrot.slane %v5353, 4
        %v5355 = vadd.f32 %v5353, %v5354
        %v5356 = vrot.slane %v5355, 2
        %v5357 = vadd.f32 %v5355, %v5356
        %v5358 = vrot.slane %v5357, 1
        %v5359 = vadd.f32 %v5357, %v5358
        %5360 = vadd.xlane.f32.xlu0 %v5359
        %v5361 = vpop.xlane.xlu0 %5360
        %vm5362 = vcmp.eq.s32.totalorder %v5345, 0
        %v5363 = vsel %vm5362, %v5361, 0.0
        %v5364 = vadd.f32 %v5363, 0.0
        %s5365 = scalar_lea.vmem %s5, 24
        %v5366 = vld [vmem:[%s5365] sm:$0xff]
        %v5367 = vld [vmem:[%s5365 + $0x8] sm:$0xff]
        %v5368 = vld [vmem:[%s5365 + $0x10] sm:$0xff]
        %v5369 = vmul.f32 %v5341, %v5366
        %v5370 = vmul.f32 %v5342, %v5367
        %v5371 = vmul.f32 %v5343, %v5368
        %v5372 = vadd.f32 %v5369, %v5370
        %v5373 = vadd.f32 %v5372, %v5371
        %v5374 = vrot.slane %v5373, 4
        %v5375 = vadd.f32 %v5373, %v5374
        %v5376 = vrot.slane %v5375, 2
        %v5377 = vadd.f32 %v5375, %v5376
        %v5378 = vrot.slane %v5377, 1
        %v5379 = vadd.f32 %v5377, %v5378
        %5380 = vadd.xlane.f32.xlu0 %v5379
        %v5381 = vpop.xlane.xlu0 %5380
        %vm5382 = vcmp.eq.s32.totalorder %v5345, 1
        %v5383 = vsel %vm5382, %v5381, 0.0
        %v5384 = vadd.f32 %v5364, %v5383
        %5385 = vst [vmem:[%s298] sm:$0x1] %v5384
        %s5386 = sand.u32 %s165, 1
        %s5387 = scalar_lea.sflag [#allocation7], %s5386
        %s5388 = sand.u32 %s165, 1
        %s5389 = smul.addr %s5388, 24
        %s5390 = scalar_lea.vmem [#allocation8], %s5389
        %s5391 = sand.u32 %s191, 1
        %s5392 = scalar_lea.sflag [#allocation10], %s5391
        %s5393 = sand.u32 %s191, 1
        %s5394 = smul.addr %s5393, 8
        %s5395 = scalar_lea.vmem [#allocation9], %s5394
        // Predicated region
        $region49: #{tpu_custom_call.1} parent=43 // pred_check
          %p5396 = pneg %p175
        $region50: #{tpu_custom_call.1} parent=43 // pred_check_branch
          %5398 = sbr.rel (%p5396) target = $region52
        $region51: #{tpu_custom_call.1} parent=43 // pred_region
          %s5399 = smul.u32 3, %s26
          %s5401 = ssub.s32 384, 384
          %5402 = vsyncadd %s5387, %s5401
          %s5403 = smul.addr %s5399, 128
          %s5404 = scalar_lea.hbm %s6, %s5403
          %s5405 = sshll.u32 %s5390, 4
          %s5406 = int_to_ptr.vmem [resolvable:$true] %s5405
          %5411 = dma.vmem_to_hbm [thread:$0]  %s5406, 384, %s5404, %s5387, 128, 128, 8
        $region52: #{tpu_custom_call.1} parent=43 // pred_fallthru
          _
        // Predicated region
        $region53: #{tpu_custom_call.1} parent=43 // pred_check
          %p5412 = pneg %p201
        $region54: #{tpu_custom_call.1} parent=43 // pred_check_branch
          %5414 = sbr.rel (%p5412) target = $region56
        $region55: #{tpu_custom_call.1} parent=43 // pred_region
          %s5416 = ssub.s32 128, 128
          %5417 = vsyncadd %s5392, %s5416
          %s5418 = smul.addr %s26, 128
          %s5419 = scalar_lea.hbm %s7, %s5418
          %s5421 = sshll.u32 %s5395, 4
          %s5422 = int_to_ptr.vmem [resolvable:$true] %s5421
          %5424 = dma.vmem_to_hbm [thread:$0]  %s5422, 128, %s5419, %s5392
        $region56: #{tpu_custom_call.1} parent=43 // pred_fallthru
          _
      $region44: #{tpu_custom_call.1} parent=5 // pred_fallthru
        _
      %p5425 = scmp.le.s32.totalorder 2, %s21
      // Predicated region
      $region57: #{tpu_custom_call.1} parent=5 // pred_check
        %p5426 = pneg %p5425
      $region58: #{tpu_custom_call.1} parent=5 // pred_check_branch
        %5428 = sbr.rel (%p5426) target = $region60
      $region59: #{tpu_custom_call.1} parent=5 // pred_region
        %s5429 = ssub.s32 %s21, 2
        // Predicated region
        $region61: #{tpu_custom_call.1} parent=59 // pred_check
          %p5430 = pneg %p181
        $region62: #{tpu_custom_call.1} parent=59 // pred_check_branch
          %5432 = sbr.rel (%p5430) target = $region64
        $region63: #{tpu_custom_call.1} parent=59 // pred_region
          %s5433 = sand.u32 %s166, 1
          %s5434 = scalar_lea.sflag [#allocation7], %s5433
          %s5435 = sand.u32 %s166, 1
          %s5436 = smul.addr %s5435, 24
          %s5437 = scalar_lea.vmem [#allocation8], %s5436
          %5438 = dma.done %s5434, 384
        $region64: #{tpu_custom_call.1} parent=59 // pred_fallthru
          _
        // Predicated region
        $region65: #{tpu_custom_call.1} parent=59 // pred_check
          %p5439 = pneg %p207
        $region66: #{tpu_custom_call.1} parent=59 // pred_check_branch
          %5441 = sbr.rel (%p5439) target = $region68
        $region67: #{tpu_custom_call.1} parent=59 // pred_region
          %s5442 = sand.u32 %s192, 1
          %s5443 = scalar_lea.sflag [#allocation10], %s5442
          %s5444 = sand.u32 %s192, 1
          %s5445 = smul.addr %s5444, 8
          %s5446 = scalar_lea.vmem [#allocation9], %s5445
          %5447 = dma.done %s5443, 128
        $region68: #{tpu_custom_call.1} parent=59 // pred_fallthru
          _
      $region60: #{tpu_custom_call.1} parent=5 // pred_fallthru
        _
    $region6: #{tpu_custom_call.1} parent=1 // loop_footer
      %s25 = sadd.s32 1, %s21
    $region7: #{tpu_custom_call.1} parent=1 // loop_footer_branch
      %20 = sbr.rel target = $region3
    $region8: #{tpu_custom_call.1} parent=1 // loop_exit
      _
    %5448 = vsyncpa [#allocation6], 1
    %s5449 = scalar_lea.sflag [#allocation6], 1
    %5450 = vsyncpa %s5449, 1
    %5451 = vsyncpa [#allocation7], 1
    %s5452 = scalar_lea.sflag [#allocation7], 1
    %5453 = vsyncpa %s5452, 1
    %5454 = vsyncpa [#allocation10], 1
    %s5455 = scalar_lea.sflag [#allocation10], 1
    %5456 = vsyncpa %s5455, 1

</llo_original>
